<compile_context>
chip_gen: v7x
topology: tpu7x:2x2x1
jax: 0.10.0
libtpu: 0.0.40
codegen_flags: <defaults>
</compile_context>

<pallas_src>
import jax
import jax.numpy as jnp
from jax.experimental import pallas as pl
from jax.experimental.pallas import tpu as pltpu


# Static conv geometry per layer: (kernel, stride, pad).  Layer order in the
# discriminator is kernel_sizes/strides/paddings indices 3, 2, 1, 0.
LAYER_CFG = ((6, 2, 1), (4, 2, 1), (4, 2, 1), (4, 2, 1))


# ---------------------------------------------------------------------------
# Pallas kernels
# ---------------------------------------------------------------------------

def _conv_bn_lrelu_kernel(w_ref, a_ref, b_ref, g_ref, beta_ref, o_ref):
    # Fused: conv-as-matmul (MXU) + train-mode BatchNorm + LeakyReLU(0.2).
    # w: (C, K), a: (K, M), b/g/beta: (C, 1)  ->  o: (C, M)
    y = (jnp.dot(w_ref[...], a_ref[...], preferred_element_type=jnp.float32)
         + b_ref[...])
    # BatchNorm over (N, H, W) per channel == lane-axis reduce per row.
    mean = jnp.mean(y, axis=-1, keepdims=True)                   # (C, 1)
    var = jnp.mean(jnp.square(y - mean), axis=-1, keepdims=True)  # biased var
    z = (y - mean) * (g_ref[...] * jax.lax.rsqrt(var + 1e-5)) + beta_ref[...]
    o_ref[...] = jnp.where(z >= 0.0, z, 0.2 * z)                  # LeakyReLU


def conv_bn_lrelu(wmat, cols, b, gamma, beta):
    """wmat: (C, K), cols: (K, M), b/gamma/beta: (C, 1) -> (C, M).

    Single grid-less pallas_call: all operands live fully in VMEM (<~1.5 MiB
    per layer), so there is no per-step pipeline overhead and no intermediate
    HBM traffic between the matmul and BN/LeakyReLU."""
    C, _ = wmat.shape
    M = cols.shape[1]
    return pl.pallas_call(
        _conv_bn_lrelu_kernel,
        out_shape=jax.ShapeDtypeStruct((C, M), jnp.float32),
    )(wmat, cols, b, gamma, beta)


def _linear_sigmoid_kernel(x_ref, w_ref, b_ref, o_ref):
    z = (jnp.dot(x_ref[...], w_ref[...], preferred_element_type=jnp.float32)
         + b_ref[...])
    # Exact sigmoid (exp lands on the EUP slot; the divide is on a (N,1) tile).
    o_ref[...] = 1.0 / (1.0 + jnp.exp(-z))


def linear_sigmoid(x, w, b):
    """x: (N, F), w: (F, 1), b: (1, 1) -> sigmoid(x @ w + b)."""
    N = x.shape[0]
    return pl.pallas_call(
        _linear_sigmoid_kernel,
        out_shape=jax.ShapeDtypeStruct((N, 1), jnp.float32),
    )(x, w, b)


# ---------------------------------------------------------------------------
# Glue (plain JAX): im2col in channel-major layout, spectral norm
# ---------------------------------------------------------------------------

def im2col_cnhw(x, k, stride, pad):
    """x: (C, N, H, W) -> (cols (C*k*k, N*Ho*Wo), Ho, Wo).

    K ordering is (Cin, kh, kw), matching PyTorch's weight.view(Cout, -1).
    No transposes needed: channel-major input -> (K, M) output directly."""
    x = jnp.pad(x, ((0, 0), (0, 0), (pad, pad), (pad, pad)))
    C, N, H, W = x.shape
    Ho = (H - k) // stride + 1
    Wo = (W - k) // stride + 1
    patches = []
    for i in range(k):
        for j in range(k):
            patches.append(x[:, :,
                             i:i + stride * (Ho - 1) + 1:stride,
                             j:j + stride * (Wo - 1) + 1:stride])  # (C,N,Ho,Wo)
    col = jnp.stack(patches, axis=1)               # (C, k*k, N, Ho, Wo)
    col = col.reshape(C * k * k, N * Ho * Wo)      # (K, M)
    return col, Ho, Wo


def spectral_norm_weight(w, u, n_power_iterations=1, eps=1e-12):
    """Mirrors torch.nn.utils.spectral_norm forward (train mode, 1 iteration)."""
    cout = w.shape[0]
    wm = w.reshape(cout, -1)

    def l2n(v):
        return v / (jnp.linalg.norm(v) + eps)

    v = None
    for _ in range(n_power_iterations):
        v = l2n(wm.T @ u)
        u = l2n(wm @ v)
    sigma = u @ (wm @ v)
    return w / sigma


def _pad_k_to_128(wmat, cols):
    """Zero-pad the contraction dim K to a multiple of 128 (aligned MXU feed)."""
    K = wmat.shape[1]
    if K % 128:
        K_pad = ((K + 127) // 128) * 128
        wmat = jnp.pad(wmat, ((0, 0), (0, K_pad - K)))
        cols = jnp.pad(cols, ((0, K_pad - K), (0, 0)))
    return wmat, cols


# ---------------------------------------------------------------------------
# Forward pass
# ---------------------------------------------------------------------------

def dcgan_discriminator_forward(x, params):
    """x: (N, Cin, H, W) NCHW image tensor; params: arrays only (no statics)."""
    N = x.shape[0]
    # One small transpose of the input to channel-major; stays channel-major
    # for the whole network (no per-layer NCHW<->NHWC glue).
    h = jnp.transpose(x, (1, 0, 2, 3))                       # (C, N, H, W)

    for (k, s, p), lp in zip(LAYER_CFG, params["convs"]):
        cout = lp["w"].shape[0]
        w_sn = spectral_norm_weight(lp["w"], lp["u"])
        wmat = w_sn.reshape(cout, -1)                        # (Cout, K)
        cols, Ho, Wo = im2col_cnhw(h, k, s, p)               # (K, M)
        wmat, cols = _pad_k_to_128(wmat, cols)
        y = conv_bn_lrelu(wmat, cols,
                          lp["b"].reshape(-1, 1),
                          lp["gamma"].reshape(-1, 1),
                          lp["beta"].reshape(-1, 1))         # (Cout, M)
        h = y.reshape(cout, N, Ho, Wo)                       # free reshape

    # Flatten in PyTorch NCHW order (N, C*H*W); the final map is tiny.
    C, _, Ho, Wo = h.shape
    flat = h.reshape(C, N, Ho * Wo).transpose(1, 0, 2).reshape(N, C * Ho * Wo)
    return linear_sigmoid(flat, params["fc_w"], params["fc_b"])


# ---------------------------------------------------------------------------
# Deterministic parameter construction (arrays only; geometry is static)
# ---------------------------------------------------------------------------

def make_params(key, channels=(64, 32, 16, 8, 3), org_size=(4, 4)):
    # Discriminator layer order: channel pairs (ch[4]->ch[3], ch[3]->ch[2], ...)
    in_chs = (channels[4], channels[3], channels[2], channels[1])
    out_chs = (channels[3], channels[2], channels[1], channels[0])
    convs = []
    for (k, _, _), cin, cout in zip(LAYER_CFG, in_chs, out_chs):
        key, kw, kb, ku = jax.random.split(key, 4)
        w = 0.05 * jax.random.normal(kw, (cout, cin, k, k), jnp.float32)
        b = 0.01 * jax.random.normal(kb, (cout,), jnp.float32)
        u = jax.random.normal(ku, (cout,), jnp.float32)
        u = u / (jnp.linalg.norm(u) + 1e-12)
        convs.append(dict(w=w, b=b, u=u,
                          gamma=jnp.ones((cout,), jnp.float32),
                          beta=jnp.zeros((cout,), jnp.float32)))
    fc_in = channels[0] * org_size[0] * org_size[1]
    key, kw, kb = jax.random.split(key, 3)
    fc_w = 0.05 * jax.random.normal(kw, (fc_in, 1), jnp.float32)
    fc_b = 0.01 * jax.random.normal(kb, (1, 1), jnp.float32)
    return dict(convs=convs, fc_w=fc_w, fc_b=fc_b)


# ---------------------------------------------------------------------------

if __name__ == "__main__":
    key = jax.random.PRNGKey(0)
    k_params, k_x = jax.random.split(key)

    # Small channel config (constructor parameter), same architecture/geometry.
    channels = (64, 32, 16, 8, 3)
    params = make_params(k_params, channels=channels)

    # Input spatial size implied by the geometry: 66 -> 32 -> 16 -> 8 -> 4.
    x = jax.random.normal(k_x, (2, channels[4], 66, 66), jnp.float32)

    out = jax.jit(dcgan_discriminator_forward)(x, params)
    out = jax.block_until_ready(out)

    assert out.shape == (2, 1), out.shape
    assert bool(jnp.all((out >= 0.0) & (out <= 1.0)))
    print("KERNEL_OK")
</pallas_src>

<mosaic_0001>
module attributes {stable_mosaic.version = 11 : i64} {
  func.func @_conv_bn_lrelu_kernel(%arg0: memref<8x128xf32, #tpu.memory_space<vmem>>, %arg1: memref<128x2048xf32, #tpu.memory_space<vmem>>, %arg2: memref<8x1xf32, #tpu.memory_space<vmem>>, %arg3: memref<8x1xf32, #tpu.memory_space<vmem>>, %arg4: memref<8x1xf32, #tpu.memory_space<vmem>>, %arg5: memref<8x2048xf32, #tpu.memory_space<vmem>>) attributes {dimension_semantics = [], scalar_prefetch = 0 : i64, scratch_operands = 0 : i64, tpu.core_type = #tpu.core_type<tc>} {
    %c0 = arith.constant 0 : index
    %c0_0 = arith.constant 0 : index
    %0 = vector.load %arg0[%c0, %c0_0] : memref<8x128xf32, #tpu.memory_space<vmem>>, vector<8x128xf32>
    %c0_1 = arith.constant 0 : index
    %c0_2 = arith.constant 0 : index
    %1 = vector.load %arg1[%c0_1, %c0_2] : memref<128x2048xf32, #tpu.memory_space<vmem>>, vector<128x2048xf32>
    %cst = arith.constant dense<0.000000e+00> : vector<8x2048xf32>
    %2 = tpu.matmul %0, %1, %cst {dimension_numbers = #tpu.dot_dimension_numbers<[1], [0], [0], [1], [0, 0, 1, 1], [], []>} : vector<8x128xf32>, vector<128x2048xf32>, vector<8x2048xf32> -> vector<8x2048xf32>
    %c0_3 = arith.constant 0 : index
    %c0_4 = arith.constant 0 : index
    %3 = vector.load %arg2[%c0_3, %c0_4] : memref<8x1xf32, #tpu.memory_space<vmem>>, vector<8x1xf32>
    %4 = vector.broadcast %3 : vector<8x1xf32> to vector<8x2048xf32>
    %5 = arith.addf %2, %4 : vector<8x2048xf32>
    %cst_5 = arith.constant dense<0.000000e+00> : vector<8xf32>
    %6 = vector.multi_reduction <add>, %5, %cst_5 [1] : vector<8x2048xf32> to vector<8xf32>
    %7 = vector.shape_cast %6 : vector<8xf32> to vector<8x1xf32>
    %cst_6 = arith.constant 2.048000e+03 : f32
    %8 = vector.broadcast %cst_6 : f32 to vector<8x1xf32>
    %9 = arith.divf %7, %8 : vector<8x1xf32>
    %10 = vector.broadcast %9 : vector<8x1xf32> to vector<8x2048xf32>
    %11 = arith.subf %5, %10 : vector<8x2048xf32>
    %12 = arith.mulf %11, %11 : vector<8x2048xf32>
    %cst_7 = arith.constant dense<0.000000e+00> : vector<8xf32>
    %13 = vector.multi_reduction <add>, %12, %cst_7 [1] : vector<8x2048xf32> to vector<8xf32>
    %14 = vector.shape_cast %13 : vector<8xf32> to vector<8x1xf32>
    %cst_8 = arith.constant 2.048000e+03 : f32
    %15 = vector.broadcast %cst_8 : f32 to vector<8x1xf32>
    %16 = arith.divf %14, %15 : vector<8x1xf32>
    %17 = vector.broadcast %9 : vector<8x1xf32> to vector<8x2048xf32>
    %18 = arith.subf %5, %17 : vector<8x2048xf32>
    %c0_9 = arith.constant 0 : index
    %c0_10 = arith.constant 0 : index
    %19 = vector.load %arg3[%c0_9, %c0_10] : memref<8x1xf32, #tpu.memory_space<vmem>>, vector<8x1xf32>
    %cst_11 = arith.constant 9.99999974E-6 : f32
    %20 = vector.broadcast %cst_11 : f32 to vector<8x1xf32>
    %21 = arith.addf %16, %20 : vector<8x1xf32>
    %22 = math.rsqrt %21 : vector<8x1xf32>
    %23 = arith.mulf %19, %22 : vector<8x1xf32>
    %24 = vector.broadcast %23 : vector<8x1xf32> to vector<8x2048xf32>
    %25 = arith.mulf %18, %24 : vector<8x2048xf32>
    %c0_12 = arith.constant 0 : index
    %c0_13 = arith.constant 0 : index
    %26 = vector.load %arg4[%c0_12, %c0_13] : memref<8x1xf32, #tpu.memory_space<vmem>>, vector<8x1xf32>
    %27 = vector.broadcast %26 : vector<8x1xf32> to vector<8x2048xf32>
    %28 = arith.addf %25, %27 : vector<8x2048xf32>
    %cst_14 = arith.constant 0.000000e+00 : f32
    %29 = vector.broadcast %cst_14 : f32 to vector<8x2048xf32>
    %30 = arith.cmpf oge, %28, %29 : vector<8x2048xf32>
    %cst_15 = arith.constant 2.000000e-01 : f32
    %31 = vector.broadcast %cst_15 : f32 to vector<8x2048xf32>
    %32 = arith.mulf %31, %28 : vector<8x2048xf32>
    %33 = arith.select %30, %28, %32 : vector<8x2048xi1>, vector<8x2048xf32>
    %c0_16 = arith.constant 0 : index
    %c0_17 = arith.constant 0 : index
    %34 = vector.load %arg5[%c0_16, %c0_17] : memref<8x2048xf32, #tpu.memory_space<vmem>>, vector<8x2048xf32>
    tpu.vector_store %arg5[%c0_16, %c0_17], %33 {strides = array<i32>} : memref<8x2048xf32, #tpu.memory_space<vmem>>, vector<8x2048xf32>,
    return
  }
}

module attributes {stable_mosaic.version = 11 : i64} {
  func.func @_conv_bn_lrelu_kernel(%arg0: memref<16x128xf32, #tpu.memory_space<vmem>>, %arg1: memref<128x512xf32, #tpu.memory_space<vmem>>, %arg2: memref<16x1xf32, #tpu.memory_space<vmem>>, %arg3: memref<16x1xf32, #tpu.memory_space<vmem>>, %arg4: memref<16x1xf32, #tpu.memory_space<vmem>>, %arg5: memref<16x512xf32, #tpu.memory_space<vmem>>) attributes {dimension_semantics = [], scalar_prefetch = 0 : i64, scratch_operands = 0 : i64, tpu.core_type = #tpu.core_type<tc>} {
    %c0 = arith.constant 0 : index
    %c0_0 = arith.constant 0 : index
    %0 = vector.load %arg0[%c0, %c0_0] : memref<16x128xf32, #tpu.memory_space<vmem>>, vector<16x128xf32>
    %c0_1 = arith.constant 0 : index
    %c0_2 = arith.constant 0 : index
    %1 = vector.load %arg1[%c0_1, %c0_2] : memref<128x512xf32, #tpu.memory_space<vmem>>, vector<128x512xf32>
    %cst = arith.constant dense<0.000000e+00> : vector<16x512xf32>
    %2 = tpu.matmul %0, %1, %cst {dimension_numbers = #tpu.dot_dimension_numbers<[1], [0], [0], [1], [0, 0, 1, 1], [], []>} : vector<16x128xf32>, vector<128x512xf32>, vector<16x512xf32> -> vector<16x512xf32>
    %c0_3 = arith.constant 0 : index
    %c0_4 = arith.constant 0 : index
    %3 = vector.load %arg2[%c0_3, %c0_4] : memref<16x1xf32, #tpu.memory_space<vmem>>, vector<16x1xf32>
    %4 = vector.broadcast %3 : vector<16x1xf32> to vector<16x512xf32>
    %5 = arith.addf %2, %4 : vector<16x512xf32>
    %cst_5 = arith.constant dense<0.000000e+00> : vector<16xf32>
    %6 = vector.multi_reduction <add>, %5, %cst_5 [1] : vector<16x512xf32> to vector<16xf32>
    %7 = vector.shape_cast %6 : vector<16xf32> to vector<16x1xf32>
    %cst_6 = arith.constant 5.120000e+02 : f32
    %8 = vector.broadcast %cst_6 : f32 to vector<16x1xf32>
    %9 = arith.divf %7, %8 : vector<16x1xf32>
    %10 = vector.broadcast %9 : vector<16x1xf32> to vector<16x512xf32>
    %11 = arith.subf %5, %10 : vector<16x512xf32>
    %12 = arith.mulf %11, %11 : vector<16x512xf32>
    %cst_7 = arith.constant dense<0.000000e+00> : vector<16xf32>
    %13 = vector.multi_reduction <add>, %12, %cst_7 [1] : vector<16x512xf32> to vector<16xf32>
    %14 = vector.shape_cast %13 : vector<16xf32> to vector<16x1xf32>
    %cst_8 = arith.constant 5.120000e+02 : f32
    %15 = vector.broadcast %cst_8 : f32 to vector<16x1xf32>
    %16 = arith.divf %14, %15 : vector<16x1xf32>
    %17 = vector.broadcast %9 : vector<16x1xf32> to vector<16x512xf32>
    %18 = arith.subf %5, %17 : vector<16x512xf32>
    %c0_9 = arith.constant 0 : index
    %c0_10 = arith.constant 0 : index
    %19 = vector.load %arg3[%c0_9, %c0_10] : memref<16x1xf32, #tpu.memory_space<vmem>>, vector<16x1xf32>
    %cst_11 = arith.constant 9.99999974E-6 : f32
    %20 = vector.broadcast %cst_11 : f32 to vector<16x1xf32>
    %21 = arith.addf %16, %20 : vector<16x1xf32>
    %22 = math.rsqrt %21 : vector<16x1xf32>
    %23 = arith.mulf %19, %22 : vector<16x1xf32>
    %24 = vector.broadcast %23 : vector<16x1xf32> to vector<16x512xf32>
    %25 = arith.mulf %18, %24 : vector<16x512xf32>
    %c0_12 = arith.constant 0 : index
    %c0_13 = arith.constant 0 : index
    %26 = vector.load %arg4[%c0_12, %c0_13] : memref<16x1xf32, #tpu.memory_space<vmem>>, vector<16x1xf32>
    %27 = vector.broadcast %26 : vector<16x1xf32> to vector<16x512xf32>
    %28 = arith.addf %25, %27 : vector<16x512xf32>
    %cst_14 = arith.constant 0.000000e+00 : f32
    %29 = vector.broadcast %cst_14 : f32 to vector<16x512xf32>
    %30 = arith.cmpf oge, %28, %29 : vector<16x512xf32>
    %cst_15 = arith.constant 2.000000e-01 : f32
    %31 = vector.broadcast %cst_15 : f32 to vector<16x512xf32>
    %32 = arith.mulf %31, %28 : vector<16x512xf32>
    %33 = arith.select %30, %28, %32 : vector<16x512xi1>, vector<16x512xf32>
    %c0_16 = arith.constant 0 : index
    %c0_17 = arith.constant 0 : index
    %34 = vector.load %arg5[%c0_16, %c0_17] : memref<16x512xf32, #tpu.memory_space<vmem>>, vector<16x512xf32>
    tpu.vector_store %arg5[%c0_16, %c0_17], %33 {strides = array<i32>} : memref<16x512xf32, #tpu.memory_space<vmem>>, vector<16x512xf32>,
    return
  }
}

module attributes {stable_mosaic.version = 11 : i64} {
  func.func @_conv_bn_lrelu_kernel(%arg0: memref<32x256xf32, #tpu.memory_space<vmem>>, %arg1: memref<256x128xf32, #tpu.memory_space<vmem>>, %arg2: memref<32x1xf32, #tpu.memory_space<vmem>>, %arg3: memref<32x1xf32, #tpu.memory_space<vmem>>, %arg4: memref<32x1xf32, #tpu.memory_space<vmem>>, %arg5: memref<32x128xf32, #tpu.memory_space<vmem>>) attributes {dimension_semantics = [], scalar_prefetch = 0 : i64, scratch_operands = 0 : i64, tpu.core_type = #tpu.core_type<tc>} {
    %c0 = arith.constant 0 : index
    %c0_0 = arith.constant 0 : index
    %0 = vector.load %arg0[%c0, %c0_0] : memref<32x256xf32, #tpu.memory_space<vmem>>, vector<32x256xf32>
    %c0_1 = arith.constant 0 : index
    %c0_2 = arith.constant 0 : index
    %1 = vector.load %arg1[%c0_1, %c0_2] : memref<256x128xf32, #tpu.memory_space<vmem>>, vector<256x128xf32>
    %cst = arith.constant dense<0.000000e+00> : vector<32x128xf32>
    %2 = tpu.matmul %0, %1, %cst {dimension_numbers = #tpu.dot_dimension_numbers<[1], [0], [0], [1], [0, 0, 1, 1], [], []>} : vector<32x256xf32>, vector<256x128xf32>, vector<32x128xf32> -> vector<32x128xf32>
    %c0_3 = arith.constant 0 : index
    %c0_4 = arith.constant 0 : index
    %3 = vector.load %arg2[%c0_3, %c0_4] : memref<32x1xf32, #tpu.memory_space<vmem>>, vector<32x1xf32>
    %4 = vector.broadcast %3 : vector<32x1xf32> to vector<32x128xf32>
    %5 = arith.addf %2, %4 : vector<32x128xf32>
    %cst_5 = arith.constant dense<0.000000e+00> : vector<32xf32>
    %6 = vector.multi_reduction <add>, %5, %cst_5 [1] : vector<32x128xf32> to vector<32xf32>
    %7 = vector.shape_cast %6 : vector<32xf32> to vector<32x1xf32>
    %cst_6 = arith.constant 1.280000e+02 : f32
    %8 = vector.broadcast %cst_6 : f32 to vector<32x1xf32>
    %9 = arith.divf %7, %8 : vector<32x1xf32>
    %10 = vector.broadcast %9 : vector<32x1xf32> to vector<32x128xf32>
    %11 = arith.subf %5, %10 : vector<32x128xf32>
    %12 = arith.mulf %11, %11 : vector<32x128xf32>
    %cst_7 = arith.constant dense<0.000000e+00> : vector<32xf32>
    %13 = vector.multi_reduction <add>, %12, %cst_7 [1] : vector<32x128xf32> to vector<32xf32>
    %14 = vector.shape_cast %13 : vector<32xf32> to vector<32x1xf32>
    %cst_8 = arith.constant 1.280000e+02 : f32
    %15 = vector.broadcast %cst_8 : f32 to vector<32x1xf32>
    %16 = arith.divf %14, %15 : vector<32x1xf32>
    %17 = vector.broadcast %9 : vector<32x1xf32> to vector<32x128xf32>
    %18 = arith.subf %5, %17 : vector<32x128xf32>
    %c0_9 = arith.constant 0 : index
    %c0_10 = arith.constant 0 : index
    %19 = vector.load %arg3[%c0_9, %c0_10] : memref<32x1xf32, #tpu.memory_space<vmem>>, vector<32x1xf32>
    %cst_11 = arith.constant 9.99999974E-6 : f32
    %20 = vector.broadcast %cst_11 : f32 to vector<32x1xf32>
    %21 = arith.addf %16, %20 : vector<32x1xf32>
    %22 = math.rsqrt %21 : vector<32x1xf32>
    %23 = arith.mulf %19, %22 : vector<32x1xf32>
    %24 = vector.broadcast %23 : vector<32x1xf32> to vector<32x128xf32>
    %25 = arith.mulf %18, %24 : vector<32x128xf32>
    %c0_12 = arith.constant 0 : index
    %c0_13 = arith.constant 0 : index
    %26 = vector.load %arg4[%c0_12, %c0_13] : memref<32x1xf32, #tpu.memory_space<vmem>>, vector<32x1xf32>
    %27 = vector.broadcast %26 : vector<32x1xf32> to vector<32x128xf32>
    %28 = arith.addf %25, %27 : vector<32x128xf32>
    %cst_14 = arith.constant 0.000000e+00 : f32
    %29 = vector.broadcast %cst_14 : f32 to vector<32x128xf32>
    %30 = arith.cmpf oge, %28, %29 : vector<32x128xf32>
    %cst_15 = arith.constant 2.000000e-01 : f32
    %31 = vector.broadcast %cst_15 : f32 to vector<32x128xf32>
    %32 = arith.mulf %31, %28 : vector<32x128xf32>
    %33 = arith.select %30, %28, %32 : vector<32x128xi1>, vector<32x128xf32>
    %c0_16 = arith.constant 0 : index
    %c0_17 = arith.constant 0 : index
    %34 = vector.load %arg5[%c0_16, %c0_17] : memref<32x128xf32, #tpu.memory_space<vmem>>, vector<32x128xf32>
    tpu.vector_store %arg5[%c0_16, %c0_17], %33 {strides = array<i32>} : memref<32x128xf32, #tpu.memory_space<vmem>>, vector<32x128xf32>,
    return
  }
}

module attributes {stable_mosaic.version = 11 : i64} {
  func.func @_conv_bn_lrelu_kernel(%arg0: memref<64x512xf32, #tpu.memory_space<vmem>>, %arg1: memref<512x32xf32, #tpu.memory_space<vmem>>, %arg2: memref<64x1xf32, #tpu.memory_space<vmem>>, %arg3: memref<64x1xf32, #tpu.memory_space<vmem>>, %arg4: memref<64x1xf32, #tpu.memory_space<vmem>>, %arg5: memref<64x32xf32, #tpu.memory_space<vmem>>) attributes {dimension_semantics = [], scalar_prefetch = 0 : i64, scratch_operands = 0 : i64, tpu.core_type = #tpu.core_type<tc>} {
    %c0 = arith.constant 0 : index
    %c0_0 = arith.constant 0 : index
    %0 = vector.load %arg0[%c0, %c0_0] : memref<64x512xf32, #tpu.memory_space<vmem>>, vector<64x512xf32>
    %c0_1 = arith.constant 0 : index
    %c0_2 = arith.constant 0 : index
    %1 = vector.load %arg1[%c0_1, %c0_2] : memref<512x32xf32, #tpu.memory_space<vmem>>, vector<512x32xf32>
    %cst = arith.constant dense<0.000000e+00> : vector<64x32xf32>
    %2 = tpu.matmul %0, %1, %cst {dimension_numbers = #tpu.dot_dimension_numbers<[1], [0], [0], [1], [0, 0, 1, 1], [], []>} : vector<64x512xf32>, vector<512x32xf32>, vector<64x32xf32> -> vector<64x32xf32>
    %c0_3 = arith.constant 0 : index
    %c0_4 = arith.constant 0 : index
    %3 = vector.load %arg2[%c0_3, %c0_4] : memref<64x1xf32, #tpu.memory_space<vmem>>, vector<64x1xf32>
    %4 = vector.broadcast %3 : vector<64x1xf32> to vector<64x32xf32>
    %5 = arith.addf %2, %4 : vector<64x32xf32>
    %cst_5 = arith.constant dense<0.000000e+00> : vector<64xf32>
    %6 = vector.multi_reduction <add>, %5, %cst_5 [1] : vector<64x32xf32> to vector<64xf32>
    %7 = vector.shape_cast %6 : vector<64xf32> to vector<64x1xf32>
    %cst_6 = arith.constant 3.200000e+01 : f32
    %8 = vector.broadcast %cst_6 : f32 to vector<64x1xf32>
    %9 = arith.divf %7, %8 : vector<64x1xf32>
    %10 = vector.broadcast %9 : vector<64x1xf32> to vector<64x32xf32>
    %11 = arith.subf %5, %10 : vector<64x32xf32>
    %12 = arith.mulf %11, %11 : vector<64x32xf32>
    %cst_7 = arith.constant dense<0.000000e+00> : vector<64xf32>
    %13 = vector.multi_reduction <add>, %12, %cst_7 [1] : vector<64x32xf32> to vector<64xf32>
    %14 = vector.shape_cast %13 : vector<64xf32> to vector<64x1xf32>
    %cst_8 = arith.constant 3.200000e+01 : f32
    %15 = vector.broadcast %cst_8 : f32 to vector<64x1xf32>
    %16 = arith.divf %14, %15 : vector<64x1xf32>
    %17 = vector.broadcast %9 : vector<64x1xf32> to vector<64x32xf32>
    %18 = arith.subf %5, %17 : vector<64x32xf32>
    %c0_9 = arith.constant 0 : index
    %c0_10 = arith.constant 0 : index
    %19 = vector.load %arg3[%c0_9, %c0_10] : memref<64x1xf32, #tpu.memory_space<vmem>>, vector<64x1xf32>
    %cst_11 = arith.constant 9.99999974E-6 : f32
    %20 = vector.broadcast %cst_11 : f32 to vector<64x1xf32>
    %21 = arith.addf %16, %20 : vector<64x1xf32>
    %22 = math.rsqrt %21 : vector<64x1xf32>
    %23 = arith.mulf %19, %22 : vector<64x1xf32>
    %24 = vector.broadcast %23 : vector<64x1xf32> to vector<64x32xf32>
    %25 = arith.mulf %18, %24 : vector<64x32xf32>
    %c0_12 = arith.constant 0 : index
    %c0_13 = arith.constant 0 : index
    %26 = vector.load %arg4[%c0_12, %c0_13] : memref<64x1xf32, #tpu.memory_space<vmem>>, vector<64x1xf32>
    %27 = vector.broadcast %26 : vector<64x1xf32> to vector<64x32xf32>
    %28 = arith.addf %25, %27 : vector<64x32xf32>
    %cst_14 = arith.constant 0.000000e+00 : f32
    %29 = vector.broadcast %cst_14 : f32 to vector<64x32xf32>
    %30 = arith.cmpf oge, %28, %29 : vector<64x32xf32>
    %cst_15 = arith.constant 2.000000e-01 : f32
    %31 = vector.broadcast %cst_15 : f32 to vector<64x32xf32>
    %32 = arith.mulf %31, %28 : vector<64x32xf32>
    %33 = arith.select %30, %28, %32 : vector<64x32xi1>, vector<64x32xf32>
    %c0_16 = arith.constant 0 : index
    %c0_17 = arith.constant 0 : index
    %34 = vector.load %arg5[%c0_16, %c0_17] : memref<64x32xf32, #tpu.memory_space<vmem>>, vector<64x32xf32>
    tpu.vector_store %arg5[%c0_16, %c0_17], %33 {strides = array<i32>} : memref<64x32xf32, #tpu.memory_space<vmem>>, vector<64x32xf32>,
    return
  }
}

module attributes {stable_mosaic.version = 11 : i64} {
  func.func @_linear_sigmoid_kernel(%arg0: memref<2x1024xf32, #tpu.memory_space<vmem>>, %arg1: memref<1024x1xf32, #tpu.memory_space<vmem>>, %arg2: memref<1x1xf32, #tpu.memory_space<vmem>>, %arg3: memref<2x1xf32, #tpu.memory_space<vmem>>) attributes {dimension_semantics = [], scalar_prefetch = 0 : i64, scratch_operands = 0 : i64, tpu.core_type = #tpu.core_type<tc>} {
    %c0 = arith.constant 0 : index
    %c0_0 = arith.constant 0 : index
    %0 = vector.load %arg0[%c0, %c0_0] : memref<2x1024xf32, #tpu.memory_space<vmem>>, vector<2x1024xf32>
    %c0_1 = arith.constant 0 : index
    %c0_2 = arith.constant 0 : index
    %1 = vector.load %arg1[%c0_1, %c0_2] : memref<1024x1xf32, #tpu.memory_space<vmem>>, vector<1024x1xf32>
    %cst = arith.constant dense<0.000000e+00> : vector<2x1xf32>
    %2 = tpu.matmul %0, %1, %cst {dimension_numbers = #tpu.dot_dimension_numbers<[1], [0], [0], [1], [0, 0, 1, 1], [], []>} : vector<2x1024xf32>, vector<1024x1xf32>, vector<2x1xf32> -> vector<2x1xf32>
    %c0_3 = arith.constant 0 : index
    %c0_4 = arith.constant 0 : index
    %3 = vector.load %arg2[%c0_3, %c0_4] : memref<1x1xf32, #tpu.memory_space<vmem>>, vector<1x1xf32>
    %4 = vector.broadcast %3 : vector<1x1xf32> to vector<2x1xf32>
    %5 = arith.addf %2, %4 : vector<2x1xf32>
    %cst_5 = arith.constant 0.000000e+00 : f32
    %6 = vector.broadcast %cst_5 : f32 to vector<2x1xf32>
    %7 = arith.subf %6, %5 : vector<2x1xf32>
    %8 = math.exp %7 : vector<2x1xf32>
    %cst_6 = arith.constant 1.000000e+00 : f32
    %9 = vector.broadcast %cst_6 : f32 to vector<2x1xf32>
    %10 = arith.addf %9, %8 : vector<2x1xf32>
    %cst_7 = arith.constant 1.000000e+00 : f32
    %11 = vector.broadcast %cst_7 : f32 to vector<2x1xf32>
    %12 = arith.divf %11, %10 : vector<2x1xf32>
    %c0_8 = arith.constant 0 : index
    %c0_9 = arith.constant 0 : index
    %13 = vector.load %arg3[%c0_8, %c0_9] : memref<2x1xf32, #tpu.memory_space<vmem>>, vector<2x1xf32>
    tpu.vector_store %arg3[%c0_8, %c0_9], %12 {strides = array<i32>} : memref<2x1xf32, #tpu.memory_space<vmem>>, vector<2x1xf32>,
    return
  }
}

</mosaic_0001>

<llo_original>
// kernel: dcgan_discriminator_forward.5
$region0: #{dcgan_discriminator_forward.5}
  #allocation0 [shape = 'u32[]', space=smem, size = 0x4, offset = 0x4, fixed_abs, tag = 'smem constant byte address 0x4 - core index']
  #allocation1 [shape = 'u32[144,128]{1,0:T(1,128)}', space=vmem, size = 0x12000, scoped, tag = 'internal scratch']
  %s0 = inlined_call_operand.vmem [shape: f32[8,128], index: 0, kind: input, shape index: {}]
  %s1 = inlined_call_operand.vmem [shape: f32[128,2048], index: 1, kind: input, shape index: {}]
  %s2 = inlined_call_operand.vmem [shape: f32[8,1], index: 2, kind: input, shape index: {}]
  %s3 = inlined_call_operand.vmem [shape: f32[8,1], index: 3, kind: input, shape index: {}]
  %s4 = inlined_call_operand.vmem [shape: f32[8,1], index: 4, kind: input, shape index: {}]
  %s5 = inlined_call_operand.vmem [shape: f32[8,2048], index: 5, kind: output, shape index: {}]
  %s6 = sld [smem:[#allocation0]]
  $region30: #{dcgan_discriminator_forward.5} parent=0
    _
  %s8 = ssub.s32 1, %s6
  %s9 = scalar_select 0, %s8, %s6
  // Predicated region
  $region2: #{dcgan_discriminator_forward.5} parent=0 // pred_check
    _
  $region3: #{dcgan_discriminator_forward.5} parent=0 // pred_check_branch
    %11 = sbr.rel (0) target = $region5
  $region4: #{dcgan_discriminator_forward.5} parent=0 // pred_region
    _
  $region5: #{dcgan_discriminator_forward.5} parent=0 // pred_fallthru
    _
  // Predicated region
  $region6: #{dcgan_discriminator_forward.5} parent=0 // pred_check
    _
  $region7: #{dcgan_discriminator_forward.5} parent=0 // pred_check_branch
    %13 = sbr.rel (0) target = $region9
  $region8: #{dcgan_discriminator_forward.5} parent=0 // pred_region
    _
  $region9: #{dcgan_discriminator_forward.5} parent=0 // pred_fallthru
    _
  // Predicated region
  $region10: #{dcgan_discriminator_forward.5} parent=0 // pred_check
    _
  $region11: #{dcgan_discriminator_forward.5} parent=0 // pred_check_branch
    %15 = sbr.rel (0) target = $region13
  $region12: #{dcgan_discriminator_forward.5} parent=0 // pred_region
    _
  $region13: #{dcgan_discriminator_forward.5} parent=0 // pred_fallthru
    _
  // Predicated region
  $region14: #{dcgan_discriminator_forward.5} parent=0 // pred_check
    _
  $region15: #{dcgan_discriminator_forward.5} parent=0 // pred_check_branch
    %17 = sbr.rel (0) target = $region17
  $region16: #{dcgan_discriminator_forward.5} parent=0 // pred_region
    _
  $region17: #{dcgan_discriminator_forward.5} parent=0 // pred_fallthru
    _
  // Predicated region
  $region18: #{dcgan_discriminator_forward.5} parent=0 // pred_check
    _
  $region19: #{dcgan_discriminator_forward.5} parent=0 // pred_check_branch
    %19 = sbr.rel (0) target = $region21
  $region20: #{dcgan_discriminator_forward.5} parent=0 // pred_region
    _
  $region21: #{dcgan_discriminator_forward.5} parent=0 // pred_fallthru
    _
  %v20 = vld [vmem:[%s0] sm:$0xff]
  %v21 = vld [vmem:[%s1] sm:$0xff]
  %v22 = vld [vmem:[%s1 + $0x8] sm:$0xff]
  %v23 = vld [vmem:[%s1 + $0x10] sm:$0xff]
  %v24 = vld [vmem:[%s1 + $0x18] sm:$0xff]
  %v25 = vld [vmem:[%s1 + $0x20] sm:$0xff]
  %v26 = vld [vmem:[%s1 + $0x28] sm:$0xff]
  %v27 = vld [vmem:[%s1 + $0x30] sm:$0xff]
  %v28 = vld [vmem:[%s1 + $0x38] sm:$0xff]
  %v29 = vld [vmem:[%s1 + $0x40] sm:$0xff]
  %v30 = vld [vmem:[%s1 + $0x48] sm:$0xff]
  %v31 = vld [vmem:[%s1 + $0x50] sm:$0xff]
  %v32 = vld [vmem:[%s1 + $0x58] sm:$0xff]
  %v33 = vld [vmem:[%s1 + $0x60] sm:$0xff]
  %v34 = vld [vmem:[%s1 + $0x68] sm:$0xff]
  %v35 = vld [vmem:[%s1 + $0x70] sm:$0xff]
  %v36 = vld [vmem:[%s1 + $0x78] sm:$0xff]
  %v37 = vld [vmem:[%s1 + $0x80] sm:$0xff]
  %v38 = vld [vmem:[%s1 + $0x88] sm:$0xff]
  %v39 = vld [vmem:[%s1 + $0x90] sm:$0xff]
  %v40 = vld [vmem:[%s1 + $0x98] sm:$0xff]
  %v41 = vld [vmem:[%s1 + $0xa0] sm:$0xff]
  %v42 = vld [vmem:[%s1 + $0xa8] sm:$0xff]
  %v43 = vld [vmem:[%s1 + $0xb0] sm:$0xff]
  %v44 = vld [vmem:[%s1 + $0xb8] sm:$0xff]
  %v45 = vld [vmem:[%s1 + $0xc0] sm:$0xff]
  %v46 = vld [vmem:[%s1 + $0xc8] sm:$0xff]
  %v47 = vld [vmem:[%s1 + $0xd0] sm:$0xff]
  %v48 = vld [vmem:[%s1 + $0xd8] sm:$0xff]
  %v49 = vld [vmem:[%s1 + $0xe0] sm:$0xff]
  %v50 = vld [vmem:[%s1 + $0xe8] sm:$0xff]
  %v51 = vld [vmem:[%s1 + $0xf0] sm:$0xff]
  %v52 = vld [vmem:[%s1 + $0xf8] sm:$0xff]
  %v53 = vld [vmem:[%s1 + $0x100] sm:$0xff]
  %v54 = vld [vmem:[%s1 + $0x108] sm:$0xff]
  %v55 = vld [vmem:[%s1 + $0x110] sm:$0xff]
  %v56 = vld [vmem:[%s1 + $0x118] sm:$0xff]
  %v57 = vld [vmem:[%s1 + $0x120] sm:$0xff]
  %v58 = vld [vmem:[%s1 + $0x128] sm:$0xff]
  %v59 = vld [vmem:[%s1 + $0x130] sm:$0xff]
  %v60 = vld [vmem:[%s1 + $0x138] sm:$0xff]
  %v61 = vld [vmem:[%s1 + $0x140] sm:$0xff]
  %v62 = vld [vmem:[%s1 + $0x148] sm:$0xff]
  %v63 = vld [vmem:[%s1 + $0x150] sm:$0xff]
  %v64 = vld [vmem:[%s1 + $0x158] sm:$0xff]
  %v65 = vld [vmem:[%s1 + $0x160] sm:$0xff]
  %v66 = vld [vmem:[%s1 + $0x168] sm:$0xff]
  %v67 = vld [vmem:[%s1 + $0x170] sm:$0xff]
  %v68 = vld [vmem:[%s1 + $0x178] sm:$0xff]
  %v69 = vld [vmem:[%s1 + $0x180] sm:$0xff]
  %v70 = vld [vmem:[%s1 + $0x188] sm:$0xff]
  %v71 = vld [vmem:[%s1 + $0x190] sm:$0xff]
  %v72 = vld [vmem:[%s1 + $0x198] sm:$0xff]
  %v73 = vld [vmem:[%s1 + $0x1a0] sm:$0xff]
  %v74 = vld [vmem:[%s1 + $0x1a8] sm:$0xff]
  %v75 = vld [vmem:[%s1 + $0x1b0] sm:$0xff]
  %v76 = vld [vmem:[%s1 + $0x1b8] sm:$0xff]
  %v77 = vld [vmem:[%s1 + $0x1c0] sm:$0xff]
  %v78 = vld [vmem:[%s1 + $0x1c8] sm:$0xff]
  %v79 = vld [vmem:[%s1 + $0x1d0] sm:$0xff]
  %v80 = vld [vmem:[%s1 + $0x1d8] sm:$0xff]
  %v81 = vld [vmem:[%s1 + $0x1e0] sm:$0xff]
  %v82 = vld [vmem:[%s1 + $0x1e8] sm:$0xff]
  %v83 = vld [vmem:[%s1 + $0x1f0] sm:$0xff]
  %v84 = vld [vmem:[%s1 + $0x1f8] sm:$0xff]
  %v85 = vld [vmem:[%s1 + $0x200] sm:$0xff]
  %v86 = vld [vmem:[%s1 + $0x208] sm:$0xff]
  %v87 = vld [vmem:[%s1 + $0x210] sm:$0xff]
  %v88 = vld [vmem:[%s1 + $0x218] sm:$0xff]
  %v89 = vld [vmem:[%s1 + $0x220] sm:$0xff]
  %v90 = vld [vmem:[%s1 + $0x228] sm:$0xff]
  %v91 = vld [vmem:[%s1 + $0x230] sm:$0xff]
  %v92 = vld [vmem:[%s1 + $0x238] sm:$0xff]
  %v93 = vld [vmem:[%s1 + $0x240] sm:$0xff]
  %v94 = vld [vmem:[%s1 + $0x248] sm:$0xff]
  %v95 = vld [vmem:[%s1 + $0x250] sm:$0xff]
  %v96 = vld [vmem:[%s1 + $0x258] sm:$0xff]
  %v97 = vld [vmem:[%s1 + $0x260] sm:$0xff]
  %v98 = vld [vmem:[%s1 + $0x268] sm:$0xff]
  %v99 = vld [vmem:[%s1 + $0x270] sm:$0xff]
  %v100 = vld [vmem:[%s1 + $0x278] sm:$0xff]
  %v101 = vld [vmem:[%s1 + $0x280] sm:$0xff]
  %v102 = vld [vmem:[%s1 + $0x288] sm:$0xff]
  %v103 = vld [vmem:[%s1 + $0x290] sm:$0xff]
  %v104 = vld [vmem:[%s1 + $0x298] sm:$0xff]
  %v105 = vld [vmem:[%s1 + $0x2a0] sm:$0xff]
  %v106 = vld [vmem:[%s1 + $0x2a8] sm:$0xff]
  %v107 = vld [vmem:[%s1 + $0x2b0] sm:$0xff]
  %v108 = vld [vmem:[%s1 + $0x2b8] sm:$0xff]
  %v109 = vld [vmem:[%s1 + $0x2c0] sm:$0xff]
  %v110 = vld [vmem:[%s1 + $0x2c8] sm:$0xff]
  %v111 = vld [vmem:[%s1 + $0x2d0] sm:$0xff]
  %v112 = vld [vmem:[%s1 + $0x2d8] sm:$0xff]
  %v113 = vld [vmem:[%s1 + $0x2e0] sm:$0xff]
  %v114 = vld [vmem:[%s1 + $0x2e8] sm:$0xff]
  %v115 = vld [vmem:[%s1 + $0x2f0] sm:$0xff]
  %v116 = vld [vmem:[%s1 + $0x2f8] sm:$0xff]
  %v117 = vld [vmem:[%s1 + $0x300] sm:$0xff]
  %v118 = vld [vmem:[%s1 + $0x308] sm:$0xff]
  %v119 = vld [vmem:[%s1 + $0x310] sm:$0xff]
  %v120 = vld [vmem:[%s1 + $0x318] sm:$0xff]
  %v121 = vld [vmem:[%s1 + $0x320] sm:$0xff]
  %v122 = vld [vmem:[%s1 + $0x328] sm:$0xff]
  %v123 = vld [vmem:[%s1 + $0x330] sm:$0xff]
  %v124 = vld [vmem:[%s1 + $0x338] sm:$0xff]
  %v125 = vld [vmem:[%s1 + $0x340] sm:$0xff]
  %v126 = vld [vmem:[%s1 + $0x348] sm:$0xff]
  %v127 = vld [vmem:[%s1 + $0x350] sm:$0xff]
  %v128 = vld [vmem:[%s1 + $0x358] sm:$0xff]
  %v129 = vld [vmem:[%s1 + $0x360] sm:$0xff]
  %v130 = vld [vmem:[%s1 + $0x368] sm:$0xff]
  %v131 = vld [vmem:[%s1 + $0x370] sm:$0xff]
  %v132 = vld [vmem:[%s1 + $0x378] sm:$0xff]
  %v133 = vld [vmem:[%s1 + $0x380] sm:$0xff]
  %v134 = vld [vmem:[%s1 + $0x388] sm:$0xff]
  %v135 = vld [vmem:[%s1 + $0x390] sm:$0xff]
  %v136 = vld [vmem:[%s1 + $0x398] sm:$0xff]
  %v137 = vld [vmem:[%s1 + $0x3a0] sm:$0xff]
  %v138 = vld [vmem:[%s1 + $0x3a8] sm:$0xff]
  %v139 = vld [vmem:[%s1 + $0x3b0] sm:$0xff]
  %v140 = vld [vmem:[%s1 + $0x3b8] sm:$0xff]
  %v141 = vld [vmem:[%s1 + $0x3c0] sm:$0xff]
  %v142 = vld [vmem:[%s1 + $0x3c8] sm:$0xff]
  %v143 = vld [vmem:[%s1 + $0x3d0] sm:$0xff]
  %v144 = vld [vmem:[%s1 + $0x3d8] sm:$0xff]
  %v145 = vld [vmem:[%s1 + $0x3e0] sm:$0xff]
  %v146 = vld [vmem:[%s1 + $0x3e8] sm:$0xff]
  %v147 = vld [vmem:[%s1 + $0x3f0] sm:$0xff]
  %v148 = vld [vmem:[%s1 + $0x3f8] sm:$0xff]
  %v149 = vld [vmem:[%s1 + $0x400] sm:$0xff]
  %v150 = vld [vmem:[%s1 + $0x408] sm:$0xff]
  %v151 = vld [vmem:[%s1 + $0x410] sm:$0xff]
  %v152 = vld [vmem:[%s1 + $0x418] sm:$0xff]
  %v153 = vld [vmem:[%s1 + $0x420] sm:$0xff]
  %v154 = vld [vmem:[%s1 + $0x428] sm:$0xff]
  %v155 = vld [vmem:[%s1 + $0x430] sm:$0xff]
  %v156 = vld [vmem:[%s1 + $0x438] sm:$0xff]
  %v157 = vld [vmem:[%s1 + $0x440] sm:$0xff]
  %v158 = vld [vmem:[%s1 + $0x448] sm:$0xff]
  %v159 = vld [vmem:[%s1 + $0x450] sm:$0xff]
  %v160 = vld [vmem:[%s1 + $0x458] sm:$0xff]
  %v161 = vld [vmem:[%s1 + $0x460] sm:$0xff]
  %v162 = vld [vmem:[%s1 + $0x468] sm:$0xff]
  %v163 = vld [vmem:[%s1 + $0x470] sm:$0xff]
  %v164 = vld [vmem:[%s1 + $0x478] sm:$0xff]
  %v165 = vld [vmem:[%s1 + $0x480] sm:$0xff]
  %v166 = vld [vmem:[%s1 + $0x488] sm:$0xff]
  %v167 = vld [vmem:[%s1 + $0x490] sm:$0xff]
  %v168 = vld [vmem:[%s1 + $0x498] sm:$0xff]
  %v169 = vld [vmem:[%s1 + $0x4a0] sm:$0xff]
  %v170 = vld [vmem:[%s1 + $0x4a8] sm:$0xff]
  %v171 = vld [vmem:[%s1 + $0x4b0] sm:$0xff]
  %v172 = vld [vmem:[%s1 + $0x4b8] sm:$0xff]
  %v173 = vld [vmem:[%s1 + $0x4c0] sm:$0xff]
  %v174 = vld [vmem:[%s1 + $0x4c8] sm:$0xff]
  %v175 = vld [vmem:[%s1 + $0x4d0] sm:$0xff]
  %v176 = vld [vmem:[%s1 + $0x4d8] sm:$0xff]
  %v177 = vld [vmem:[%s1 + $0x4e0] sm:$0xff]
  %v178 = vld [vmem:[%s1 + $0x4e8] sm:$0xff]
  %v179 = vld [vmem:[%s1 + $0x4f0] sm:$0xff]
  %v180 = vld [vmem:[%s1 + $0x4f8] sm:$0xff]
  %v181 = vld [vmem:[%s1 + $0x500] sm:$0xff]
  %v182 = vld [vmem:[%s1 + $0x508] sm:$0xff]
  %v183 = vld [vmem:[%s1 + $0x510] sm:$0xff]
  %v184 = vld [vmem:[%s1 + $0x518] sm:$0xff]
  %v185 = vld [vmem:[%s1 + $0x520] sm:$0xff]
  %v186 = vld [vmem:[%s1 + $0x528] sm:$0xff]
  %v187 = vld [vmem:[%s1 + $0x530] sm:$0xff]
  %v188 = vld [vmem:[%s1 + $0x538] sm:$0xff]
  %v189 = vld [vmem:[%s1 + $0x540] sm:$0xff]
  %v190 = vld [vmem:[%s1 + $0x548] sm:$0xff]
  %v191 = vld [vmem:[%s1 + $0x550] sm:$0xff]
  %v192 = vld [vmem:[%s1 + $0x558] sm:$0xff]
  %v193 = vld [vmem:[%s1 + $0x560] sm:$0xff]
  %v194 = vld [vmem:[%s1 + $0x568] sm:$0xff]
  %v195 = vld [vmem:[%s1 + $0x570] sm:$0xff]
  %v196 = vld [vmem:[%s1 + $0x578] sm:$0xff]
  %v197 = vld [vmem:[%s1 + $0x580] sm:$0xff]
  %v198 = vld [vmem:[%s1 + $0x588] sm:$0xff]
  %v199 = vld [vmem:[%s1 + $0x590] sm:$0xff]
  %v200 = vld [vmem:[%s1 + $0x598] sm:$0xff]
  %v201 = vld [vmem:[%s1 + $0x5a0] sm:$0xff]
  %v202 = vld [vmem:[%s1 + $0x5a8] sm:$0xff]
  %v203 = vld [vmem:[%s1 + $0x5b0] sm:$0xff]
  %v204 = vld [vmem:[%s1 + $0x5b8] sm:$0xff]
  %v205 = vld [vmem:[%s1 + $0x5c0] sm:$0xff]
  %v206 = vld [vmem:[%s1 + $0x5c8] sm:$0xff]
  %v207 = vld [vmem:[%s1 + $0x5d0] sm:$0xff]
  %v208 = vld [vmem:[%s1 + $0x5d8] sm:$0xff]
  %v209 = vld [vmem:[%s1 + $0x5e0] sm:$0xff]
  %v210 = vld [vmem:[%s1 + $0x5e8] sm:$0xff]
  %v211 = vld [vmem:[%s1 + $0x5f0] sm:$0xff]
  %v212 = vld [vmem:[%s1 + $0x5f8] sm:$0xff]
  %v213 = vld [vmem:[%s1 + $0x600] sm:$0xff]
  %v214 = vld [vmem:[%s1 + $0x608] sm:$0xff]
  %v215 = vld [vmem:[%s1 + $0x610] sm:$0xff]
  %v216 = vld [vmem:[%s1 + $0x618] sm:$0xff]
  %v217 = vld [vmem:[%s1 + $0x620] sm:$0xff]
  %v218 = vld [vmem:[%s1 + $0x628] sm:$0xff]
  %v219 = vld [vmem:[%s1 + $0x630] sm:$0xff]
  %v220 = vld [vmem:[%s1 + $0x638] sm:$0xff]
  %v221 = vld [vmem:[%s1 + $0x640] sm:$0xff]
  %v222 = vld [vmem:[%s1 + $0x648] sm:$0xff]
  %v223 = vld [vmem:[%s1 + $0x650] sm:$0xff]
  %v224 = vld [vmem:[%s1 + $0x658] sm:$0xff]
  %v225 = vld [vmem:[%s1 + $0x660] sm:$0xff]
  %v226 = vld [vmem:[%s1 + $0x668] sm:$0xff]
  %v227 = vld [vmem:[%s1 + $0x670] sm:$0xff]
  %v228 = vld [vmem:[%s1 + $0x678] sm:$0xff]
  %v229 = vld [vmem:[%s1 + $0x680] sm:$0xff]
  %v230 = vld [vmem:[%s1 + $0x688] sm:$0xff]
  %v231 = vld [vmem:[%s1 + $0x690] sm:$0xff]
  %v232 = vld [vmem:[%s1 + $0x698] sm:$0xff]
  %v233 = vld [vmem:[%s1 + $0x6a0] sm:$0xff]
  %v234 = vld [vmem:[%s1 + $0x6a8] sm:$0xff]
  %v235 = vld [vmem:[%s1 + $0x6b0] sm:$0xff]
  %v236 = vld [vmem:[%s1 + $0x6b8] sm:$0xff]
  %v237 = vld [vmem:[%s1 + $0x6c0] sm:$0xff]
  %v238 = vld [vmem:[%s1 + $0x6c8] sm:$0xff]
  %v239 = vld [vmem:[%s1 + $0x6d0] sm:$0xff]
  %v240 = vld [vmem:[%s1 + $0x6d8] sm:$0xff]
  %v241 = vld [vmem:[%s1 + $0x6e0] sm:$0xff]
  %v242 = vld [vmem:[%s1 + $0x6e8] sm:$0xff]
  %v243 = vld [vmem:[%s1 + $0x6f0] sm:$0xff]
  %v244 = vld [vmem:[%s1 + $0x6f8] sm:$0xff]
  %v245 = vld [vmem:[%s1 + $0x700] sm:$0xff]
  %v246 = vld [vmem:[%s1 + $0x708] sm:$0xff]
  %v247 = vld [vmem:[%s1 + $0x710] sm:$0xff]
  %v248 = vld [vmem:[%s1 + $0x718] sm:$0xff]
  %v249 = vld [vmem:[%s1 + $0x720] sm:$0xff]
  %v250 = vld [vmem:[%s1 + $0x728] sm:$0xff]
  %v251 = vld [vmem:[%s1 + $0x730] sm:$0xff]
  %v252 = vld [vmem:[%s1 + $0x738] sm:$0xff]
  %v253 = vld [vmem:[%s1 + $0x740] sm:$0xff]
  %v254 = vld [vmem:[%s1 + $0x748] sm:$0xff]
  %v255 = vld [vmem:[%s1 + $0x750] sm:$0xff]
  %v256 = vld [vmem:[%s1 + $0x758] sm:$0xff]
  %v257 = vld [vmem:[%s1 + $0x760] sm:$0xff]
  %v258 = vld [vmem:[%s1 + $0x768] sm:$0xff]
  %v259 = vld [vmem:[%s1 + $0x770] sm:$0xff]
  %v260 = vld [vmem:[%s1 + $0x778] sm:$0xff]
  %v261 = vld [vmem:[%s1 + $0x780] sm:$0xff]
  %v262 = vld [vmem:[%s1 + $0x788] sm:$0xff]
  %v263 = vld [vmem:[%s1 + $0x790] sm:$0xff]
  %v264 = vld [vmem:[%s1 + $0x798] sm:$0xff]
  %v265 = vld [vmem:[%s1 + $0x7a0] sm:$0xff]
  %v266 = vld [vmem:[%s1 + $0x7a8] sm:$0xff]
  %v267 = vld [vmem:[%s1 + $0x7b0] sm:$0xff]
  %v268 = vld [vmem:[%s1 + $0x7b8] sm:$0xff]
  %v269 = vld [vmem:[%s1 + $0x7c0] sm:$0xff]
  %v270 = vld [vmem:[%s1 + $0x7c8] sm:$0xff]
  %v271 = vld [vmem:[%s1 + $0x7d0] sm:$0xff]
  %v272 = vld [vmem:[%s1 + $0x7d8] sm:$0xff]
  %v273 = vld [vmem:[%s1 + $0x7e0] sm:$0xff]
  %v274 = vld [vmem:[%s1 + $0x7e8] sm:$0xff]
  %v275 = vld [vmem:[%s1 + $0x7f0] sm:$0xff]
  %v276 = vld [vmem:[%s1 + $0x7f8] sm:$0xff]
  %v277 = vld [vmem:[%s2] sm:$0xff]
  %279 = vset.pattern.permute.xlu0 0
  %280 = vperm.xlu0 %279, %v277
  %v281 = vpop.permute.xlu0 %280
  %283 = vmatprep.subr.mxu0 %v22
  %284 = vmatpush1.msra.mxu0 %v21
  %285 = vmatprep.subr.mxu0 %v38
  %286 = vmatpush1.msra.mxu0 %v37
  %287 = vmatprep.subr.mxu0 %v54
  %288 = vmatpush1.msra.mxu0 %v53
  %289 = vmatprep.subr.mxu0 %v70
  %290 = vmatpush1.msra.mxu0 %v69
  %291 = vmatprep.subr.mxu0 %v86
  %292 = vmatpush1.msra.mxu0 %v85
  %293 = vmatprep.subr.mxu0 %v102
  %294 = vmatpush1.msra.mxu0 %v101
  %295 = vmatprep.subr.mxu0 %v118
  %296 = vmatpush1.msra.mxu0 %v117
  %297 = vmatprep.subr.mxu0 %v134
  %298 = vmatpush1.msra.mxu0 %v133
  %299 = vmatprep.subr.mxu0 %v150
  %300 = vmatpush1.msra.mxu0 %v149
  %301 = vmatprep.subr.mxu0 %v166
  %302 = vmatpush1.msra.mxu0 %v165
  %303 = vmatprep.subr.mxu0 %v182
  %304 = vmatpush1.msra.mxu0 %v181
  %305 = vmatprep.subr.mxu0 %v198
  %306 = vmatpush1.msra.mxu0 %v197
  %307 = vmatprep.subr.mxu0 %v214
  %308 = vmatpush1.msra.mxu0 %v213
  %309 = vmatprep.subr.mxu0 %v230
  %310 = vmatpush1.msra.mxu0 %v229
  %311 = vmatprep.subr.mxu0 %v246
  %312 = vmatpush1.msra.mxu0 %v245
  %313 = vmatprep.subr.mxu0 %v262
  %314 = vmatpush1.msra.mxu0 %v261
  %315 = vmatprep.subr.mxu0 0.0
  %316 = vmatpush1.msra.mxu0 0.0
  %317 = vmatprep.subr.mxu0 0.0
  %318 = vmatpush1.msra.mxu0 0.0
  %319 = vmatprep.subr.mxu0 0.0
  %320 = vmatpush1.msra.mxu0 0.0
  %321 = vmatprep.subr.mxu0 0.0
  %322 = vmatpush1.msra.mxu0 0.0
  %323 = vmatprep.subr.mxu0 0.0
  %324 = vmatpush1.msra.mxu0 0.0
  %325 = vmatprep.subr.mxu0 0.0
  %326 = vmatpush1.msra.mxu0 0.0
  %327 = vmatprep.subr.mxu0 0.0
  %328 = vmatpush1.msra.mxu0 0.0
  %329 = vmatprep.subr.mxu0 0.0
  %330 = vmatpush1.msra.mxu0 0.0
  %331 = vmatprep.subr.mxu0 0.0
  %332 = vmatpush1.msra.mxu0 0.0
  %333 = vmatprep.subr.mxu0 0.0
  %334 = vmatpush1.msra.mxu0 0.0
  %335 = vmatprep.subr.mxu0 0.0
  %336 = vmatpush1.msra.mxu0 0.0
  %337 = vmatprep.subr.mxu0 0.0
  %338 = vmatpush1.msra.mxu0 0.0
  %339 = vmatprep.subr.mxu0 0.0
  %340 = vmatpush1.msra.mxu0 0.0
  %341 = vmatprep.subr.mxu0 0.0
  %342 = vmatpush1.msra.mxu0 0.0
  %343 = vmatprep.subr.mxu0 0.0
  %344 = vmatpush1.msra.mxu0 0.0
  %345 = vmatprep.subr.mxu0 0.0
  %346 = vmatpush1.msra.mxu0 0.0
  %347 = vmatprep.mubr.f32.mxu0 0.0
  %348 = vmatmul.mubr.f32.gmra.mrb[0].mxu0 %v20
  %v349 = vpop.f32.mrb[0].mxu0
  %v350 = vadd.f32 %v281, %v349
  %v351 = vpop.f32.mrb[0].mxu0
  %v352 = vadd.f32 %v281, %v351
  %353 = vdwg.mxu0
  %354 = vmatprep.subr.mxu0 %v24
  %355 = vmatpush1.msra.mxu0 %v23
  %356 = vmatprep.subr.mxu0 %v40
  %357 = vmatpush1.msra.mxu0 %v39
  %358 = vmatprep.subr.mxu0 %v56
  %359 = vmatpush1.msra.mxu0 %v55
  %360 = vmatprep.subr.mxu0 %v72
  %361 = vmatpush1.msra.mxu0 %v71
  %362 = vmatprep.subr.mxu0 %v88
  %363 = vmatpush1.msra.mxu0 %v87
  %364 = vmatprep.subr.mxu0 %v104
  %365 = vmatpush1.msra.mxu0 %v103
  %366 = vmatprep.subr.mxu0 %v120
  %367 = vmatpush1.msra.mxu0 %v119
  %368 = vmatprep.subr.mxu0 %v136
  %369 = vmatpush1.msra.mxu0 %v135
  %370 = vmatprep.subr.mxu0 %v152
  %371 = vmatpush1.msra.mxu0 %v151
  %372 = vmatprep.subr.mxu0 %v168
  %373 = vmatpush1.msra.mxu0 %v167
  %374 = vmatprep.subr.mxu0 %v184
  %375 = vmatpush1.msra.mxu0 %v183
  %376 = vmatprep.subr.mxu0 %v200
  %377 = vmatpush1.msra.mxu0 %v199
  %378 = vmatprep.subr.mxu0 %v216
  %379 = vmatpush1.msra.mxu0 %v215
  %380 = vmatprep.subr.mxu0 %v232
  %381 = vmatpush1.msra.mxu0 %v231
  %382 = vmatprep.subr.mxu0 %v248
  %383 = vmatpush1.msra.mxu0 %v247
  %384 = vmatprep.subr.mxu0 %v264
  %385 = vmatpush1.msra.mxu0 %v263
  %386 = vmatprep.subr.mxu0 0.0
  %387 = vmatpush1.msra.mxu0 0.0
  %388 = vmatprep.subr.mxu0 0.0
  %389 = vmatpush1.msra.mxu0 0.0
  %390 = vmatprep.subr.mxu0 0.0
  %391 = vmatpush1.msra.mxu0 0.0
  %392 = vmatprep.subr.mxu0 0.0
  %393 = vmatpush1.msra.mxu0 0.0
  %394 = vmatprep.subr.mxu0 0.0
  %395 = vmatpush1.msra.mxu0 0.0
  %396 = vmatprep.subr.mxu0 0.0
  %397 = vmatpush1.msra.mxu0 0.0
  %398 = vmatprep.subr.mxu0 0.0
  %399 = vmatpush1.msra.mxu0 0.0
  %400 = vmatprep.subr.mxu0 0.0
  %401 = vmatpush1.msra.mxu0 0.0
  %402 = vmatprep.subr.mxu0 0.0
  %403 = vmatpush1.msra.mxu0 0.0
  %404 = vmatprep.subr.mxu0 0.0
  %405 = vmatpush1.msra.mxu0 0.0
  %406 = vmatprep.subr.mxu0 0.0
  %407 = vmatpush1.msra.mxu0 0.0
  %408 = vmatprep.subr.mxu0 0.0
  %409 = vmatpush1.msra.mxu0 0.0
  %410 = vmatprep.subr.mxu0 0.0
  %411 = vmatpush1.msra.mxu0 0.0
  %412 = vmatprep.subr.mxu0 0.0
  %413 = vmatpush1.msra.mxu0 0.0
  %414 = vmatprep.subr.mxu0 0.0
  %415 = vmatpush1.msra.mxu0 0.0
  %416 = vmatprep.subr.mxu0 0.0
  %417 = vmatpush1.msra.mxu0 0.0
  %418 = vmatprep.mubr.f32.mxu0 0.0
  %419 = vmatmul.mubr.f32.gmra.mrb[0].mxu0 %v20
  %v420 = vpop.f32.mrb[0].mxu0
  %v421 = vadd.f32 %v281, %v420
  %v422 = vpop.f32.mrb[0].mxu0
  %v423 = vadd.f32 %v281, %v422
  %424 = vdwg.mxu0
  %425 = vmatprep.subr.mxu0 %v26
  %426 = vmatpush1.msra.mxu0 %v25
  %427 = vmatprep.subr.mxu0 %v42
  %428 = vmatpush1.msra.mxu0 %v41
  %429 = vmatprep.subr.mxu0 %v58
  %430 = vmatpush1.msra.mxu0 %v57
  %431 = vmatprep.subr.mxu0 %v74
  %432 = vmatpush1.msra.mxu0 %v73
  %433 = vmatprep.subr.mxu0 %v90
  %434 = vmatpush1.msra.mxu0 %v89
  %435 = vmatprep.subr.mxu0 %v106
  %436 = vmatpush1.msra.mxu0 %v105
  %437 = vmatprep.subr.mxu0 %v122
  %438 = vmatpush1.msra.mxu0 %v121
  %439 = vmatprep.subr.mxu0 %v138
  %440 = vmatpush1.msra.mxu0 %v137
  %441 = vmatprep.subr.mxu0 %v154
  %442 = vmatpush1.msra.mxu0 %v153
  %443 = vmatprep.subr.mxu0 %v170
  %444 = vmatpush1.msra.mxu0 %v169
  %445 = vmatprep.subr.mxu0 %v186
  %446 = vmatpush1.msra.mxu0 %v185
  %447 = vmatprep.subr.mxu0 %v202
  %448 = vmatpush1.msra.mxu0 %v201
  %449 = vmatprep.subr.mxu0 %v218
  %450 = vmatpush1.msra.mxu0 %v217
  %451 = vmatprep.subr.mxu0 %v234
  %452 = vmatpush1.msra.mxu0 %v233
  %453 = vmatprep.subr.mxu0 %v250
  %454 = vmatpush1.msra.mxu0 %v249
  %455 = vmatprep.subr.mxu0 %v266
  %456 = vmatpush1.msra.mxu0 %v265
  %457 = vmatprep.subr.mxu0 0.0
  %458 = vmatpush1.msra.mxu0 0.0
  %459 = vmatprep.subr.mxu0 0.0
  %460 = vmatpush1.msra.mxu0 0.0
  %461 = vmatprep.subr.mxu0 0.0
  %462 = vmatpush1.msra.mxu0 0.0
  %463 = vmatprep.subr.mxu0 0.0
  %464 = vmatpush1.msra.mxu0 0.0
  %465 = vmatprep.subr.mxu0 0.0
  %466 = vmatpush1.msra.mxu0 0.0
  %467 = vmatprep.subr.mxu0 0.0
  %468 = vmatpush1.msra.mxu0 0.0
  %469 = vmatprep.subr.mxu0 0.0
  %470 = vmatpush1.msra.mxu0 0.0
  %471 = vmatprep.subr.mxu0 0.0
  %472 = vmatpush1.msra.mxu0 0.0
  %473 = vmatprep.subr.mxu0 0.0
  %474 = vmatpush1.msra.mxu0 0.0
  %475 = vmatprep.subr.mxu0 0.0
  %476 = vmatpush1.msra.mxu0 0.0
  %477 = vmatprep.subr.mxu0 0.0
  %478 = vmatpush1.msra.mxu0 0.0
  %479 = vmatprep.subr.mxu0 0.0
  %480 = vmatpush1.msra.mxu0 0.0
  %481 = vmatprep.subr.mxu0 0.0
  %482 = vmatpush1.msra.mxu0 0.0
  %483 = vmatprep.subr.mxu0 0.0
  %484 = vmatpush1.msra.mxu0 0.0
  %485 = vmatprep.subr.mxu0 0.0
  %486 = vmatpush1.msra.mxu0 0.0
  %487 = vmatprep.subr.mxu0 0.0
  %488 = vmatpush1.msra.mxu0 0.0
  %489 = vmatprep.mubr.f32.mxu0 0.0
  %490 = vmatmul.mubr.f32.gmra.mrb[0].mxu0 %v20
  %v491 = vpop.f32.mrb[0].mxu0
  %v492 = vadd.f32 %v281, %v491
  %v493 = vpop.f32.mrb[0].mxu0
  %v494 = vadd.f32 %v281, %v493
  %495 = vdwg.mxu0
  %496 = vmatprep.subr.mxu0 %v28
  %497 = vmatpush1.msra.mxu0 %v27
  %498 = vmatprep.subr.mxu0 %v44
  %499 = vmatpush1.msra.mxu0 %v43
  %500 = vmatprep.subr.mxu0 %v60
  %501 = vmatpush1.msra.mxu0 %v59
  %502 = vmatprep.subr.mxu0 %v76
  %503 = vmatpush1.msra.mxu0 %v75
  %504 = vmatprep.subr.mxu0 %v92
  %505 = vmatpush1.msra.mxu0 %v91
  %506 = vmatprep.subr.mxu0 %v108
  %507 = vmatpush1.msra.mxu0 %v107
  %508 = vmatprep.subr.mxu0 %v124
  %509 = vmatpush1.msra.mxu0 %v123
  %510 = vmatprep.subr.mxu0 %v140
  %511 = vmatpush1.msra.mxu0 %v139
  %512 = vmatprep.subr.mxu0 %v156
  %513 = vmatpush1.msra.mxu0 %v155
  %514 = vmatprep.subr.mxu0 %v172
  %515 = vmatpush1.msra.mxu0 %v171
  %516 = vmatprep.subr.mxu0 %v188
  %517 = vmatpush1.msra.mxu0 %v187
  %518 = vmatprep.subr.mxu0 %v204
  %519 = vmatpush1.msra.mxu0 %v203
  %520 = vmatprep.subr.mxu0 %v220
  %521 = vmatpush1.msra.mxu0 %v219
  %522 = vmatprep.subr.mxu0 %v236
  %523 = vmatpush1.msra.mxu0 %v235
  %524 = vmatprep.subr.mxu0 %v252
  %525 = vmatpush1.msra.mxu0 %v251
  %526 = vmatprep.subr.mxu0 %v268
  %527 = vmatpush1.msra.mxu0 %v267
  %528 = vmatprep.subr.mxu0 0.0
  %529 = vmatpush1.msra.mxu0 0.0
  %530 = vmatprep.subr.mxu0 0.0
  %531 = vmatpush1.msra.mxu0 0.0
  %532 = vmatprep.subr.mxu0 0.0
  %533 = vmatpush1.msra.mxu0 0.0
  %534 = vmatprep.subr.mxu0 0.0
  %535 = vmatpush1.msra.mxu0 0.0
  %536 = vmatprep.subr.mxu0 0.0
  %537 = vmatpush1.msra.mxu0 0.0
  %538 = vmatprep.subr.mxu0 0.0
  %539 = vmatpush1.msra.mxu0 0.0
  %540 = vmatprep.subr.mxu0 0.0
  %541 = vmatpush1.msra.mxu0 0.0
  %542 = vmatprep.subr.mxu0 0.0
  %543 = vmatpush1.msra.mxu0 0.0
  %544 = vmatprep.subr.mxu0 0.0
  %545 = vmatpush1.msra.mxu0 0.0
  %546 = vmatprep.subr.mxu0 0.0
  %547 = vmatpush1.msra.mxu0 0.0
  %548 = vmatprep.subr.mxu0 0.0
  %549 = vmatpush1.msra.mxu0 0.0
  %550 = vmatprep.subr.mxu0 0.0
  %551 = vmatpush1.msra.mxu0 0.0
  %552 = vmatprep.subr.mxu0 0.0
  %553 = vmatpush1.msra.mxu0 0.0
  %554 = vmatprep.subr.mxu0 0.0
  %555 = vmatpush1.msra.mxu0 0.0
  %556 = vmatprep.subr.mxu0 0.0
  %557 = vmatpush1.msra.mxu0 0.0
  %558 = vmatprep.subr.mxu0 0.0
  %559 = vmatpush1.msra.mxu0 0.0
  %560 = vmatprep.mubr.f32.mxu0 0.0
  %561 = vmatmul.mubr.f32.gmra.mrb[0].mxu0 %v20
  %v562 = vpop.f32.mrb[0].mxu0
  %v563 = vadd.f32 %v281, %v562
  %v564 = vpop.f32.mrb[0].mxu0
  %v565 = vadd.f32 %v281, %v564
  %566 = vdwg.mxu0
  %567 = vmatprep.subr.mxu0 %v30
  %568 = vmatpush1.msra.mxu0 %v29
  %569 = vmatprep.subr.mxu0 %v46
  %570 = vmatpush1.msra.mxu0 %v45
  %571 = vmatprep.subr.mxu0 %v62
  %572 = vmatpush1.msra.mxu0 %v61
  %573 = vmatprep.subr.mxu0 %v78
  %574 = vmatpush1.msra.mxu0 %v77
  %575 = vmatprep.subr.mxu0 %v94
  %576 = vmatpush1.msra.mxu0 %v93
  %577 = vmatprep.subr.mxu0 %v110
  %578 = vmatpush1.msra.mxu0 %v109
  %579 = vmatprep.subr.mxu0 %v126
  %580 = vmatpush1.msra.mxu0 %v125
  %581 = vmatprep.subr.mxu0 %v142
  %582 = vmatpush1.msra.mxu0 %v141
  %583 = vmatprep.subr.mxu0 %v158
  %584 = vmatpush1.msra.mxu0 %v157
  %585 = vmatprep.subr.mxu0 %v174
  %586 = vmatpush1.msra.mxu0 %v173
  %587 = vmatprep.subr.mxu0 %v190
  %588 = vmatpush1.msra.mxu0 %v189
  %589 = vmatprep.subr.mxu0 %v206
  %590 = vmatpush1.msra.mxu0 %v205
  %591 = vmatprep.subr.mxu0 %v222
  %592 = vmatpush1.msra.mxu0 %v221
  %593 = vmatprep.subr.mxu0 %v238
  %594 = vmatpush1.msra.mxu0 %v237
  %595 = vmatprep.subr.mxu0 %v254
  %596 = vmatpush1.msra.mxu0 %v253
  %597 = vmatprep.subr.mxu0 %v270
  %598 = vmatpush1.msra.mxu0 %v269
  %599 = vmatprep.subr.mxu0 0.0
  %600 = vmatpush1.msra.mxu0 0.0
  %601 = vmatprep.subr.mxu0 0.0
  %602 = vmatpush1.msra.mxu0 0.0
  %603 = vmatprep.subr.mxu0 0.0
  %604 = vmatpush1.msra.mxu0 0.0
  %605 = vmatprep.subr.mxu0 0.0
  %606 = vmatpush1.msra.mxu0 0.0
  %607 = vmatprep.subr.mxu0 0.0
  %608 = vmatpush1.msra.mxu0 0.0
  %609 = vmatprep.subr.mxu0 0.0
  %610 = vmatpush1.msra.mxu0 0.0
  %611 = vmatprep.subr.mxu0 0.0
  %612 = vmatpush1.msra.mxu0 0.0
  %613 = vmatprep.subr.mxu0 0.0
  %614 = vmatpush1.msra.mxu0 0.0
  %615 = vmatprep.subr.mxu0 0.0
  %616 = vmatpush1.msra.mxu0 0.0
  %617 = vmatprep.subr.mxu0 0.0
  %618 = vmatpush1.msra.mxu0 0.0
  %619 = vmatprep.subr.mxu0 0.0
  %620 = vmatpush1.msra.mxu0 0.0
  %621 = vmatprep.subr.mxu0 0.0
  %622 = vmatpush1.msra.mxu0 0.0
  %623 = vmatprep.subr.mxu0 0.0
  %624 = vmatpush1.msra.mxu0 0.0
  %625 = vmatprep.subr.mxu0 0.0
  %626 = vmatpush1.msra.mxu0 0.0
  %627 = vmatprep.subr.mxu0 0.0
  %628 = vmatpush1.msra.mxu0 0.0
  %629 = vmatprep.subr.mxu0 0.0
  %630 = vmatpush1.msra.mxu0 0.0
  %631 = vmatprep.mubr.f32.mxu0 0.0
  %632 = vmatmul.mubr.f32.gmra.mrb[0].mxu0 %v20
  %v633 = vpop.f32.mrb[0].mxu0
  %v634 = vadd.f32 %v281, %v633
  %v635 = vpop.f32.mrb[0].mxu0
  %v636 = vadd.f32 %v281, %v635
  %637 = vdwg.mxu0
  %638 = vmatprep.subr.mxu0 %v32
  %639 = vmatpush1.msra.mxu0 %v31
  %640 = vmatprep.subr.mxu0 %v48
  %641 = vmatpush1.msra.mxu0 %v47
  %642 = vmatprep.subr.mxu0 %v64
  %643 = vmatpush1.msra.mxu0 %v63
  %644 = vmatprep.subr.mxu0 %v80
  %645 = vmatpush1.msra.mxu0 %v79
  %646 = vmatprep.subr.mxu0 %v96
  %647 = vmatpush1.msra.mxu0 %v95
  %648 = vmatprep.subr.mxu0 %v112
  %649 = vmatpush1.msra.mxu0 %v111
  %650 = vmatprep.subr.mxu0 %v128
  %651 = vmatpush1.msra.mxu0 %v127
  %652 = vmatprep.subr.mxu0 %v144
  %653 = vmatpush1.msra.mxu0 %v143
  %654 = vmatprep.subr.mxu0 %v160
  %655 = vmatpush1.msra.mxu0 %v159
  %656 = vmatprep.subr.mxu0 %v176
  %657 = vmatpush1.msra.mxu0 %v175
  %658 = vmatprep.subr.mxu0 %v192
  %659 = vmatpush1.msra.mxu0 %v191
  %660 = vmatprep.subr.mxu0 %v208
  %661 = vmatpush1.msra.mxu0 %v207
  %662 = vmatprep.subr.mxu0 %v224
  %663 = vmatpush1.msra.mxu0 %v223
  %664 = vmatprep.subr.mxu0 %v240
  %665 = vmatpush1.msra.mxu0 %v239
  %666 = vmatprep.subr.mxu0 %v256
  %667 = vmatpush1.msra.mxu0 %v255
  %668 = vmatprep.subr.mxu0 %v272
  %669 = vmatpush1.msra.mxu0 %v271
  %670 = vmatprep.subr.mxu0 0.0
  %671 = vmatpush1.msra.mxu0 0.0
  %672 = vmatprep.subr.mxu0 0.0
  %673 = vmatpush1.msra.mxu0 0.0
  %674 = vmatprep.subr.mxu0 0.0
  %675 = vmatpush1.msra.mxu0 0.0
  %676 = vmatprep.subr.mxu0 0.0
  %677 = vmatpush1.msra.mxu0 0.0
  %678 = vmatprep.subr.mxu0 0.0
  %679 = vmatpush1.msra.mxu0 0.0
  %680 = vmatprep.subr.mxu0 0.0
  %681 = vmatpush1.msra.mxu0 0.0
  %682 = vmatprep.subr.mxu0 0.0
  %683 = vmatpush1.msra.mxu0 0.0
  %684 = vmatprep.subr.mxu0 0.0
  %685 = vmatpush1.msra.mxu0 0.0
  %686 = vmatprep.subr.mxu0 0.0
  %687 = vmatpush1.msra.mxu0 0.0
  %688 = vmatprep.subr.mxu0 0.0
  %689 = vmatpush1.msra.mxu0 0.0
  %690 = vmatprep.subr.mxu0 0.0
  %691 = vmatpush1.msra.mxu0 0.0
  %692 = vmatprep.subr.mxu0 0.0
  %693 = vmatpush1.msra.mxu0 0.0
  %694 = vmatprep.subr.mxu0 0.0
  %695 = vmatpush1.msra.mxu0 0.0
  %696 = vmatprep.subr.mxu0 0.0
  %697 = vmatpush1.msra.mxu0 0.0
  %698 = vmatprep.subr.mxu0 0.0
  %699 = vmatpush1.msra.mxu0 0.0
  %700 = vmatprep.subr.mxu0 0.0
  %701 = vmatpush1.msra.mxu0 0.0
  %702 = vmatprep.mubr.f32.mxu0 0.0
  %703 = vmatmul.mubr.f32.gmra.mrb[0].mxu0 %v20
  %v704 = vpop.f32.mrb[0].mxu0
  %v705 = vadd.f32 %v281, %v704
  %v706 = vpop.f32.mrb[0].mxu0
  %v707 = vadd.f32 %v281, %v706
  %708 = vdwg.mxu0
  %709 = vmatprep.subr.mxu0 %v34
  %710 = vmatpush1.msra.mxu0 %v33
  %711 = vmatprep.subr.mxu0 %v50
  %712 = vmatpush1.msra.mxu0 %v49
  %713 = vmatprep.subr.mxu0 %v66
  %714 = vmatpush1.msra.mxu0 %v65
  %715 = vmatprep.subr.mxu0 %v82
  %716 = vmatpush1.msra.mxu0 %v81
  %717 = vmatprep.subr.mxu0 %v98
  %718 = vmatpush1.msra.mxu0 %v97
  %719 = vmatprep.subr.mxu0 %v114
  %720 = vmatpush1.msra.mxu0 %v113
  %721 = vmatprep.subr.mxu0 %v130
  %722 = vmatpush1.msra.mxu0 %v129
  %723 = vmatprep.subr.mxu0 %v146
  %724 = vmatpush1.msra.mxu0 %v145
  %725 = vmatprep.subr.mxu0 %v162
  %726 = vmatpush1.msra.mxu0 %v161
  %727 = vmatprep.subr.mxu0 %v178
  %728 = vmatpush1.msra.mxu0 %v177
  %729 = vmatprep.subr.mxu0 %v194
  %730 = vmatpush1.msra.mxu0 %v193
  %731 = vmatprep.subr.mxu0 %v210
  %732 = vmatpush1.msra.mxu0 %v209
  %733 = vmatprep.subr.mxu0 %v226
  %734 = vmatpush1.msra.mxu0 %v225
  %735 = vmatprep.subr.mxu0 %v242
  %736 = vmatpush1.msra.mxu0 %v241
  %737 = vmatprep.subr.mxu0 %v258
  %738 = vmatpush1.msra.mxu0 %v257
  %739 = vmatprep.subr.mxu0 %v274
  %740 = vmatpush1.msra.mxu0 %v273
  %741 = vmatprep.subr.mxu0 0.0
  %742 = vmatpush1.msra.mxu0 0.0
  %743 = vmatprep.subr.mxu0 0.0
  %744 = vmatpush1.msra.mxu0 0.0
  %745 = vmatprep.subr.mxu0 0.0
  %746 = vmatpush1.msra.mxu0 0.0
  %747 = vmatprep.subr.mxu0 0.0
  %748 = vmatpush1.msra.mxu0 0.0
  %749 = vmatprep.subr.mxu0 0.0
  %750 = vmatpush1.msra.mxu0 0.0
  %751 = vmatprep.subr.mxu0 0.0
  %752 = vmatpush1.msra.mxu0 0.0
  %753 = vmatprep.subr.mxu0 0.0
  %754 = vmatpush1.msra.mxu0 0.0
  %755 = vmatprep.subr.mxu0 0.0
  %756 = vmatpush1.msra.mxu0 0.0
  %757 = vmatprep.subr.mxu0 0.0
  %758 = vmatpush1.msra.mxu0 0.0
  %759 = vmatprep.subr.mxu0 0.0
  %760 = vmatpush1.msra.mxu0 0.0
  %761 = vmatprep.subr.mxu0 0.0
  %762 = vmatpush1.msra.mxu0 0.0
  %763 = vmatprep.subr.mxu0 0.0
  %764 = vmatpush1.msra.mxu0 0.0
  %765 = vmatprep.subr.mxu0 0.0
  %766 = vmatpush1.msra.mxu0 0.0
  %767 = vmatprep.subr.mxu0 0.0
  %768 = vmatpush1.msra.mxu0 0.0
  %769 = vmatprep.subr.mxu0 0.0
  %770 = vmatpush1.msra.mxu0 0.0
  %771 = vmatprep.subr.mxu0 0.0
  %772 = vmatpush1.msra.mxu0 0.0
  %773 = vmatprep.mubr.f32.mxu0 0.0
  %774 = vmatmul.mubr.f32.gmra.mrb[0].mxu0 %v20
  %v775 = vpop.f32.mrb[0].mxu0
  %v776 = vadd.f32 %v281, %v775
  %v777 = vpop.f32.mrb[0].mxu0
  %v778 = vadd.f32 %v281, %v777
  %779 = vdwg.mxu0
  %780 = vmatprep.subr.mxu0 %v36
  %781 = vmatpush1.msra.mxu0 %v35
  %782 = vmatprep.subr.mxu0 %v52
  %783 = vmatpush1.msra.mxu0 %v51
  %784 = vmatprep.subr.mxu0 %v68
  %785 = vmatpush1.msra.mxu0 %v67
  %786 = vmatprep.subr.mxu0 %v84
  %787 = vmatpush1.msra.mxu0 %v83
  %788 = vmatprep.subr.mxu0 %v100
  %789 = vmatpush1.msra.mxu0 %v99
  %790 = vmatprep.subr.mxu0 %v116
  %791 = vmatpush1.msra.mxu0 %v115
  %792 = vmatprep.subr.mxu0 %v132
  %793 = vmatpush1.msra.mxu0 %v131
  %794 = vmatprep.subr.mxu0 %v148
  %795 = vmatpush1.msra.mxu0 %v147
  %796 = vmatprep.subr.mxu0 %v164
  %797 = vmatpush1.msra.mxu0 %v163
  %798 = vmatprep.subr.mxu0 %v180
  %799 = vmatpush1.msra.mxu0 %v179
  %800 = vmatprep.subr.mxu0 %v196
  %801 = vmatpush1.msra.mxu0 %v195
  %802 = vmatprep.subr.mxu0 %v212
  %803 = vmatpush1.msra.mxu0 %v211
  %804 = vmatprep.subr.mxu0 %v228
  %805 = vmatpush1.msra.mxu0 %v227
  %806 = vmatprep.subr.mxu0 %v244
  %807 = vmatpush1.msra.mxu0 %v243
  %808 = vmatprep.subr.mxu0 %v260
  %809 = vmatpush1.msra.mxu0 %v259
  %810 = vmatprep.subr.mxu0 %v276
  %811 = vmatpush1.msra.mxu0 %v275
  %812 = vmatprep.subr.mxu0 0.0
  %813 = vmatpush1.msra.mxu0 0.0
  %814 = vmatprep.subr.mxu0 0.0
  %815 = vmatpush1.msra.mxu0 0.0
  %816 = vmatprep.subr.mxu0 0.0
  %817 = vmatpush1.msra.mxu0 0.0
  %818 = vmatprep.subr.mxu0 0.0
  %819 = vmatpush1.msra.mxu0 0.0
  %820 = vmatprep.subr.mxu0 0.0
  %821 = vmatpush1.msra.mxu0 0.0
  %822 = vmatprep.subr.mxu0 0.0
  %823 = vmatpush1.msra.mxu0 0.0
  %824 = vmatprep.subr.mxu0 0.0
  %825 = vmatpush1.msra.mxu0 0.0
  %826 = vmatprep.subr.mxu0 0.0
  %827 = vmatpush1.msra.mxu0 0.0
  %828 = vmatprep.subr.mxu0 0.0
  %829 = vmatpush1.msra.mxu0 0.0
  %830 = vmatprep.subr.mxu0 0.0
  %831 = vmatpush1.msra.mxu0 0.0
  %832 = vmatprep.subr.mxu0 0.0
  %833 = vmatpush1.msra.mxu0 0.0
  %834 = vmatprep.subr.mxu0 0.0
  %835 = vmatpush1.msra.mxu0 0.0
  %836 = vmatprep.subr.mxu0 0.0
  %837 = vmatpush1.msra.mxu0 0.0
  %838 = vmatprep.subr.mxu0 0.0
  %839 = vmatpush1.msra.mxu0 0.0
  %840 = vmatprep.subr.mxu0 0.0
  %841 = vmatpush1.msra.mxu0 0.0
  %842 = vmatprep.subr.mxu0 0.0
  %843 = vmatpush1.msra.mxu0 0.0
  %844 = vmatprep.mubr.f32.mxu0 0.0
  %845 = vmatmul.mubr.f32.gmra.mrb[0].mxu0 %v20
  %v846 = vpop.f32.mrb[0].mxu0
  %v847 = vadd.f32 %v281, %v846
  %v848 = vpop.f32.mrb[0].mxu0
  %v849 = vadd.f32 %v281, %v848
  %850 = vdwg.mxu0
  %v851 = vadd.f32 %v350, %v352
  %v852 = vadd.f32 %v851, %v421
  %v853 = vadd.f32 %v852, %v423
  %v854 = vadd.f32 %v853, %v492
  %v855 = vadd.f32 %v854, %v494
  %v856 = vadd.f32 %v855, %v563
  %v857 = vadd.f32 %v856, %v565
  %v858 = vadd.f32 %v857, %v634
  %v859 = vadd.f32 %v858, %v636
  %v860 = vadd.f32 %v859, %v705
  %v861 = vadd.f32 %v860, %v707
  %v862 = vadd.f32 %v861, %v776
  %v863 = vadd.f32 %v862, %v778
  %v864 = vadd.f32 %v863, %v847
  %v865 = vadd.f32 %v864, %v849
  %866 = vadd.xlane.f32.xlu0 %v865
  %v867 = vpop.xlane.xlu0 %866
  %v868 = vrcp.pop 2048.0
  %v869 = vmul.f32 %v867, %v868
  %v870 = vsub.f32 %v350, %v869
  %v871 = vsub.f32 %v352, %v869
  %v872 = vsub.f32 %v421, %v869
  %v873 = vsub.f32 %v423, %v869
  %v874 = vsub.f32 %v492, %v869
  %v875 = vsub.f32 %v494, %v869
  %v876 = vsub.f32 %v563, %v869
  %v877 = vsub.f32 %v565, %v869
  %v878 = vsub.f32 %v634, %v869
  %v879 = vsub.f32 %v636, %v869
  %v880 = vsub.f32 %v705, %v869
  %v881 = vsub.f32 %v707, %v869
  %v882 = vsub.f32 %v776, %v869
  %v883 = vsub.f32 %v778, %v869
  %v884 = vsub.f32 %v847, %v869
  %v885 = vsub.f32 %v849, %v869
  %v886 = vmul.f32 %v870, %v870
  %v887 = vmul.f32 %v871, %v871
  %v888 = vmul.f32 %v872, %v872
  %v889 = vmul.f32 %v873, %v873
  %v890 = vmul.f32 %v874, %v874
  %v891 = vmul.f32 %v875, %v875
  %v892 = vmul.f32 %v876, %v876
  %v893 = vmul.f32 %v877, %v877
  %v894 = vmul.f32 %v878, %v878
  %v895 = vmul.f32 %v879, %v879
  %v896 = vmul.f32 %v880, %v880
  %v897 = vmul.f32 %v881, %v881
  %v898 = vmul.f32 %v882, %v882
  %v899 = vmul.f32 %v883, %v883
  %v900 = vmul.f32 %v884, %v884
  %v901 = vmul.f32 %v885, %v885
  %v902 = vadd.f32 %v886, %v887
  %v903 = vadd.f32 %v902, %v888
  %v904 = vadd.f32 %v903, %v889
  %v905 = vadd.f32 %v904, %v890
  %v906 = vadd.f32 %v905, %v891
  %v907 = vadd.f32 %v906, %v892
  %v908 = vadd.f32 %v907, %v893
  %v909 = vadd.f32 %v908, %v894
  %v910 = vadd.f32 %v909, %v895
  %v911 = vadd.f32 %v910, %v896
  %v912 = vadd.f32 %v911, %v897
  %v913 = vadd.f32 %v912, %v898
  %v914 = vadd.f32 %v913, %v899
  %v915 = vadd.f32 %v914, %v900
  %v916 = vadd.f32 %v915, %v901
  %917 = vadd.xlane.f32.xlu0 %v916
  %v918 = vpop.xlane.xlu0 %917
  %v919 = vmul.f32 %v918, %v868
  %v920 = vld [vmem:[%s3] sm:$0xff]
  %v921 = vadd.f32 %v919, 1e-05
  %v922 = vrsqrt.pop %v921
  %v923 = vmul.f32 %v920, %v922
  %925 = vset.pattern.permute.xlu0 0
  %926 = vperm.xlu0 %925, %v923
  %v927 = vpop.permute.xlu0 %926
  %v929 = vmul.f32 %v870, %v927
  %v930 = vmul.f32 %v871, %v927
  %v931 = vmul.f32 %v872, %v927
  %v932 = vmul.f32 %v873, %v927
  %v933 = vmul.f32 %v874, %v927
  %v934 = vmul.f32 %v875, %v927
  %v935 = vmul.f32 %v876, %v927
  %v936 = vmul.f32 %v877, %v927
  %v937 = vmul.f32 %v878, %v927
  %v938 = vmul.f32 %v879, %v927
  %v939 = vmul.f32 %v880, %v927
  %v940 = vmul.f32 %v881, %v927
  %v941 = vmul.f32 %v882, %v927
  %v942 = vmul.f32 %v883, %v927
  %v943 = vmul.f32 %v884, %v927
  %v944 = vmul.f32 %v885, %v927
  %v945 = vld [vmem:[%s4] sm:$0xff]
  %947 = vset.pattern.permute.xlu0 0
  %948 = vperm.xlu0 %947, %v945
  %v949 = vpop.permute.xlu0 %948
  %v951 = vadd.f32 %v929, %v949
  %v952 = vadd.f32 %v930, %v949
  %v953 = vadd.f32 %v931, %v949
  %v954 = vadd.f32 %v932, %v949
  %v955 = vadd.f32 %v933, %v949
  %v956 = vadd.f32 %v934, %v949
  %v957 = vadd.f32 %v935, %v949
  %v958 = vadd.f32 %v936, %v949
  %v959 = vadd.f32 %v937, %v949
  %v960 = vadd.f32 %v938, %v949
  %v961 = vadd.f32 %v939, %v949
  %v962 = vadd.f32 %v940, %v949
  %v963 = vadd.f32 %v941, %v949
  %v964 = vadd.f32 %v942, %v949
  %v965 = vadd.f32 %v943, %v949
  %v966 = vadd.f32 %v944, %v949
  %vm967 = vcmp.ge.f32.partialorder %v951, 0.0
  %vm968 = vcmp.ge.f32.partialorder %v952, 0.0
  %vm969 = vcmp.ge.f32.partialorder %v953, 0.0
  %vm970 = vcmp.ge.f32.partialorder %v954, 0.0
  %vm971 = vcmp.ge.f32.partialorder %v955, 0.0
  %vm972 = vcmp.ge.f32.partialorder %v956, 0.0
  %vm973 = vcmp.ge.f32.partialorder %v957, 0.0
  %vm974 = vcmp.ge.f32.partialorder %v958, 0.0
  %vm975 = vcmp.ge.f32.partialorder %v959, 0.0
  %vm976 = vcmp.ge.f32.partialorder %v960, 0.0
  %vm977 = vcmp.ge.f32.partialorder %v961, 0.0
  %vm978 = vcmp.ge.f32.partialorder %v962, 0.0
  %vm979 = vcmp.ge.f32.partialorder %v963, 0.0
  %vm980 = vcmp.ge.f32.partialorder %v964, 0.0
  %vm981 = vcmp.ge.f32.partialorder %v965, 0.0
  %vm982 = vcmp.ge.f32.partialorder %v966, 0.0
  %v983 = vmul.f32 %v951, 0.2
  %v984 = vmul.f32 %v952, 0.2
  %v985 = vmul.f32 %v953, 0.2
  %v986 = vmul.f32 %v954, 0.2
  %v987 = vmul.f32 %v955, 0.2
  %v988 = vmul.f32 %v956, 0.2
  %v989 = vmul.f32 %v957, 0.2
  %v990 = vmul.f32 %v958, 0.2
  %v991 = vmul.f32 %v959, 0.2
  %v992 = vmul.f32 %v960, 0.2
  %v993 = vmul.f32 %v961, 0.2
  %v994 = vmul.f32 %v962, 0.2
  %v995 = vmul.f32 %v963, 0.2
  %v996 = vmul.f32 %v964, 0.2
  %v997 = vmul.f32 %v965, 0.2
  %v998 = vmul.f32 %v966, 0.2
  %v999 = vsel %vm967, %v951, %v983
  %v1000 = vsel %vm968, %v952, %v984
  %v1001 = vsel %vm969, %v953, %v985
  %v1002 = vsel %vm970, %v954, %v986
  %v1003 = vsel %vm971, %v955, %v987
  %v1004 = vsel %vm972, %v956, %v988
  %v1005 = vsel %vm973, %v957, %v989
  %v1006 = vsel %vm974, %v958, %v990
  %v1007 = vsel %vm975, %v959, %v991
  %v1008 = vsel %vm976, %v960, %v992
  %v1009 = vsel %vm977, %v961, %v993
  %v1010 = vsel %vm978, %v962, %v994
  %v1011 = vsel %vm979, %v963, %v995
  %v1012 = vsel %vm980, %v964, %v996
  %v1013 = vsel %vm981, %v965, %v997
  %v1014 = vsel %vm982, %v966, %v998
  %1015 = vst [vmem:[%s5] sm:$0xff] %v999
  %1016 = vst [vmem:[%s5 + $0x8] sm:$0xff] %v1000
  %1017 = vst [vmem:[%s5 + $0x10] sm:$0xff] %v1001
  %1018 = vst [vmem:[%s5 + $0x18] sm:$0xff] %v1002
  %1019 = vst [vmem:[%s5 + $0x20] sm:$0xff] %v1003
  %1020 = vst [vmem:[%s5 + $0x28] sm:$0xff] %v1004
  %1021 = vst [vmem:[%s5 + $0x30] sm:$0xff] %v1005
  %1022 = vst [vmem:[%s5 + $0x38] sm:$0xff] %v1006
  %1023 = vst [vmem:[%s5 + $0x40] sm:$0xff] %v1007
  %1024 = vst [vmem:[%s5 + $0x48] sm:$0xff] %v1008
  %1025 = vst [vmem:[%s5 + $0x50] sm:$0xff] %v1009
  %1026 = vst [vmem:[%s5 + $0x58] sm:$0xff] %v1010
  %1027 = vst [vmem:[%s5 + $0x60] sm:$0xff] %v1011
  %1028 = vst [vmem:[%s5 + $0x68] sm:$0xff] %v1012
  %1029 = vst [vmem:[%s5 + $0x70] sm:$0xff] %v1013
  %1030 = vst [vmem:[%s5 + $0x78] sm:$0xff] %v1014
  // Predicated region
  $region22: #{dcgan_discriminator_forward.5} parent=0 // pred_check
    _
  $region23: #{dcgan_discriminator_forward.5} parent=0 // pred_check_branch
    %1032 = sbr.rel (0) target = $region25
  $region24: #{dcgan_discriminator_forward.5} parent=0 // pred_region
    _
  $region25: #{dcgan_discriminator_forward.5} parent=0 // pred_fallthru
    _
  // Predicated region
  $region26: #{dcgan_discriminator_forward.5} parent=0 // pred_check
    _
  $region27: #{dcgan_discriminator_forward.5} parent=0 // pred_check_branch
    %1034 = sbr.rel (0) target = $region29
  $region28: #{dcgan_discriminator_forward.5} parent=0 // pred_region
    _
  $region29: #{dcgan_discriminator_forward.5} parent=0 // pred_fallthru
    _

// kernel: dcgan_discriminator_forward.6
$region0: #{dcgan_discriminator_forward.6}
  #allocation0 [shape = 'u32[]', space=smem, size = 0x4, offset = 0x4, fixed_abs, tag = 'smem constant byte address 0x4 - core index']
  #allocation1 [shape = 'u32[144,128]{1,0:T(1,128)}', space=vmem, size = 0x12000, scoped, tag = 'internal scratch']
  %s0 = inlined_call_operand.vmem [shape: f32[16,128], index: 0, kind: input, shape index: {}]
  %s1 = inlined_call_operand.vmem [shape: f32[128,512], index: 1, kind: input, shape index: {}]
  %s2 = inlined_call_operand.vmem [shape: f32[16,1], index: 2, kind: input, shape index: {}]
  %s3 = inlined_call_operand.vmem [shape: f32[16,1], index: 3, kind: input, shape index: {}]
  %s4 = inlined_call_operand.vmem [shape: f32[16,1], index: 4, kind: input, shape index: {}]
  %s5 = inlined_call_operand.vmem [shape: f32[16,512], index: 5, kind: output, shape index: {}]
  %s6 = sld [smem:[#allocation0]]
  $region30: #{dcgan_discriminator_forward.6} parent=0
    _
  %s8 = ssub.s32 1, %s6
  %s9 = scalar_select 0, %s8, %s6
  // Predicated region
  $region2: #{dcgan_discriminator_forward.6} parent=0 // pred_check
    _
  $region3: #{dcgan_discriminator_forward.6} parent=0 // pred_check_branch
    %11 = sbr.rel (0) target = $region5
  $region4: #{dcgan_discriminator_forward.6} parent=0 // pred_region
    _
  $region5: #{dcgan_discriminator_forward.6} parent=0 // pred_fallthru
    _
  // Predicated region
  $region6: #{dcgan_discriminator_forward.6} parent=0 // pred_check
    _
  $region7: #{dcgan_discriminator_forward.6} parent=0 // pred_check_branch
    %13 = sbr.rel (0) target = $region9
  $region8: #{dcgan_discriminator_forward.6} parent=0 // pred_region
    _
  $region9: #{dcgan_discriminator_forward.6} parent=0 // pred_fallthru
    _
  // Predicated region
  $region10: #{dcgan_discriminator_forward.6} parent=0 // pred_check
    _
  $region11: #{dcgan_discriminator_forward.6} parent=0 // pred_check_branch
    %15 = sbr.rel (0) target = $region13
  $region12: #{dcgan_discriminator_forward.6} parent=0 // pred_region
    _
  $region13: #{dcgan_discriminator_forward.6} parent=0 // pred_fallthru
    _
  // Predicated region
  $region14: #{dcgan_discriminator_forward.6} parent=0 // pred_check
    _
  $region15: #{dcgan_discriminator_forward.6} parent=0 // pred_check_branch
    %17 = sbr.rel (0) target = $region17
  $region16: #{dcgan_discriminator_forward.6} parent=0 // pred_region
    _
  $region17: #{dcgan_discriminator_forward.6} parent=0 // pred_fallthru
    _
  // Predicated region
  $region18: #{dcgan_discriminator_forward.6} parent=0 // pred_check
    _
  $region19: #{dcgan_discriminator_forward.6} parent=0 // pred_check_branch
    %19 = sbr.rel (0) target = $region21
  $region20: #{dcgan_discriminator_forward.6} parent=0 // pred_region
    _
  $region21: #{dcgan_discriminator_forward.6} parent=0 // pred_fallthru
    _
  %v20 = vld [vmem:[%s0] sm:$0xff]
  %v21 = vld [vmem:[%s0 + $0x8] sm:$0xff]
  %v22 = vld [vmem:[%s1] sm:$0xff]
  %v23 = vld [vmem:[%s1 + $0x8] sm:$0xff]
  %v24 = vld [vmem:[%s1 + $0x10] sm:$0xff]
  %v25 = vld [vmem:[%s1 + $0x18] sm:$0xff]
  %v26 = vld [vmem:[%s1 + $0x20] sm:$0xff]
  %v27 = vld [vmem:[%s1 + $0x28] sm:$0xff]
  %v28 = vld [vmem:[%s1 + $0x30] sm:$0xff]
  %v29 = vld [vmem:[%s1 + $0x38] sm:$0xff]
  %v30 = vld [vmem:[%s1 + $0x40] sm:$0xff]
  %v31 = vld [vmem:[%s1 + $0x48] sm:$0xff]
  %v32 = vld [vmem:[%s1 + $0x50] sm:$0xff]
  %v33 = vld [vmem:[%s1 + $0x58] sm:$0xff]
  %v34 = vld [vmem:[%s1 + $0x60] sm:$0xff]
  %v35 = vld [vmem:[%s1 + $0x68] sm:$0xff]
  %v36 = vld [vmem:[%s1 + $0x70] sm:$0xff]
  %v37 = vld [vmem:[%s1 + $0x78] sm:$0xff]
  %v38 = vld [vmem:[%s1 + $0x80] sm:$0xff]
  %v39 = vld [vmem:[%s1 + $0x88] sm:$0xff]
  %v40 = vld [vmem:[%s1 + $0x90] sm:$0xff]
  %v41 = vld [vmem:[%s1 + $0x98] sm:$0xff]
  %v42 = vld [vmem:[%s1 + $0xa0] sm:$0xff]
  %v43 = vld [vmem:[%s1 + $0xa8] sm:$0xff]
  %v44 = vld [vmem:[%s1 + $0xb0] sm:$0xff]
  %v45 = vld [vmem:[%s1 + $0xb8] sm:$0xff]
  %v46 = vld [vmem:[%s1 + $0xc0] sm:$0xff]
  %v47 = vld [vmem:[%s1 + $0xc8] sm:$0xff]
  %v48 = vld [vmem:[%s1 + $0xd0] sm:$0xff]
  %v49 = vld [vmem:[%s1 + $0xd8] sm:$0xff]
  %v50 = vld [vmem:[%s1 + $0xe0] sm:$0xff]
  %v51 = vld [vmem:[%s1 + $0xe8] sm:$0xff]
  %v52 = vld [vmem:[%s1 + $0xf0] sm:$0xff]
  %v53 = vld [vmem:[%s1 + $0xf8] sm:$0xff]
  %v54 = vld [vmem:[%s1 + $0x100] sm:$0xff]
  %v55 = vld [vmem:[%s1 + $0x108] sm:$0xff]
  %v56 = vld [vmem:[%s1 + $0x110] sm:$0xff]
  %v57 = vld [vmem:[%s1 + $0x118] sm:$0xff]
  %v58 = vld [vmem:[%s1 + $0x120] sm:$0xff]
  %v59 = vld [vmem:[%s1 + $0x128] sm:$0xff]
  %v60 = vld [vmem:[%s1 + $0x130] sm:$0xff]
  %v61 = vld [vmem:[%s1 + $0x138] sm:$0xff]
  %v62 = vld [vmem:[%s1 + $0x140] sm:$0xff]
  %v63 = vld [vmem:[%s1 + $0x148] sm:$0xff]
  %v64 = vld [vmem:[%s1 + $0x150] sm:$0xff]
  %v65 = vld [vmem:[%s1 + $0x158] sm:$0xff]
  %v66 = vld [vmem:[%s1 + $0x160] sm:$0xff]
  %v67 = vld [vmem:[%s1 + $0x168] sm:$0xff]
  %v68 = vld [vmem:[%s1 + $0x170] sm:$0xff]
  %v69 = vld [vmem:[%s1 + $0x178] sm:$0xff]
  %v70 = vld [vmem:[%s1 + $0x180] sm:$0xff]
  %v71 = vld [vmem:[%s1 + $0x188] sm:$0xff]
  %v72 = vld [vmem:[%s1 + $0x190] sm:$0xff]
  %v73 = vld [vmem:[%s1 + $0x198] sm:$0xff]
  %v74 = vld [vmem:[%s1 + $0x1a0] sm:$0xff]
  %v75 = vld [vmem:[%s1 + $0x1a8] sm:$0xff]
  %v76 = vld [vmem:[%s1 + $0x1b0] sm:$0xff]
  %v77 = vld [vmem:[%s1 + $0x1b8] sm:$0xff]
  %v78 = vld [vmem:[%s1 + $0x1c0] sm:$0xff]
  %v79 = vld [vmem:[%s1 + $0x1c8] sm:$0xff]
  %v80 = vld [vmem:[%s1 + $0x1d0] sm:$0xff]
  %v81 = vld [vmem:[%s1 + $0x1d8] sm:$0xff]
  %v82 = vld [vmem:[%s1 + $0x1e0] sm:$0xff]
  %v83 = vld [vmem:[%s1 + $0x1e8] sm:$0xff]
  %v84 = vld [vmem:[%s1 + $0x1f0] sm:$0xff]
  %v85 = vld [vmem:[%s1 + $0x1f8] sm:$0xff]
  %v86 = vld [vmem:[%s2] sm:$0xff]
  %v87 = vld [vmem:[%s2 + $0x8] sm:$0xff]
  %89 = vset.pattern.permute.xlu0 0
  %90 = vperm.xlu0 %89, %v86
  %v91 = vpop.permute.xlu0 %90
  %94 = vset.pattern.permute.xlu0 0
  %95 = vperm.xlu0 %94, %v87
  %v96 = vpop.permute.xlu0 %95
  %98 = vmatprep.subr.mxu0 %v23
  %99 = vmatpush1.msra.mxu0 %v22
  %100 = vmatprep.subr.mxu0 %v27
  %101 = vmatpush1.msra.mxu0 %v26
  %102 = vmatprep.subr.mxu0 %v31
  %103 = vmatpush1.msra.mxu0 %v30
  %104 = vmatprep.subr.mxu0 %v35
  %105 = vmatpush1.msra.mxu0 %v34
  %106 = vmatprep.subr.mxu0 %v39
  %107 = vmatpush1.msra.mxu0 %v38
  %108 = vmatprep.subr.mxu0 %v43
  %109 = vmatpush1.msra.mxu0 %v42
  %110 = vmatprep.subr.mxu0 %v47
  %111 = vmatpush1.msra.mxu0 %v46
  %112 = vmatprep.subr.mxu0 %v51
  %113 = vmatpush1.msra.mxu0 %v50
  %114 = vmatprep.subr.mxu0 %v55
  %115 = vmatpush1.msra.mxu0 %v54
  %116 = vmatprep.subr.mxu0 %v59
  %117 = vmatpush1.msra.mxu0 %v58
  %118 = vmatprep.subr.mxu0 %v63
  %119 = vmatpush1.msra.mxu0 %v62
  %120 = vmatprep.subr.mxu0 %v67
  %121 = vmatpush1.msra.mxu0 %v66
  %122 = vmatprep.subr.mxu0 %v71
  %123 = vmatpush1.msra.mxu0 %v70
  %124 = vmatprep.subr.mxu0 %v75
  %125 = vmatpush1.msra.mxu0 %v74
  %126 = vmatprep.subr.mxu0 %v79
  %127 = vmatpush1.msra.mxu0 %v78
  %128 = vmatprep.subr.mxu0 %v83
  %129 = vmatpush1.msra.mxu0 %v82
  %130 = vmatprep.subr.mxu0 0.0
  %131 = vmatpush1.msra.mxu0 0.0
  %132 = vmatprep.subr.mxu0 0.0
  %133 = vmatpush1.msra.mxu0 0.0
  %134 = vmatprep.subr.mxu0 0.0
  %135 = vmatpush1.msra.mxu0 0.0
  %136 = vmatprep.subr.mxu0 0.0
  %137 = vmatpush1.msra.mxu0 0.0
  %138 = vmatprep.subr.mxu0 0.0
  %139 = vmatpush1.msra.mxu0 0.0
  %140 = vmatprep.subr.mxu0 0.0
  %141 = vmatpush1.msra.mxu0 0.0
  %142 = vmatprep.subr.mxu0 0.0
  %143 = vmatpush1.msra.mxu0 0.0
  %144 = vmatprep.subr.mxu0 0.0
  %145 = vmatpush1.msra.mxu0 0.0
  %146 = vmatprep.subr.mxu0 0.0
  %147 = vmatpush1.msra.mxu0 0.0
  %148 = vmatprep.subr.mxu0 0.0
  %149 = vmatpush1.msra.mxu0 0.0
  %150 = vmatprep.subr.mxu0 0.0
  %151 = vmatpush1.msra.mxu0 0.0
  %152 = vmatprep.subr.mxu0 0.0
  %153 = vmatpush1.msra.mxu0 0.0
  %154 = vmatprep.subr.mxu0 0.0
  %155 = vmatpush1.msra.mxu0 0.0
  %156 = vmatprep.subr.mxu0 0.0
  %157 = vmatpush1.msra.mxu0 0.0
  %158 = vmatprep.subr.mxu0 0.0
  %159 = vmatpush1.msra.mxu0 0.0
  %160 = vmatprep.subr.mxu0 0.0
  %161 = vmatpush1.msra.mxu0 0.0
  %162 = vmatprep.mubr.f32.mxu0 0.0
  %163 = vmatmul.mubr.f32.gmra.mrb[0].mxu0 %v20
  %v164 = vpop.f32.mrb[0].mxu0
  %v165 = vadd.f32 %v91, %v164
  %v166 = vpop.f32.mrb[0].mxu0
  %v167 = vadd.f32 %v91, %v166
  %168 = vmatprep.mubr.f32.mxu0 0.0
  %169 = vmatmul.mubr.f32.gmra.mrb[0].mxu0 %v21
  %v170 = vpop.f32.mrb[0].mxu0
  %v171 = vadd.f32 %v96, %v170
  %v172 = vpop.f32.mrb[0].mxu0
  %v173 = vadd.f32 %v96, %v172
  %174 = vdwg.mxu0
  %175 = vmatprep.subr.mxu0 %v25
  %176 = vmatpush1.msra.mxu0 %v24
  %177 = vmatprep.subr.mxu0 %v29
  %178 = vmatpush1.msra.mxu0 %v28
  %179 = vmatprep.subr.mxu0 %v33
  %180 = vmatpush1.msra.mxu0 %v32
  %181 = vmatprep.subr.mxu0 %v37
  %182 = vmatpush1.msra.mxu0 %v36
  %183 = vmatprep.subr.mxu0 %v41
  %184 = vmatpush1.msra.mxu0 %v40
  %185 = vmatprep.subr.mxu0 %v45
  %186 = vmatpush1.msra.mxu0 %v44
  %187 = vmatprep.subr.mxu0 %v49
  %188 = vmatpush1.msra.mxu0 %v48
  %189 = vmatprep.subr.mxu0 %v53
  %190 = vmatpush1.msra.mxu0 %v52
  %191 = vmatprep.subr.mxu0 %v57
  %192 = vmatpush1.msra.mxu0 %v56
  %193 = vmatprep.subr.mxu0 %v61
  %194 = vmatpush1.msra.mxu0 %v60
  %195 = vmatprep.subr.mxu0 %v65
  %196 = vmatpush1.msra.mxu0 %v64
  %197 = vmatprep.subr.mxu0 %v69
  %198 = vmatpush1.msra.mxu0 %v68
  %199 = vmatprep.subr.mxu0 %v73
  %200 = vmatpush1.msra.mxu0 %v72
  %201 = vmatprep.subr.mxu0 %v77
  %202 = vmatpush1.msra.mxu0 %v76
  %203 = vmatprep.subr.mxu0 %v81
  %204 = vmatpush1.msra.mxu0 %v80
  %205 = vmatprep.subr.mxu0 %v85
  %206 = vmatpush1.msra.mxu0 %v84
  %207 = vmatprep.subr.mxu0 0.0
  %208 = vmatpush1.msra.mxu0 0.0
  %209 = vmatprep.subr.mxu0 0.0
  %210 = vmatpush1.msra.mxu0 0.0
  %211 = vmatprep.subr.mxu0 0.0
  %212 = vmatpush1.msra.mxu0 0.0
  %213 = vmatprep.subr.mxu0 0.0
  %214 = vmatpush1.msra.mxu0 0.0
  %215 = vmatprep.subr.mxu0 0.0
  %216 = vmatpush1.msra.mxu0 0.0
  %217 = vmatprep.subr.mxu0 0.0
  %218 = vmatpush1.msra.mxu0 0.0
  %219 = vmatprep.subr.mxu0 0.0
  %220 = vmatpush1.msra.mxu0 0.0
  %221 = vmatprep.subr.mxu0 0.0
  %222 = vmatpush1.msra.mxu0 0.0
  %223 = vmatprep.subr.mxu0 0.0
  %224 = vmatpush1.msra.mxu0 0.0
  %225 = vmatprep.subr.mxu0 0.0
  %226 = vmatpush1.msra.mxu0 0.0
  %227 = vmatprep.subr.mxu0 0.0
  %228 = vmatpush1.msra.mxu0 0.0
  %229 = vmatprep.subr.mxu0 0.0
  %230 = vmatpush1.msra.mxu0 0.0
  %231 = vmatprep.subr.mxu0 0.0
  %232 = vmatpush1.msra.mxu0 0.0
  %233 = vmatprep.subr.mxu0 0.0
  %234 = vmatpush1.msra.mxu0 0.0
  %235 = vmatprep.subr.mxu0 0.0
  %236 = vmatpush1.msra.mxu0 0.0
  %237 = vmatprep.subr.mxu0 0.0
  %238 = vmatpush1.msra.mxu0 0.0
  %239 = vmatprep.mubr.f32.mxu0 0.0
  %240 = vmatmul.mubr.f32.gmra.mrb[0].mxu0 %v20
  %v241 = vpop.f32.mrb[0].mxu0
  %v242 = vadd.f32 %v91, %v241
  %v243 = vpop.f32.mrb[0].mxu0
  %v244 = vadd.f32 %v91, %v243
  %245 = vmatprep.mubr.f32.mxu0 0.0
  %246 = vmatmul.mubr.f32.gmra.mrb[0].mxu0 %v21
  %v247 = vpop.f32.mrb[0].mxu0
  %v248 = vadd.f32 %v96, %v247
  %v249 = vpop.f32.mrb[0].mxu0
  %v250 = vadd.f32 %v96, %v249
  %251 = vdwg.mxu0
  %v252 = vadd.f32 %v165, %v167
  %v253 = vadd.f32 %v252, %v242
  %v254 = vadd.f32 %v253, %v244
  %255 = vadd.xlane.f32.xlu0 %v254
  %v256 = vpop.xlane.xlu0 %255
  %v257 = vadd.f32 %v171, %v173
  %v258 = vadd.f32 %v257, %v248
  %v259 = vadd.f32 %v258, %v250
  %260 = vadd.xlane.f32.xlu0 %v259
  %v261 = vpop.xlane.xlu0 %260
  %v262 = vrcp.pop 512.0
  %v263 = vmul.f32 %v256, %v262
  %v264 = vmul.f32 %v261, %v262
  %v265 = vsub.f32 %v165, %v263
  %v266 = vsub.f32 %v167, %v263
  %v267 = vsub.f32 %v242, %v263
  %v268 = vsub.f32 %v244, %v263
  %v269 = vsub.f32 %v171, %v264
  %v270 = vsub.f32 %v173, %v264
  %v271 = vsub.f32 %v248, %v264
  %v272 = vsub.f32 %v250, %v264
  %v273 = vmul.f32 %v265, %v265
  %v274 = vmul.f32 %v266, %v266
  %v275 = vmul.f32 %v267, %v267
  %v276 = vmul.f32 %v268, %v268
  %v277 = vmul.f32 %v269, %v269
  %v278 = vmul.f32 %v270, %v270
  %v279 = vmul.f32 %v271, %v271
  %v280 = vmul.f32 %v272, %v272
  %v281 = vadd.f32 %v273, %v274
  %v282 = vadd.f32 %v281, %v275
  %v283 = vadd.f32 %v282, %v276
  %284 = vadd.xlane.f32.xlu0 %v283
  %v285 = vpop.xlane.xlu0 %284
  %v286 = vadd.f32 %v277, %v278
  %v287 = vadd.f32 %v286, %v279
  %v288 = vadd.f32 %v287, %v280
  %289 = vadd.xlane.f32.xlu0 %v288
  %v290 = vpop.xlane.xlu0 %289
  %v291 = vmul.f32 %v285, %v262
  %v292 = vmul.f32 %v290, %v262
  %v293 = vld [vmem:[%s3] sm:$0xff]
  %v294 = vld [vmem:[%s3 + $0x8] sm:$0xff]
  %v295 = vadd.f32 %v291, 1e-05
  %v296 = vadd.f32 %v292, 1e-05
  %v297 = vrsqrt.pop %v295
  %v298 = vrsqrt.pop %v296
  %v299 = vmul.f32 %v293, %v297
  %v300 = vmul.f32 %v294, %v298
  %302 = vset.pattern.permute.xlu0 0
  %303 = vperm.xlu0 %302, %v299
  %v304 = vpop.permute.xlu0 %303
  %307 = vset.pattern.permute.xlu0 0
  %308 = vperm.xlu0 %307, %v300
  %v309 = vpop.permute.xlu0 %308
  %v311 = vmul.f32 %v265, %v304
  %v312 = vmul.f32 %v266, %v304
  %v313 = vmul.f32 %v267, %v304
  %v314 = vmul.f32 %v268, %v304
  %v315 = vmul.f32 %v269, %v309
  %v316 = vmul.f32 %v270, %v309
  %v317 = vmul.f32 %v271, %v309
  %v318 = vmul.f32 %v272, %v309
  %v319 = vld [vmem:[%s4] sm:$0xff]
  %v320 = vld [vmem:[%s4 + $0x8] sm:$0xff]
  %322 = vset.pattern.permute.xlu0 0
  %323 = vperm.xlu0 %322, %v319
  %v324 = vpop.permute.xlu0 %323
  %327 = vset.pattern.permute.xlu0 0
  %328 = vperm.xlu0 %327, %v320
  %v329 = vpop.permute.xlu0 %328
  %v331 = vadd.f32 %v311, %v324
  %v332 = vadd.f32 %v312, %v324
  %v333 = vadd.f32 %v313, %v324
  %v334 = vadd.f32 %v314, %v324
  %v335 = vadd.f32 %v315, %v329
  %v336 = vadd.f32 %v316, %v329
  %v337 = vadd.f32 %v317, %v329
  %v338 = vadd.f32 %v318, %v329
  %vm339 = vcmp.ge.f32.partialorder %v331, 0.0
  %vm340 = vcmp.ge.f32.partialorder %v332, 0.0
  %vm341 = vcmp.ge.f32.partialorder %v333, 0.0
  %vm342 = vcmp.ge.f32.partialorder %v334, 0.0
  %vm343 = vcmp.ge.f32.partialorder %v335, 0.0
  %vm344 = vcmp.ge.f32.partialorder %v336, 0.0
  %vm345 = vcmp.ge.f32.partialorder %v337, 0.0
  %vm346 = vcmp.ge.f32.partialorder %v338, 0.0
  %v347 = vmul.f32 %v331, 0.2
  %v348 = vmul.f32 %v332, 0.2
  %v349 = vmul.f32 %v333, 0.2
  %v350 = vmul.f32 %v334, 0.2
  %v351 = vmul.f32 %v335, 0.2
  %v352 = vmul.f32 %v336, 0.2
  %v353 = vmul.f32 %v337, 0.2
  %v354 = vmul.f32 %v338, 0.2
  %v355 = vsel %vm339, %v331, %v347
  %v356 = vsel %vm340, %v332, %v348
  %v357 = vsel %vm341, %v333, %v349
  %v358 = vsel %vm342, %v334, %v350
  %v359 = vsel %vm343, %v335, %v351
  %v360 = vsel %vm344, %v336, %v352
  %v361 = vsel %vm345, %v337, %v353
  %v362 = vsel %vm346, %v338, %v354
  %363 = vst [vmem:[%s5] sm:$0xff] %v355
  %364 = vst [vmem:[%s5 + $0x8] sm:$0xff] %v356
  %365 = vst [vmem:[%s5 + $0x10] sm:$0xff] %v357
  %366 = vst [vmem:[%s5 + $0x18] sm:$0xff] %v358
  %367 = vst [vmem:[%s5 + $0x20] sm:$0xff] %v359
  %368 = vst [vmem:[%s5 + $0x28] sm:$0xff] %v360
  %369 = vst [vmem:[%s5 + $0x30] sm:$0xff] %v361
  %370 = vst [vmem:[%s5 + $0x38] sm:$0xff] %v362
  // Predicated region
  $region22: #{dcgan_discriminator_forward.6} parent=0 // pred_check
    _
  $region23: #{dcgan_discriminator_forward.6} parent=0 // pred_check_branch
    %372 = sbr.rel (0) target = $region25
  $region24: #{dcgan_discriminator_forward.6} parent=0 // pred_region
    _
  $region25: #{dcgan_discriminator_forward.6} parent=0 // pred_fallthru
    _
  // Predicated region
  $region26: #{dcgan_discriminator_forward.6} parent=0 // pred_check
    _
  $region27: #{dcgan_discriminator_forward.6} parent=0 // pred_check_branch
    %374 = sbr.rel (0) target = $region29
  $region28: #{dcgan_discriminator_forward.6} parent=0 // pred_region
    _
  $region29: #{dcgan_discriminator_forward.6} parent=0 // pred_fallthru
    _

// kernel: dcgan_discriminator_forward.7
$region0: #{dcgan_discriminator_forward.7}
  #allocation0 [shape = 'u32[]', space=smem, size = 0x4, offset = 0x4, fixed_abs, tag = 'smem constant byte address 0x4 - core index']
  #allocation1 [shape = 'u32[144,128]{1,0:T(1,128)}', space=vmem, size = 0x12000, scoped, tag = 'internal scratch']
  %s0 = inlined_call_operand.vmem [shape: f32[32,256], index: 0, kind: input, shape index: {}]
  %s1 = inlined_call_operand.vmem [shape: f32[256,128], index: 1, kind: input, shape index: {}]
  %s2 = inlined_call_operand.vmem [shape: f32[32,1], index: 2, kind: input, shape index: {}]
  %s3 = inlined_call_operand.vmem [shape: f32[32,1], index: 3, kind: input, shape index: {}]
  %s4 = inlined_call_operand.vmem [shape: f32[32,1], index: 4, kind: input, shape index: {}]
  %s5 = inlined_call_operand.vmem [shape: f32[32,128], index: 5, kind: output, shape index: {}]
  %s6 = sld [smem:[#allocation0]]
  $region30: #{dcgan_discriminator_forward.7} parent=0
    _
  %s8 = ssub.s32 1, %s6
  %s9 = scalar_select 0, %s8, %s6
  // Predicated region
  $region2: #{dcgan_discriminator_forward.7} parent=0 // pred_check
    _
  $region3: #{dcgan_discriminator_forward.7} parent=0 // pred_check_branch
    %11 = sbr.rel (0) target = $region5
  $region4: #{dcgan_discriminator_forward.7} parent=0 // pred_region
    _
  $region5: #{dcgan_discriminator_forward.7} parent=0 // pred_fallthru
    _
  // Predicated region
  $region6: #{dcgan_discriminator_forward.7} parent=0 // pred_check
    _
  $region7: #{dcgan_discriminator_forward.7} parent=0 // pred_check_branch
    %13 = sbr.rel (0) target = $region9
  $region8: #{dcgan_discriminator_forward.7} parent=0 // pred_region
    _
  $region9: #{dcgan_discriminator_forward.7} parent=0 // pred_fallthru
    _
  // Predicated region
  $region10: #{dcgan_discriminator_forward.7} parent=0 // pred_check
    _
  $region11: #{dcgan_discriminator_forward.7} parent=0 // pred_check_branch
    %15 = sbr.rel (0) target = $region13
  $region12: #{dcgan_discriminator_forward.7} parent=0 // pred_region
    _
  $region13: #{dcgan_discriminator_forward.7} parent=0 // pred_fallthru
    _
  // Predicated region
  $region14: #{dcgan_discriminator_forward.7} parent=0 // pred_check
    _
  $region15: #{dcgan_discriminator_forward.7} parent=0 // pred_check_branch
    %17 = sbr.rel (0) target = $region17
  $region16: #{dcgan_discriminator_forward.7} parent=0 // pred_region
    _
  $region17: #{dcgan_discriminator_forward.7} parent=0 // pred_fallthru
    _
  // Predicated region
  $region18: #{dcgan_discriminator_forward.7} parent=0 // pred_check
    _
  $region19: #{dcgan_discriminator_forward.7} parent=0 // pred_check_branch
    %19 = sbr.rel (0) target = $region21
  $region20: #{dcgan_discriminator_forward.7} parent=0 // pred_region
    _
  $region21: #{dcgan_discriminator_forward.7} parent=0 // pred_fallthru
    _
  %v20 = vld [vmem:[%s0] sm:$0xff]
  %v21 = vld [vmem:[%s0 + $0x8] sm:$0xff]
  %v22 = vld [vmem:[%s0 + $0x10] sm:$0xff]
  %v23 = vld [vmem:[%s0 + $0x18] sm:$0xff]
  %v24 = vld [vmem:[%s0 + $0x20] sm:$0xff]
  %v25 = vld [vmem:[%s0 + $0x28] sm:$0xff]
  %v26 = vld [vmem:[%s0 + $0x30] sm:$0xff]
  %v27 = vld [vmem:[%s0 + $0x38] sm:$0xff]
  %v28 = vld [vmem:[%s1] sm:$0xff]
  %v29 = vld [vmem:[%s1 + $0x8] sm:$0xff]
  %v30 = vld [vmem:[%s1 + $0x10] sm:$0xff]
  %v31 = vld [vmem:[%s1 + $0x18] sm:$0xff]
  %v32 = vld [vmem:[%s1 + $0x20] sm:$0xff]
  %v33 = vld [vmem:[%s1 + $0x28] sm:$0xff]
  %v34 = vld [vmem:[%s1 + $0x30] sm:$0xff]
  %v35 = vld [vmem:[%s1 + $0x38] sm:$0xff]
  %v36 = vld [vmem:[%s1 + $0x40] sm:$0xff]
  %v37 = vld [vmem:[%s1 + $0x48] sm:$0xff]
  %v38 = vld [vmem:[%s1 + $0x50] sm:$0xff]
  %v39 = vld [vmem:[%s1 + $0x58] sm:$0xff]
  %v40 = vld [vmem:[%s1 + $0x60] sm:$0xff]
  %v41 = vld [vmem:[%s1 + $0x68] sm:$0xff]
  %v42 = vld [vmem:[%s1 + $0x70] sm:$0xff]
  %v43 = vld [vmem:[%s1 + $0x78] sm:$0xff]
  %v44 = vld [vmem:[%s1 + $0x80] sm:$0xff]
  %v45 = vld [vmem:[%s1 + $0x88] sm:$0xff]
  %v46 = vld [vmem:[%s1 + $0x90] sm:$0xff]
  %v47 = vld [vmem:[%s1 + $0x98] sm:$0xff]
  %v48 = vld [vmem:[%s1 + $0xa0] sm:$0xff]
  %v49 = vld [vmem:[%s1 + $0xa8] sm:$0xff]
  %v50 = vld [vmem:[%s1 + $0xb0] sm:$0xff]
  %v51 = vld [vmem:[%s1 + $0xb8] sm:$0xff]
  %v52 = vld [vmem:[%s1 + $0xc0] sm:$0xff]
  %v53 = vld [vmem:[%s1 + $0xc8] sm:$0xff]
  %v54 = vld [vmem:[%s1 + $0xd0] sm:$0xff]
  %v55 = vld [vmem:[%s1 + $0xd8] sm:$0xff]
  %v56 = vld [vmem:[%s1 + $0xe0] sm:$0xff]
  %v57 = vld [vmem:[%s1 + $0xe8] sm:$0xff]
  %v58 = vld [vmem:[%s1 + $0xf0] sm:$0xff]
  %v59 = vld [vmem:[%s1 + $0xf8] sm:$0xff]
  %v60 = vld [vmem:[%s2] sm:$0xff]
  %v61 = vld [vmem:[%s2 + $0x8] sm:$0xff]
  %v62 = vld [vmem:[%s2 + $0x10] sm:$0xff]
  %v63 = vld [vmem:[%s2 + $0x18] sm:$0xff]
  %65 = vset.pattern.permute.xlu0 0
  %66 = vperm.xlu0 %65, %v60
  %v67 = vpop.permute.xlu0 %66
  %70 = vset.pattern.permute.xlu0 0
  %71 = vperm.xlu0 %70, %v61
  %v72 = vpop.permute.xlu0 %71
  %75 = vset.pattern.permute.xlu0 0
  %76 = vperm.xlu0 %75, %v62
  %v77 = vpop.permute.xlu0 %76
  %80 = vset.pattern.permute.xlu0 0
  %81 = vperm.xlu0 %80, %v63
  %v82 = vpop.permute.xlu0 %81
  %84 = vmatprep.subr.mxu0 0.0
  %85 = vmatpush1.msra.mxu0 %v28
  %86 = vmatprep.subr.mxu0 0.0
  %87 = vmatpush1.msra.mxu0 %v29
  %88 = vmatprep.subr.mxu0 0.0
  %89 = vmatpush1.msra.mxu0 %v30
  %90 = vmatprep.subr.mxu0 0.0
  %91 = vmatpush1.msra.mxu0 %v31
  %92 = vmatprep.subr.mxu0 0.0
  %93 = vmatpush1.msra.mxu0 %v32
  %94 = vmatprep.subr.mxu0 0.0
  %95 = vmatpush1.msra.mxu0 %v33
  %96 = vmatprep.subr.mxu0 0.0
  %97 = vmatpush1.msra.mxu0 %v34
  %98 = vmatprep.subr.mxu0 0.0
  %99 = vmatpush1.msra.mxu0 %v35
  %100 = vmatprep.subr.mxu0 0.0
  %101 = vmatpush1.msra.mxu0 %v36
  %102 = vmatprep.subr.mxu0 0.0
  %103 = vmatpush1.msra.mxu0 %v37
  %104 = vmatprep.subr.mxu0 0.0
  %105 = vmatpush1.msra.mxu0 %v38
  %106 = vmatprep.subr.mxu0 0.0
  %107 = vmatpush1.msra.mxu0 %v39
  %108 = vmatprep.subr.mxu0 0.0
  %109 = vmatpush1.msra.mxu0 %v40
  %110 = vmatprep.subr.mxu0 0.0
  %111 = vmatpush1.msra.mxu0 %v41
  %112 = vmatprep.subr.mxu0 0.0
  %113 = vmatpush1.msra.mxu0 %v42
  %114 = vmatprep.subr.mxu0 0.0
  %115 = vmatpush1.msra.mxu0 %v43
  %116 = vmatprep.subr.mxu0 0.0
  %117 = vmatpush1.msra.mxu0 %v44
  %118 = vmatprep.subr.mxu0 0.0
  %119 = vmatpush1.msra.mxu0 %v45
  %120 = vmatprep.subr.mxu0 0.0
  %121 = vmatpush1.msra.mxu0 %v46
  %122 = vmatprep.subr.mxu0 0.0
  %123 = vmatpush1.msra.mxu0 %v47
  %124 = vmatprep.subr.mxu0 0.0
  %125 = vmatpush1.msra.mxu0 %v48
  %126 = vmatprep.subr.mxu0 0.0
  %127 = vmatpush1.msra.mxu0 %v49
  %128 = vmatprep.subr.mxu0 0.0
  %129 = vmatpush1.msra.mxu0 %v50
  %130 = vmatprep.subr.mxu0 0.0
  %131 = vmatpush1.msra.mxu0 %v51
  %132 = vmatprep.subr.mxu0 0.0
  %133 = vmatpush1.msra.mxu0 %v52
  %134 = vmatprep.subr.mxu0 0.0
  %135 = vmatpush1.msra.mxu0 %v53
  %136 = vmatprep.subr.mxu0 0.0
  %137 = vmatpush1.msra.mxu0 %v54
  %138 = vmatprep.subr.mxu0 0.0
  %139 = vmatpush1.msra.mxu0 %v55
  %140 = vmatprep.subr.mxu0 0.0
  %141 = vmatpush1.msra.mxu0 %v56
  %142 = vmatprep.subr.mxu0 0.0
  %143 = vmatpush1.msra.mxu0 %v57
  %144 = vmatprep.subr.mxu0 0.0
  %145 = vmatpush1.msra.mxu0 %v58
  %146 = vmatprep.subr.mxu0 0.0
  %147 = vmatpush1.msra.mxu0 %v59
  %148 = vmatprep.mubr.f32.mxu0 %v21
  %149 = vmatmul.mubr.f32.gmra.mrb[0].mxu0 %v20
  %v150 = vpop.f32.mrb[0].mxu0
  %v151 = vadd.f32 %v67, %v150
  %v152 = vpop.f32.mrb[0].mxu0
  %153 = vmatprep.mubr.f32.mxu0 %v23
  %154 = vmatmul.mubr.f32.gmra.mrb[0].mxu0 %v22
  %v155 = vpop.f32.mrb[0].mxu0
  %v156 = vadd.f32 %v72, %v155
  %v157 = vpop.f32.mrb[0].mxu0
  %158 = vmatprep.mubr.f32.mxu0 %v25
  %159 = vmatmul.mubr.f32.gmra.mrb[0].mxu0 %v24
  %v160 = vpop.f32.mrb[0].mxu0
  %v161 = vadd.f32 %v77, %v160
  %v162 = vpop.f32.mrb[0].mxu0
  %163 = vmatprep.mubr.f32.mxu0 %v27
  %164 = vmatmul.mubr.f32.gmra.mrb[0].mxu0 %v26
  %v165 = vpop.f32.mrb[0].mxu0
  %v166 = vadd.f32 %v82, %v165
  %v167 = vpop.f32.mrb[0].mxu0
  %168 = vdwg.mxu0
  %169 = vadd.xlane.f32.xlu0 %v151
  %v170 = vpop.xlane.xlu0 %169
  %171 = vadd.xlane.f32.xlu0 %v156
  %v172 = vpop.xlane.xlu0 %171
  %173 = vadd.xlane.f32.xlu0 %v161
  %v174 = vpop.xlane.xlu0 %173
  %175 = vadd.xlane.f32.xlu0 %v166
  %v176 = vpop.xlane.xlu0 %175
  %v177 = vrcp.pop 128.0
  %v178 = vmul.f32 %v170, %v177
  %v179 = vmul.f32 %v172, %v177
  %v180 = vmul.f32 %v174, %v177
  %v181 = vmul.f32 %v176, %v177
  %v182 = vsub.f32 %v151, %v178
  %v183 = vsub.f32 %v156, %v179
  %v184 = vsub.f32 %v161, %v180
  %v185 = vsub.f32 %v166, %v181
  %v186 = vmul.f32 %v182, %v182
  %v187 = vmul.f32 %v183, %v183
  %v188 = vmul.f32 %v184, %v184
  %v189 = vmul.f32 %v185, %v185
  %190 = vadd.xlane.f32.xlu0 %v186
  %v191 = vpop.xlane.xlu0 %190
  %192 = vadd.xlane.f32.xlu0 %v187
  %v193 = vpop.xlane.xlu0 %192
  %194 = vadd.xlane.f32.xlu0 %v188
  %v195 = vpop.xlane.xlu0 %194
  %196 = vadd.xlane.f32.xlu0 %v189
  %v197 = vpop.xlane.xlu0 %196
  %v198 = vmul.f32 %v191, %v177
  %v199 = vmul.f32 %v193, %v177
  %v200 = vmul.f32 %v195, %v177
  %v201 = vmul.f32 %v197, %v177
  %v202 = vld [vmem:[%s3] sm:$0xff]
  %v203 = vld [vmem:[%s3 + $0x8] sm:$0xff]
  %v204 = vld [vmem:[%s3 + $0x10] sm:$0xff]
  %v205 = vld [vmem:[%s3 + $0x18] sm:$0xff]
  %v206 = vadd.f32 %v198, 1e-05
  %v207 = vadd.f32 %v199, 1e-05
  %v208 = vadd.f32 %v200, 1e-05
  %v209 = vadd.f32 %v201, 1e-05
  %v210 = vrsqrt.pop %v206
  %v211 = vrsqrt.pop %v207
  %v212 = vrsqrt.pop %v208
  %v213 = vrsqrt.pop %v209
  %v214 = vmul.f32 %v202, %v210
  %v215 = vmul.f32 %v203, %v211
  %v216 = vmul.f32 %v204, %v212
  %v217 = vmul.f32 %v205, %v213
  %219 = vset.pattern.permute.xlu0 0
  %220 = vperm.xlu0 %219, %v214
  %v221 = vpop.permute.xlu0 %220
  %224 = vset.pattern.permute.xlu0 0
  %225 = vperm.xlu0 %224, %v215
  %v226 = vpop.permute.xlu0 %225
  %229 = vset.pattern.permute.xlu0 0
  %230 = vperm.xlu0 %229, %v216
  %v231 = vpop.permute.xlu0 %230
  %234 = vset.pattern.permute.xlu0 0
  %235 = vperm.xlu0 %234, %v217
  %v236 = vpop.permute.xlu0 %235
  %v238 = vmul.f32 %v182, %v221
  %v239 = vmul.f32 %v183, %v226
  %v240 = vmul.f32 %v184, %v231
  %v241 = vmul.f32 %v185, %v236
  %v242 = vld [vmem:[%s4] sm:$0xff]
  %v243 = vld [vmem:[%s4 + $0x8] sm:$0xff]
  %v244 = vld [vmem:[%s4 + $0x10] sm:$0xff]
  %v245 = vld [vmem:[%s4 + $0x18] sm:$0xff]
  %247 = vset.pattern.permute.xlu0 0
  %248 = vperm.xlu0 %247, %v242
  %v249 = vpop.permute.xlu0 %248
  %252 = vset.pattern.permute.xlu0 0
  %253 = vperm.xlu0 %252, %v243
  %v254 = vpop.permute.xlu0 %253
  %257 = vset.pattern.permute.xlu0 0
  %258 = vperm.xlu0 %257, %v244
  %v259 = vpop.permute.xlu0 %258
  %262 = vset.pattern.permute.xlu0 0
  %263 = vperm.xlu0 %262, %v245
  %v264 = vpop.permute.xlu0 %263
  %v266 = vadd.f32 %v238, %v249
  %v267 = vadd.f32 %v239, %v254
  %v268 = vadd.f32 %v240, %v259
  %v269 = vadd.f32 %v241, %v264
  %vm270 = vcmp.ge.f32.partialorder %v266, 0.0
  %vm271 = vcmp.ge.f32.partialorder %v267, 0.0
  %vm272 = vcmp.ge.f32.partialorder %v268, 0.0
  %vm273 = vcmp.ge.f32.partialorder %v269, 0.0
  %v274 = vmul.f32 %v266, 0.2
  %v275 = vmul.f32 %v267, 0.2
  %v276 = vmul.f32 %v268, 0.2
  %v277 = vmul.f32 %v269, 0.2
  %v278 = vsel %vm270, %v266, %v274
  %v279 = vsel %vm271, %v267, %v275
  %v280 = vsel %vm272, %v268, %v276
  %v281 = vsel %vm273, %v269, %v277
  %282 = vst [vmem:[%s5] sm:$0xff] %v278
  %283 = vst [vmem:[%s5 + $0x8] sm:$0xff] %v279
  %284 = vst [vmem:[%s5 + $0x10] sm:$0xff] %v280
  %285 = vst [vmem:[%s5 + $0x18] sm:$0xff] %v281
  // Predicated region
  $region22: #{dcgan_discriminator_forward.7} parent=0 // pred_check
    _
  $region23: #{dcgan_discriminator_forward.7} parent=0 // pred_check_branch
    %287 = sbr.rel (0) target = $region25
  $region24: #{dcgan_discriminator_forward.7} parent=0 // pred_region
    _
  $region25: #{dcgan_discriminator_forward.7} parent=0 // pred_fallthru
    _
  // Predicated region
  $region26: #{dcgan_discriminator_forward.7} parent=0 // pred_check
    _
  $region27: #{dcgan_discriminator_forward.7} parent=0 // pred_check_branch
    %289 = sbr.rel (0) target = $region29
  $region28: #{dcgan_discriminator_forward.7} parent=0 // pred_region
    _
  $region29: #{dcgan_discriminator_forward.7} parent=0 // pred_fallthru
    _

// kernel: dcgan_discriminator_forward.8
$region0: #{dcgan_discriminator_forward.8}
  #allocation0 [shape = 'u32[]', space=smem, size = 0x4, offset = 0x4, fixed_abs, tag = 'smem constant byte address 0x4 - core index']
  #allocation1 [shape = 'u32[144,128]{1,0:T(1,128)}', space=vmem, size = 0x12000, scoped, tag = 'internal scratch']
  %s0 = inlined_call_operand.vmem [shape: f32[64,512], index: 0, kind: input, shape index: {}]
  %s1 = inlined_call_operand.vmem [shape: f32[512,32], index: 1, kind: input, shape index: {}]
  %s2 = inlined_call_operand.vmem [shape: f32[64,1], index: 2, kind: input, shape index: {}]
  %s3 = inlined_call_operand.vmem [shape: f32[64,1], index: 3, kind: input, shape index: {}]
  %s4 = inlined_call_operand.vmem [shape: f32[64,1], index: 4, kind: input, shape index: {}]
  %s5 = inlined_call_operand.vmem [shape: f32[64,32], index: 5, kind: output, shape index: {}]
  %s6 = sld [smem:[#allocation0]]
  $region30: #{dcgan_discriminator_forward.8} parent=0
    _
  %s8 = ssub.s32 1, %s6
  %s9 = scalar_select 0, %s8, %s6
  // Predicated region
  $region2: #{dcgan_discriminator_forward.8} parent=0 // pred_check
    _
  $region3: #{dcgan_discriminator_forward.8} parent=0 // pred_check_branch
    %11 = sbr.rel (0) target = $region5
  $region4: #{dcgan_discriminator_forward.8} parent=0 // pred_region
    _
  $region5: #{dcgan_discriminator_forward.8} parent=0 // pred_fallthru
    _
  // Predicated region
  $region6: #{dcgan_discriminator_forward.8} parent=0 // pred_check
    _
  $region7: #{dcgan_discriminator_forward.8} parent=0 // pred_check_branch
    %13 = sbr.rel (0) target = $region9
  $region8: #{dcgan_discriminator_forward.8} parent=0 // pred_region
    _
  $region9: #{dcgan_discriminator_forward.8} parent=0 // pred_fallthru
    _
  // Predicated region
  $region10: #{dcgan_discriminator_forward.8} parent=0 // pred_check
    _
  $region11: #{dcgan_discriminator_forward.8} parent=0 // pred_check_branch
    %15 = sbr.rel (0) target = $region13
  $region12: #{dcgan_discriminator_forward.8} parent=0 // pred_region
    _
  $region13: #{dcgan_discriminator_forward.8} parent=0 // pred_fallthru
    _
  // Predicated region
  $region14: #{dcgan_discriminator_forward.8} parent=0 // pred_check
    _
  $region15: #{dcgan_discriminator_forward.8} parent=0 // pred_check_branch
    %17 = sbr.rel (0) target = $region17
  $region16: #{dcgan_discriminator_forward.8} parent=0 // pred_region
    _
  $region17: #{dcgan_discriminator_forward.8} parent=0 // pred_fallthru
    _
  // Predicated region
  $region18: #{dcgan_discriminator_forward.8} parent=0 // pred_check
    _
  $region19: #{dcgan_discriminator_forward.8} parent=0 // pred_check_branch
    %19 = sbr.rel (0) target = $region21
  $region20: #{dcgan_discriminator_forward.8} parent=0 // pred_region
    _
  $region21: #{dcgan_discriminator_forward.8} parent=0 // pred_fallthru
    _
  %v20 = vld [vmem:[%s0] sm:$0xff]
  %v21 = vld [vmem:[%s0 + $0x8] sm:$0xff]
  %v22 = vld [vmem:[%s0 + $0x10] sm:$0xff]
  %v23 = vld [vmem:[%s0 + $0x18] sm:$0xff]
  %v24 = vld [vmem:[%s0 + $0x20] sm:$0xff]
  %v25 = vld [vmem:[%s0 + $0x28] sm:$0xff]
  %v26 = vld [vmem:[%s0 + $0x30] sm:$0xff]
  %v27 = vld [vmem:[%s0 + $0x38] sm:$0xff]
  %v28 = vld [vmem:[%s0 + $0x40] sm:$0xff]
  %v29 = vld [vmem:[%s0 + $0x48] sm:$0xff]
  %v30 = vld [vmem:[%s0 + $0x50] sm:$0xff]
  %v31 = vld [vmem:[%s0 + $0x58] sm:$0xff]
  %v32 = vld [vmem:[%s0 + $0x60] sm:$0xff]
  %v33 = vld [vmem:[%s0 + $0x68] sm:$0xff]
  %v34 = vld [vmem:[%s0 + $0x70] sm:$0xff]
  %v35 = vld [vmem:[%s0 + $0x78] sm:$0xff]
  %v36 = vld [vmem:[%s0 + $0x80] sm:$0xff]
  %v37 = vld [vmem:[%s0 + $0x88] sm:$0xff]
  %v38 = vld [vmem:[%s0 + $0x90] sm:$0xff]
  %v39 = vld [vmem:[%s0 + $0x98] sm:$0xff]
  %v40 = vld [vmem:[%s0 + $0xa0] sm:$0xff]
  %v41 = vld [vmem:[%s0 + $0xa8] sm:$0xff]
  %v42 = vld [vmem:[%s0 + $0xb0] sm:$0xff]
  %v43 = vld [vmem:[%s0 + $0xb8] sm:$0xff]
  %v44 = vld [vmem:[%s0 + $0xc0] sm:$0xff]
  %v45 = vld [vmem:[%s0 + $0xc8] sm:$0xff]
  %v46 = vld [vmem:[%s0 + $0xd0] sm:$0xff]
  %v47 = vld [vmem:[%s0 + $0xd8] sm:$0xff]
  %v48 = vld [vmem:[%s0 + $0xe0] sm:$0xff]
  %v49 = vld [vmem:[%s0 + $0xe8] sm:$0xff]
  %v50 = vld [vmem:[%s0 + $0xf0] sm:$0xff]
  %v51 = vld [vmem:[%s0 + $0xf8] sm:$0xff]
  %v52 = vld [vmem:[%s1] sm:$0xff]
  %v53 = vld [vmem:[%s1 + $0x8] sm:$0xff]
  %v54 = vld [vmem:[%s1 + $0x10] sm:$0xff]
  %v55 = vld [vmem:[%s1 + $0x18] sm:$0xff]
  %v56 = vld [vmem:[%s1 + $0x20] sm:$0xff]
  %v57 = vld [vmem:[%s1 + $0x28] sm:$0xff]
  %v58 = vld [vmem:[%s1 + $0x30] sm:$0xff]
  %v59 = vld [vmem:[%s1 + $0x38] sm:$0xff]
  %v60 = vld [vmem:[%s1 + $0x40] sm:$0xff]
  %v61 = vld [vmem:[%s1 + $0x48] sm:$0xff]
  %v62 = vld [vmem:[%s1 + $0x50] sm:$0xff]
  %v63 = vld [vmem:[%s1 + $0x58] sm:$0xff]
  %v64 = vld [vmem:[%s1 + $0x60] sm:$0xff]
  %v65 = vld [vmem:[%s1 + $0x68] sm:$0xff]
  %v66 = vld [vmem:[%s1 + $0x70] sm:$0xff]
  %v67 = vld [vmem:[%s1 + $0x78] sm:$0xff]
  %v68 = vld [vmem:[%s1 + $0x80] sm:$0xff]
  %v69 = vld [vmem:[%s1 + $0x88] sm:$0xff]
  %v70 = vld [vmem:[%s1 + $0x90] sm:$0xff]
  %v71 = vld [vmem:[%s1 + $0x98] sm:$0xff]
  %v72 = vld [vmem:[%s1 + $0xa0] sm:$0xff]
  %v73 = vld [vmem:[%s1 + $0xa8] sm:$0xff]
  %v74 = vld [vmem:[%s1 + $0xb0] sm:$0xff]
  %v75 = vld [vmem:[%s1 + $0xb8] sm:$0xff]
  %v76 = vld [vmem:[%s1 + $0xc0] sm:$0xff]
  %v77 = vld [vmem:[%s1 + $0xc8] sm:$0xff]
  %v78 = vld [vmem:[%s1 + $0xd0] sm:$0xff]
  %v79 = vld [vmem:[%s1 + $0xd8] sm:$0xff]
  %v80 = vld [vmem:[%s1 + $0xe0] sm:$0xff]
  %v81 = vld [vmem:[%s1 + $0xe8] sm:$0xff]
  %v82 = vld [vmem:[%s1 + $0xf0] sm:$0xff]
  %v83 = vld [vmem:[%s1 + $0xf8] sm:$0xff]
  %v84 = vld [vmem:[%s1 + $0x100] sm:$0xff]
  %v85 = vld [vmem:[%s1 + $0x108] sm:$0xff]
  %v86 = vld [vmem:[%s1 + $0x110] sm:$0xff]
  %v87 = vld [vmem:[%s1 + $0x118] sm:$0xff]
  %v88 = vld [vmem:[%s1 + $0x120] sm:$0xff]
  %v89 = vld [vmem:[%s1 + $0x128] sm:$0xff]
  %v90 = vld [vmem:[%s1 + $0x130] sm:$0xff]
  %v91 = vld [vmem:[%s1 + $0x138] sm:$0xff]
  %v92 = vld [vmem:[%s1 + $0x140] sm:$0xff]
  %v93 = vld [vmem:[%s1 + $0x148] sm:$0xff]
  %v94 = vld [vmem:[%s1 + $0x150] sm:$0xff]
  %v95 = vld [vmem:[%s1 + $0x158] sm:$0xff]
  %v96 = vld [vmem:[%s1 + $0x160] sm:$0xff]
  %v97 = vld [vmem:[%s1 + $0x168] sm:$0xff]
  %v98 = vld [vmem:[%s1 + $0x170] sm:$0xff]
  %v99 = vld [vmem:[%s1 + $0x178] sm:$0xff]
  %v100 = vld [vmem:[%s1 + $0x180] sm:$0xff]
  %v101 = vld [vmem:[%s1 + $0x188] sm:$0xff]
  %v102 = vld [vmem:[%s1 + $0x190] sm:$0xff]
  %v103 = vld [vmem:[%s1 + $0x198] sm:$0xff]
  %v104 = vld [vmem:[%s1 + $0x1a0] sm:$0xff]
  %v105 = vld [vmem:[%s1 + $0x1a8] sm:$0xff]
  %v106 = vld [vmem:[%s1 + $0x1b0] sm:$0xff]
  %v107 = vld [vmem:[%s1 + $0x1b8] sm:$0xff]
  %v108 = vld [vmem:[%s1 + $0x1c0] sm:$0xff]
  %v109 = vld [vmem:[%s1 + $0x1c8] sm:$0xff]
  %v110 = vld [vmem:[%s1 + $0x1d0] sm:$0xff]
  %v111 = vld [vmem:[%s1 + $0x1d8] sm:$0xff]
  %v112 = vld [vmem:[%s1 + $0x1e0] sm:$0xff]
  %v113 = vld [vmem:[%s1 + $0x1e8] sm:$0xff]
  %v114 = vld [vmem:[%s1 + $0x1f0] sm:$0xff]
  %v115 = vld [vmem:[%s1 + $0x1f8] sm:$0xff]
  %v116 = vld [vmem:[%s2] sm:$0xff]
  %v117 = vld [vmem:[%s2 + $0x8] sm:$0xff]
  %v118 = vld [vmem:[%s2 + $0x10] sm:$0xff]
  %v119 = vld [vmem:[%s2 + $0x18] sm:$0xff]
  %v120 = vld [vmem:[%s2 + $0x20] sm:$0xff]
  %v121 = vld [vmem:[%s2 + $0x28] sm:$0xff]
  %v122 = vld [vmem:[%s2 + $0x30] sm:$0xff]
  %v123 = vld [vmem:[%s2 + $0x38] sm:$0xff]
  %125 = vset.pattern.permute.xlu0 0
  %126 = vperm.xlu0 %125, %v116
  %v127 = vpop.permute.xlu0 %126
  %130 = vset.pattern.permute.xlu0 0
  %131 = vperm.xlu0 %130, %v117
  %v132 = vpop.permute.xlu0 %131
  %135 = vset.pattern.permute.xlu0 0
  %136 = vperm.xlu0 %135, %v118
  %v137 = vpop.permute.xlu0 %136
  %140 = vset.pattern.permute.xlu0 0
  %141 = vperm.xlu0 %140, %v119
  %v142 = vpop.permute.xlu0 %141
  %145 = vset.pattern.permute.xlu0 0
  %146 = vperm.xlu0 %145, %v120
  %v147 = vpop.permute.xlu0 %146
  %150 = vset.pattern.permute.xlu0 0
  %151 = vperm.xlu0 %150, %v121
  %v152 = vpop.permute.xlu0 %151
  %155 = vset.pattern.permute.xlu0 0
  %156 = vperm.xlu0 %155, %v122
  %v157 = vpop.permute.xlu0 %156
  %160 = vset.pattern.permute.xlu0 0
  %161 = vperm.xlu0 %160, %v123
  %v162 = vpop.permute.xlu0 %161
  %164 = vmatprep.subr.mxu0 0.0
  %165 = vmatpush1.msra.mxu0 %v52
  %166 = vmatprep.subr.mxu0 0.0
  %167 = vmatpush1.msra.mxu0 %v53
  %168 = vmatprep.subr.mxu0 0.0
  %169 = vmatpush1.msra.mxu0 %v54
  %170 = vmatprep.subr.mxu0 0.0
  %171 = vmatpush1.msra.mxu0 %v55
  %172 = vmatprep.subr.mxu0 0.0
  %173 = vmatpush1.msra.mxu0 %v56
  %174 = vmatprep.subr.mxu0 0.0
  %175 = vmatpush1.msra.mxu0 %v57
  %176 = vmatprep.subr.mxu0 0.0
  %177 = vmatpush1.msra.mxu0 %v58
  %178 = vmatprep.subr.mxu0 0.0
  %179 = vmatpush1.msra.mxu0 %v59
  %180 = vmatprep.subr.mxu0 0.0
  %181 = vmatpush1.msra.mxu0 %v60
  %182 = vmatprep.subr.mxu0 0.0
  %183 = vmatpush1.msra.mxu0 %v61
  %184 = vmatprep.subr.mxu0 0.0
  %185 = vmatpush1.msra.mxu0 %v62
  %186 = vmatprep.subr.mxu0 0.0
  %187 = vmatpush1.msra.mxu0 %v63
  %188 = vmatprep.subr.mxu0 0.0
  %189 = vmatpush1.msra.mxu0 %v64
  %190 = vmatprep.subr.mxu0 0.0
  %191 = vmatpush1.msra.mxu0 %v65
  %192 = vmatprep.subr.mxu0 0.0
  %193 = vmatpush1.msra.mxu0 %v66
  %194 = vmatprep.subr.mxu0 0.0
  %195 = vmatpush1.msra.mxu0 %v67
  %196 = vmatprep.subr.mxu0 0.0
  %197 = vmatpush1.msra.mxu0 %v68
  %198 = vmatprep.subr.mxu0 0.0
  %199 = vmatpush1.msra.mxu0 %v69
  %200 = vmatprep.subr.mxu0 0.0
  %201 = vmatpush1.msra.mxu0 %v70
  %202 = vmatprep.subr.mxu0 0.0
  %203 = vmatpush1.msra.mxu0 %v71
  %204 = vmatprep.subr.mxu0 0.0
  %205 = vmatpush1.msra.mxu0 %v72
  %206 = vmatprep.subr.mxu0 0.0
  %207 = vmatpush1.msra.mxu0 %v73
  %208 = vmatprep.subr.mxu0 0.0
  %209 = vmatpush1.msra.mxu0 %v74
  %210 = vmatprep.subr.mxu0 0.0
  %211 = vmatpush1.msra.mxu0 %v75
  %212 = vmatprep.subr.mxu0 0.0
  %213 = vmatpush1.msra.mxu0 %v76
  %214 = vmatprep.subr.mxu0 0.0
  %215 = vmatpush1.msra.mxu0 %v77
  %216 = vmatprep.subr.mxu0 0.0
  %217 = vmatpush1.msra.mxu0 %v78
  %218 = vmatprep.subr.mxu0 0.0
  %219 = vmatpush1.msra.mxu0 %v79
  %220 = vmatprep.subr.mxu0 0.0
  %221 = vmatpush1.msra.mxu0 %v80
  %222 = vmatprep.subr.mxu0 0.0
  %223 = vmatpush1.msra.mxu0 %v81
  %224 = vmatprep.subr.mxu0 0.0
  %225 = vmatpush1.msra.mxu0 %v82
  %226 = vmatprep.subr.mxu0 0.0
  %227 = vmatpush1.msra.mxu0 %v83
  %228 = vmatprep.mubr.f32.mxu0 %v21
  %229 = vmatmul.mubr.f32.gmra.mrb[0].mxu0 %v20
  %v230 = vpop.f32.mrb[0].mxu0
  %v231 = vadd.f32 %v127, %v230
  %v232 = vpop.f32.mrb[0].mxu0
  %233 = vmatprep.mubr.f32.mxu0 %v25
  %234 = vmatmul.mubr.f32.gmra.mrb[0].mxu0 %v24
  %v235 = vpop.f32.mrb[0].mxu0
  %v236 = vadd.f32 %v132, %v235
  %v237 = vpop.f32.mrb[0].mxu0
  %238 = vmatprep.mubr.f32.mxu0 %v29
  %239 = vmatmul.mubr.f32.gmra.mrb[0].mxu0 %v28
  %v240 = vpop.f32.mrb[0].mxu0
  %v241 = vadd.f32 %v137, %v240
  %v242 = vpop.f32.mrb[0].mxu0
  %243 = vmatprep.mubr.f32.mxu0 %v33
  %244 = vmatmul.mubr.f32.gmra.mrb[0].mxu0 %v32
  %v245 = vpop.f32.mrb[0].mxu0
  %v246 = vadd.f32 %v142, %v245
  %v247 = vpop.f32.mrb[0].mxu0
  %248 = vmatprep.mubr.f32.mxu0 %v37
  %249 = vmatmul.mubr.f32.gmra.mrb[0].mxu0 %v36
  %v250 = vpop.f32.mrb[0].mxu0
  %v251 = vadd.f32 %v147, %v250
  %v252 = vpop.f32.mrb[0].mxu0
  %253 = vmatprep.mubr.f32.mxu0 %v41
  %254 = vmatmul.mubr.f32.gmra.mrb[0].mxu0 %v40
  %v255 = vpop.f32.mrb[0].mxu0
  %v256 = vadd.f32 %v152, %v255
  %v257 = vpop.f32.mrb[0].mxu0
  %258 = vmatprep.mubr.f32.mxu0 %v45
  %259 = vmatmul.mubr.f32.gmra.mrb[0].mxu0 %v44
  %v260 = vpop.f32.mrb[0].mxu0
  %v261 = vadd.f32 %v157, %v260
  %v262 = vpop.f32.mrb[0].mxu0
  %263 = vmatprep.mubr.f32.mxu0 %v49
  %264 = vmatmul.mubr.f32.gmra.mrb[0].mxu0 %v48
  %v265 = vpop.f32.mrb[0].mxu0
  %v266 = vadd.f32 %v162, %v265
  %v267 = vpop.f32.mrb[0].mxu0
  %268 = vdwg.mxu0
  %269 = vmatprep.subr.mxu0 0.0
  %270 = vmatpush1.msra.mxu0 %v84
  %271 = vmatprep.subr.mxu0 0.0
  %272 = vmatpush1.msra.mxu0 %v85
  %273 = vmatprep.subr.mxu0 0.0
  %274 = vmatpush1.msra.mxu0 %v86
  %275 = vmatprep.subr.mxu0 0.0
  %276 = vmatpush1.msra.mxu0 %v87
  %277 = vmatprep.subr.mxu0 0.0
  %278 = vmatpush1.msra.mxu0 %v88
  %279 = vmatprep.subr.mxu0 0.0
  %280 = vmatpush1.msra.mxu0 %v89
  %281 = vmatprep.subr.mxu0 0.0
  %282 = vmatpush1.msra.mxu0 %v90
  %283 = vmatprep.subr.mxu0 0.0
  %284 = vmatpush1.msra.mxu0 %v91
  %285 = vmatprep.subr.mxu0 0.0
  %286 = vmatpush1.msra.mxu0 %v92
  %287 = vmatprep.subr.mxu0 0.0
  %288 = vmatpush1.msra.mxu0 %v93
  %289 = vmatprep.subr.mxu0 0.0
  %290 = vmatpush1.msra.mxu0 %v94
  %291 = vmatprep.subr.mxu0 0.0
  %292 = vmatpush1.msra.mxu0 %v95
  %293 = vmatprep.subr.mxu0 0.0
  %294 = vmatpush1.msra.mxu0 %v96
  %295 = vmatprep.subr.mxu0 0.0
  %296 = vmatpush1.msra.mxu0 %v97
  %297 = vmatprep.subr.mxu0 0.0
  %298 = vmatpush1.msra.mxu0 %v98
  %299 = vmatprep.subr.mxu0 0.0
  %300 = vmatpush1.msra.mxu0 %v99
  %301 = vmatprep.subr.mxu0 0.0
  %302 = vmatpush1.msra.mxu0 %v100
  %303 = vmatprep.subr.mxu0 0.0
  %304 = vmatpush1.msra.mxu0 %v101
  %305 = vmatprep.subr.mxu0 0.0
  %306 = vmatpush1.msra.mxu0 %v102
  %307 = vmatprep.subr.mxu0 0.0
  %308 = vmatpush1.msra.mxu0 %v103
  %309 = vmatprep.subr.mxu0 0.0
  %310 = vmatpush1.msra.mxu0 %v104
  %311 = vmatprep.subr.mxu0 0.0
  %312 = vmatpush1.msra.mxu0 %v105
  %313 = vmatprep.subr.mxu0 0.0
  %314 = vmatpush1.msra.mxu0 %v106
  %315 = vmatprep.subr.mxu0 0.0
  %316 = vmatpush1.msra.mxu0 %v107
  %317 = vmatprep.subr.mxu0 0.0
  %318 = vmatpush1.msra.mxu0 %v108
  %319 = vmatprep.subr.mxu0 0.0
  %320 = vmatpush1.msra.mxu0 %v109
  %321 = vmatprep.subr.mxu0 0.0
  %322 = vmatpush1.msra.mxu0 %v110
  %323 = vmatprep.subr.mxu0 0.0
  %324 = vmatpush1.msra.mxu0 %v111
  %325 = vmatprep.subr.mxu0 0.0
  %326 = vmatpush1.msra.mxu0 %v112
  %327 = vmatprep.subr.mxu0 0.0
  %328 = vmatpush1.msra.mxu0 %v113
  %329 = vmatprep.subr.mxu0 0.0
  %330 = vmatpush1.msra.mxu0 %v114
  %331 = vmatprep.subr.mxu0 0.0
  %332 = vmatpush1.msra.mxu0 %v115
  %333 = vmatprep.mubr.f32.mxu0 %v23
  %334 = vmatmul.mubr.f32.gmra.mrb[0].mxu0 %v22
  %v335 = vpop.f32.mrb[0].mxu0
  %v336 = vadd.f32 %v231, %v335
  %v337 = vpop.f32.mrb[0].mxu0
  %338 = vmatprep.mubr.f32.mxu0 %v27
  %339 = vmatmul.mubr.f32.gmra.mrb[0].mxu0 %v26
  %v340 = vpop.f32.mrb[0].mxu0
  %v341 = vadd.f32 %v236, %v340
  %v342 = vpop.f32.mrb[0].mxu0
  %343 = vmatprep.mubr.f32.mxu0 %v31
  %344 = vmatmul.mubr.f32.gmra.mrb[0].mxu0 %v30
  %v345 = vpop.f32.mrb[0].mxu0
  %v346 = vadd.f32 %v241, %v345
  %v347 = vpop.f32.mrb[0].mxu0
  %348 = vmatprep.mubr.f32.mxu0 %v35
  %349 = vmatmul.mubr.f32.gmra.mrb[0].mxu0 %v34
  %v350 = vpop.f32.mrb[0].mxu0
  %v351 = vadd.f32 %v246, %v350
  %v352 = vpop.f32.mrb[0].mxu0
  %353 = vmatprep.mubr.f32.mxu0 %v39
  %354 = vmatmul.mubr.f32.gmra.mrb[0].mxu0 %v38
  %v355 = vpop.f32.mrb[0].mxu0
  %v356 = vadd.f32 %v251, %v355
  %v357 = vpop.f32.mrb[0].mxu0
  %358 = vmatprep.mubr.f32.mxu0 %v43
  %359 = vmatmul.mubr.f32.gmra.mrb[0].mxu0 %v42
  %v360 = vpop.f32.mrb[0].mxu0
  %v361 = vadd.f32 %v256, %v360
  %v362 = vpop.f32.mrb[0].mxu0
  %363 = vmatprep.mubr.f32.mxu0 %v47
  %364 = vmatmul.mubr.f32.gmra.mrb[0].mxu0 %v46
  %v365 = vpop.f32.mrb[0].mxu0
  %v366 = vadd.f32 %v261, %v365
  %v367 = vpop.f32.mrb[0].mxu0
  %368 = vmatprep.mubr.f32.mxu0 %v51
  %369 = vmatmul.mubr.f32.gmra.mrb[0].mxu0 %v50
  %v370 = vpop.f32.mrb[0].mxu0
  %v371 = vadd.f32 %v266, %v370
  %v372 = vpop.f32.mrb[0].mxu0
  %373 = vdwg.mxu0
  %vm374 = vcmask 261120
  %v375 = vsel %vm374, %v336, 0.0
  %376 = vadd.xlane.f32.xlu0 %v375
  %v377 = vpop.xlane.xlu0 %376
  %v378 = vsel %vm374, %v341, 0.0
  %379 = vadd.xlane.f32.xlu0 %v378
  %v380 = vpop.xlane.xlu0 %379
  %v381 = vsel %vm374, %v346, 0.0
  %382 = vadd.xlane.f32.xlu0 %v381
  %v383 = vpop.xlane.xlu0 %382
  %v384 = vsel %vm374, %v351, 0.0
  %385 = vadd.xlane.f32.xlu0 %v384
  %v386 = vpop.xlane.xlu0 %385
  %v387 = vsel %vm374, %v356, 0.0
  %388 = vadd.xlane.f32.xlu0 %v387
  %v389 = vpop.xlane.xlu0 %388
  %v390 = vsel %vm374, %v361, 0.0
  %391 = vadd.xlane.f32.xlu0 %v390
  %v392 = vpop.xlane.xlu0 %391
  %v393 = vsel %vm374, %v366, 0.0
  %394 = vadd.xlane.f32.xlu0 %v393
  %v395 = vpop.xlane.xlu0 %394
  %v396 = vsel %vm374, %v371, 0.0
  %397 = vadd.xlane.f32.xlu0 %v396
  %v398 = vpop.xlane.xlu0 %397
  %v399 = vrcp.pop 32.0
  %v400 = vmul.f32 %v377, %v399
  %v401 = vmul.f32 %v380, %v399
  %v402 = vmul.f32 %v383, %v399
  %v403 = vmul.f32 %v386, %v399
  %v404 = vmul.f32 %v389, %v399
  %v405 = vmul.f32 %v392, %v399
  %v406 = vmul.f32 %v395, %v399
  %v407 = vmul.f32 %v398, %v399
  %v408 = vsub.f32 %v336, %v400
  %v409 = vsub.f32 %v341, %v401
  %v410 = vsub.f32 %v346, %v402
  %v411 = vsub.f32 %v351, %v403
  %v412 = vsub.f32 %v356, %v404
  %v413 = vsub.f32 %v361, %v405
  %v414 = vsub.f32 %v366, %v406
  %v415 = vsub.f32 %v371, %v407
  %v416 = vmul.f32 %v408, %v408
  %v417 = vmul.f32 %v409, %v409
  %v418 = vmul.f32 %v410, %v410
  %v419 = vmul.f32 %v411, %v411
  %v420 = vmul.f32 %v412, %v412
  %v421 = vmul.f32 %v413, %v413
  %v422 = vmul.f32 %v414, %v414
  %v423 = vmul.f32 %v415, %v415
  %v424 = vsel %vm374, %v416, 0.0
  %425 = vadd.xlane.f32.xlu0 %v424
  %v426 = vpop.xlane.xlu0 %425
  %v427 = vsel %vm374, %v417, 0.0
  %428 = vadd.xlane.f32.xlu0 %v427
  %v429 = vpop.xlane.xlu0 %428
  %v430 = vsel %vm374, %v418, 0.0
  %431 = vadd.xlane.f32.xlu0 %v430
  %v432 = vpop.xlane.xlu0 %431
  %v433 = vsel %vm374, %v419, 0.0
  %434 = vadd.xlane.f32.xlu0 %v433
  %v435 = vpop.xlane.xlu0 %434
  %v436 = vsel %vm374, %v420, 0.0
  %437 = vadd.xlane.f32.xlu0 %v436
  %v438 = vpop.xlane.xlu0 %437
  %v439 = vsel %vm374, %v421, 0.0
  %440 = vadd.xlane.f32.xlu0 %v439
  %v441 = vpop.xlane.xlu0 %440
  %v442 = vsel %vm374, %v422, 0.0
  %443 = vadd.xlane.f32.xlu0 %v442
  %v444 = vpop.xlane.xlu0 %443
  %v445 = vsel %vm374, %v423, 0.0
  %446 = vadd.xlane.f32.xlu0 %v445
  %v447 = vpop.xlane.xlu0 %446
  %v448 = vmul.f32 %v426, %v399
  %v449 = vmul.f32 %v429, %v399
  %v450 = vmul.f32 %v432, %v399
  %v451 = vmul.f32 %v435, %v399
  %v452 = vmul.f32 %v438, %v399
  %v453 = vmul.f32 %v441, %v399
  %v454 = vmul.f32 %v444, %v399
  %v455 = vmul.f32 %v447, %v399
  %v456 = vld [vmem:[%s3] sm:$0xff]
  %v457 = vld [vmem:[%s3 + $0x8] sm:$0xff]
  %v458 = vld [vmem:[%s3 + $0x10] sm:$0xff]
  %v459 = vld [vmem:[%s3 + $0x18] sm:$0xff]
  %v460 = vld [vmem:[%s3 + $0x20] sm:$0xff]
  %v461 = vld [vmem:[%s3 + $0x28] sm:$0xff]
  %v462 = vld [vmem:[%s3 + $0x30] sm:$0xff]
  %v463 = vld [vmem:[%s3 + $0x38] sm:$0xff]
  %v464 = vadd.f32 %v448, 1e-05
  %v465 = vadd.f32 %v449, 1e-05
  %v466 = vadd.f32 %v450, 1e-05
  %v467 = vadd.f32 %v451, 1e-05
  %v468 = vadd.f32 %v452, 1e-05
  %v469 = vadd.f32 %v453, 1e-05
  %v470 = vadd.f32 %v454, 1e-05
  %v471 = vadd.f32 %v455, 1e-05
  %v472 = vrsqrt.pop %v464
  %v473 = vrsqrt.pop %v465
  %v474 = vrsqrt.pop %v466
  %v475 = vrsqrt.pop %v467
  %v476 = vrsqrt.pop %v468
  %v477 = vrsqrt.pop %v469
  %v478 = vrsqrt.pop %v470
  %v479 = vrsqrt.pop %v471
  %v480 = vmul.f32 %v456, %v472
  %v481 = vmul.f32 %v457, %v473
  %v482 = vmul.f32 %v458, %v474
  %v483 = vmul.f32 %v459, %v475
  %v484 = vmul.f32 %v460, %v476
  %v485 = vmul.f32 %v461, %v477
  %v486 = vmul.f32 %v462, %v478
  %v487 = vmul.f32 %v463, %v479
  %489 = vset.pattern.permute.xlu0 0
  %490 = vperm.xlu0 %489, %v480
  %v491 = vpop.permute.xlu0 %490
  %494 = vset.pattern.permute.xlu0 0
  %495 = vperm.xlu0 %494, %v481
  %v496 = vpop.permute.xlu0 %495
  %499 = vset.pattern.permute.xlu0 0
  %500 = vperm.xlu0 %499, %v482
  %v501 = vpop.permute.xlu0 %500
  %504 = vset.pattern.permute.xlu0 0
  %505 = vperm.xlu0 %504, %v483
  %v506 = vpop.permute.xlu0 %505
  %509 = vset.pattern.permute.xlu0 0
  %510 = vperm.xlu0 %509, %v484
  %v511 = vpop.permute.xlu0 %510
  %514 = vset.pattern.permute.xlu0 0
  %515 = vperm.xlu0 %514, %v485
  %v516 = vpop.permute.xlu0 %515
  %519 = vset.pattern.permute.xlu0 0
  %520 = vperm.xlu0 %519, %v486
  %v521 = vpop.permute.xlu0 %520
  %524 = vset.pattern.permute.xlu0 0
  %525 = vperm.xlu0 %524, %v487
  %v526 = vpop.permute.xlu0 %525
  %v528 = vmul.f32 %v408, %v491
  %v529 = vmul.f32 %v409, %v496
  %v530 = vmul.f32 %v410, %v501
  %v531 = vmul.f32 %v411, %v506
  %v532 = vmul.f32 %v412, %v511
  %v533 = vmul.f32 %v413, %v516
  %v534 = vmul.f32 %v414, %v521
  %v535 = vmul.f32 %v415, %v526
  %v536 = vld [vmem:[%s4] sm:$0xff]
  %v537 = vld [vmem:[%s4 + $0x8] sm:$0xff]
  %v538 = vld [vmem:[%s4 + $0x10] sm:$0xff]
  %v539 = vld [vmem:[%s4 + $0x18] sm:$0xff]
  %v540 = vld [vmem:[%s4 + $0x20] sm:$0xff]
  %v541 = vld [vmem:[%s4 + $0x28] sm:$0xff]
  %v542 = vld [vmem:[%s4 + $0x30] sm:$0xff]
  %v543 = vld [vmem:[%s4 + $0x38] sm:$0xff]
  %545 = vset.pattern.permute.xlu0 0
  %546 = vperm.xlu0 %545, %v536
  %v547 = vpop.permute.xlu0 %546
  %550 = vset.pattern.permute.xlu0 0
  %551 = vperm.xlu0 %550, %v537
  %v552 = vpop.permute.xlu0 %551
  %555 = vset.pattern.permute.xlu0 0
  %556 = vperm.xlu0 %555, %v538
  %v557 = vpop.permute.xlu0 %556
  %560 = vset.pattern.permute.xlu0 0
  %561 = vperm.xlu0 %560, %v539
  %v562 = vpop.permute.xlu0 %561
  %565 = vset.pattern.permute.xlu0 0
  %566 = vperm.xlu0 %565, %v540
  %v567 = vpop.permute.xlu0 %566
  %570 = vset.pattern.permute.xlu0 0
  %571 = vperm.xlu0 %570, %v541
  %v572 = vpop.permute.xlu0 %571
  %575 = vset.pattern.permute.xlu0 0
  %576 = vperm.xlu0 %575, %v542
  %v577 = vpop.permute.xlu0 %576
  %580 = vset.pattern.permute.xlu0 0
  %581 = vperm.xlu0 %580, %v543
  %v582 = vpop.permute.xlu0 %581
  %v584 = vadd.f32 %v528, %v547
  %v585 = vadd.f32 %v529, %v552
  %v586 = vadd.f32 %v530, %v557
  %v587 = vadd.f32 %v531, %v562
  %v588 = vadd.f32 %v532, %v567
  %v589 = vadd.f32 %v533, %v572
  %v590 = vadd.f32 %v534, %v577
  %v591 = vadd.f32 %v535, %v582
  %vm592 = vcmp.ge.f32.partialorder %v584, 0.0
  %vm593 = vcmp.ge.f32.partialorder %v585, 0.0
  %vm594 = vcmp.ge.f32.partialorder %v586, 0.0
  %vm595 = vcmp.ge.f32.partialorder %v587, 0.0
  %vm596 = vcmp.ge.f32.partialorder %v588, 0.0
  %vm597 = vcmp.ge.f32.partialorder %v589, 0.0
  %vm598 = vcmp.ge.f32.partialorder %v590, 0.0
  %vm599 = vcmp.ge.f32.partialorder %v591, 0.0
  %v600 = vmul.f32 %v584, 0.2
  %v601 = vmul.f32 %v585, 0.2
  %v602 = vmul.f32 %v586, 0.2
  %v603 = vmul.f32 %v587, 0.2
  %v604 = vmul.f32 %v588, 0.2
  %v605 = vmul.f32 %v589, 0.2
  %v606 = vmul.f32 %v590, 0.2
  %v607 = vmul.f32 %v591, 0.2
  %v608 = vsel %vm592, %v584, %v600
  %v609 = vsel %vm593, %v585, %v601
  %v610 = vsel %vm594, %v586, %v602
  %v611 = vsel %vm595, %v587, %v603
  %v612 = vsel %vm596, %v588, %v604
  %v613 = vsel %vm597, %v589, %v605
  %v614 = vsel %vm598, %v590, %v606
  %v615 = vsel %vm599, %v591, %v607
  %616 = vst.msk [vmem:[%s5] sm:$0xff] %vm374, %v608
  %617 = vst.msk [vmem:[%s5 + $0x8] sm:$0xff] %vm374, %v609
  %618 = vst.msk [vmem:[%s5 + $0x10] sm:$0xff] %vm374, %v610
  %619 = vst.msk [vmem:[%s5 + $0x18] sm:$0xff] %vm374, %v611
  %620 = vst.msk [vmem:[%s5 + $0x20] sm:$0xff] %vm374, %v612
  %621 = vst.msk [vmem:[%s5 + $0x28] sm:$0xff] %vm374, %v613
  %622 = vst.msk [vmem:[%s5 + $0x30] sm:$0xff] %vm374, %v614
  %623 = vst.msk [vmem:[%s5 + $0x38] sm:$0xff] %vm374, %v615
  // Predicated region
  $region22: #{dcgan_discriminator_forward.8} parent=0 // pred_check
    _
  $region23: #{dcgan_discriminator_forward.8} parent=0 // pred_check_branch
    %625 = sbr.rel (0) target = $region25
  $region24: #{dcgan_discriminator_forward.8} parent=0 // pred_region
    _
  $region25: #{dcgan_discriminator_forward.8} parent=0 // pred_fallthru
    _
  // Predicated region
  $region26: #{dcgan_discriminator_forward.8} parent=0 // pred_check
    _
  $region27: #{dcgan_discriminator_forward.8} parent=0 // pred_check_branch
    %627 = sbr.rel (0) target = $region29
  $region28: #{dcgan_discriminator_forward.8} parent=0 // pred_region
    _
  $region29: #{dcgan_discriminator_forward.8} parent=0 // pred_fallthru
    _

// kernel: dcgan_discriminator_forward.9
$region0: #{dcgan_discriminator_forward.9}
  #allocation0 [shape = 'u32[]', space=smem, size = 0x4, offset = 0x4, fixed_abs, tag = 'smem constant byte address 0x4 - core index']
  #allocation1 [shape = 'u32[144,128]{1,0:T(1,128)}', space=vmem, size = 0x12000, scoped, tag = 'internal scratch']
  #allocation2 [shape = 'f32[1,1]{1,0:T(1,128)S(1)}', space=vmem, size = 0x200, scoped, tag = 'scoped memory for dcgan_discriminator_forward.9']
  %s0 = inlined_call_operand.vmem [shape: f32[2,1024], index: 0, kind: input, shape index: {}]
  %s1 = inlined_call_operand.vmem [shape: f32[1024,1], index: 1, kind: input, shape index: {}]
  %s2 = inlined_call_operand.<no memory space> [shape: f32[1,1], index: 2, kind: input, shape index: {}]
  %s3 = inlined_call_operand.vmem [shape: f32[2,1], index: 3, kind: output, shape index: {}]
  %s4 = sld [smem:[#allocation0]]
  $region22: #{dcgan_discriminator_forward.9} parent=0
    _
  %s6 = ssub.s32 1, %s4
  %s7 = scalar_select 0, %s6, %s4
  %v8 = vstv %s2
  %9 = vst [vmem:[#allocation2] sm:$0x1] %v8
  // Predicated region
  $region2: #{dcgan_discriminator_forward.9} parent=0 // pred_check
    _
  $region3: #{dcgan_discriminator_forward.9} parent=0 // pred_check_branch
    %11 = sbr.rel (0) target = $region5
  $region4: #{dcgan_discriminator_forward.9} parent=0 // pred_region
    _
  $region5: #{dcgan_discriminator_forward.9} parent=0 // pred_fallthru
    _
  // Predicated region
  $region6: #{dcgan_discriminator_forward.9} parent=0 // pred_check
    _
  $region7: #{dcgan_discriminator_forward.9} parent=0 // pred_check_branch
    %13 = sbr.rel (0) target = $region9
  $region8: #{dcgan_discriminator_forward.9} parent=0 // pred_region
    _
  $region9: #{dcgan_discriminator_forward.9} parent=0 // pred_fallthru
    _
  // Predicated region
  $region10: #{dcgan_discriminator_forward.9} parent=0 // pred_check
    _
  $region11: #{dcgan_discriminator_forward.9} parent=0 // pred_check_branch
    %15 = sbr.rel (0) target = $region13
  $region12: #{dcgan_discriminator_forward.9} parent=0 // pred_region
    _
  $region13: #{dcgan_discriminator_forward.9} parent=0 // pred_fallthru
    _
  %v16 = vld [vmem:[%s0] sm:$0xff]
  %v17 = vld [vmem:[%s0 + $0x8] sm:$0xff]
  %v18 = vld [vmem:[%s1] sm:$0xff]
  %v19 = vld [vmem:[%s1 + $0x8] sm:$0xff]
  %v20 = vld [vmem:[%s1 + $0x10] sm:$0xff]
  %v21 = vld [vmem:[%s1 + $0x18] sm:$0xff]
  %v22 = vld [vmem:[%s1 + $0x20] sm:$0xff]
  %v23 = vld [vmem:[%s1 + $0x28] sm:$0xff]
  %v24 = vld [vmem:[%s1 + $0x30] sm:$0xff]
  %v25 = vld [vmem:[%s1 + $0x38] sm:$0xff]
  %v26 = vld [vmem:[%s1 + $0x40] sm:$0xff]
  %v27 = vld [vmem:[%s1 + $0x48] sm:$0xff]
  %v28 = vld [vmem:[%s1 + $0x50] sm:$0xff]
  %v29 = vld [vmem:[%s1 + $0x58] sm:$0xff]
  %v30 = vld [vmem:[%s1 + $0x60] sm:$0xff]
  %v31 = vld [vmem:[%s1 + $0x68] sm:$0xff]
  %v32 = vld [vmem:[%s1 + $0x70] sm:$0xff]
  %v33 = vld [vmem:[%s1 + $0x78] sm:$0xff]
  %v34 = vld [vmem:[%s1 + $0x80] sm:$0xff]
  %v35 = vld [vmem:[%s1 + $0x88] sm:$0xff]
  %v36 = vld [vmem:[%s1 + $0x90] sm:$0xff]
  %v37 = vld [vmem:[%s1 + $0x98] sm:$0xff]
  %v38 = vld [vmem:[%s1 + $0xa0] sm:$0xff]
  %v39 = vld [vmem:[%s1 + $0xa8] sm:$0xff]
  %v40 = vld [vmem:[%s1 + $0xb0] sm:$0xff]
  %v41 = vld [vmem:[%s1 + $0xb8] sm:$0xff]
  %v42 = vld [vmem:[%s1 + $0xc0] sm:$0xff]
  %v43 = vld [vmem:[%s1 + $0xc8] sm:$0xff]
  %v44 = vld [vmem:[%s1 + $0xd0] sm:$0xff]
  %v45 = vld [vmem:[%s1 + $0xd8] sm:$0xff]
  %v46 = vld [vmem:[%s1 + $0xe0] sm:$0xff]
  %v47 = vld [vmem:[%s1 + $0xe8] sm:$0xff]
  %v48 = vld [vmem:[%s1 + $0xf0] sm:$0xff]
  %v49 = vld [vmem:[%s1 + $0xf8] sm:$0xff]
  %v50 = vld [vmem:[%s1 + $0x100] sm:$0xff]
  %v51 = vld [vmem:[%s1 + $0x108] sm:$0xff]
  %v52 = vld [vmem:[%s1 + $0x110] sm:$0xff]
  %v53 = vld [vmem:[%s1 + $0x118] sm:$0xff]
  %v54 = vld [vmem:[%s1 + $0x120] sm:$0xff]
  %v55 = vld [vmem:[%s1 + $0x128] sm:$0xff]
  %v56 = vld [vmem:[%s1 + $0x130] sm:$0xff]
  %v57 = vld [vmem:[%s1 + $0x138] sm:$0xff]
  %v58 = vld [vmem:[%s1 + $0x140] sm:$0xff]
  %v59 = vld [vmem:[%s1 + $0x148] sm:$0xff]
  %v60 = vld [vmem:[%s1 + $0x150] sm:$0xff]
  %v61 = vld [vmem:[%s1 + $0x158] sm:$0xff]
  %v62 = vld [vmem:[%s1 + $0x160] sm:$0xff]
  %v63 = vld [vmem:[%s1 + $0x168] sm:$0xff]
  %v64 = vld [vmem:[%s1 + $0x170] sm:$0xff]
  %v65 = vld [vmem:[%s1 + $0x178] sm:$0xff]
  %v66 = vld [vmem:[%s1 + $0x180] sm:$0xff]
  %v67 = vld [vmem:[%s1 + $0x188] sm:$0xff]
  %v68 = vld [vmem:[%s1 + $0x190] sm:$0xff]
  %v69 = vld [vmem:[%s1 + $0x198] sm:$0xff]
  %v70 = vld [vmem:[%s1 + $0x1a0] sm:$0xff]
  %v71 = vld [vmem:[%s1 + $0x1a8] sm:$0xff]
  %v72 = vld [vmem:[%s1 + $0x1b0] sm:$0xff]
  %v73 = vld [vmem:[%s1 + $0x1b8] sm:$0xff]
  %v74 = vld [vmem:[%s1 + $0x1c0] sm:$0xff]
  %v75 = vld [vmem:[%s1 + $0x1c8] sm:$0xff]
  %v76 = vld [vmem:[%s1 + $0x1d0] sm:$0xff]
  %v77 = vld [vmem:[%s1 + $0x1d8] sm:$0xff]
  %v78 = vld [vmem:[%s1 + $0x1e0] sm:$0xff]
  %v79 = vld [vmem:[%s1 + $0x1e8] sm:$0xff]
  %v80 = vld [vmem:[%s1 + $0x1f0] sm:$0xff]
  %v81 = vld [vmem:[%s1 + $0x1f8] sm:$0xff]
  %v82 = vld [vmem:[%s1 + $0x200] sm:$0xff]
  %v83 = vld [vmem:[%s1 + $0x208] sm:$0xff]
  %v84 = vld [vmem:[%s1 + $0x210] sm:$0xff]
  %v85 = vld [vmem:[%s1 + $0x218] sm:$0xff]
  %v86 = vld [vmem:[%s1 + $0x220] sm:$0xff]
  %v87 = vld [vmem:[%s1 + $0x228] sm:$0xff]
  %v88 = vld [vmem:[%s1 + $0x230] sm:$0xff]
  %v89 = vld [vmem:[%s1 + $0x238] sm:$0xff]
  %v90 = vld [vmem:[%s1 + $0x240] sm:$0xff]
  %v91 = vld [vmem:[%s1 + $0x248] sm:$0xff]
  %v92 = vld [vmem:[%s1 + $0x250] sm:$0xff]
  %v93 = vld [vmem:[%s1 + $0x258] sm:$0xff]
  %v94 = vld [vmem:[%s1 + $0x260] sm:$0xff]
  %v95 = vld [vmem:[%s1 + $0x268] sm:$0xff]
  %v96 = vld [vmem:[%s1 + $0x270] sm:$0xff]
  %v97 = vld [vmem:[%s1 + $0x278] sm:$0xff]
  %v98 = vld [vmem:[%s1 + $0x280] sm:$0xff]
  %v99 = vld [vmem:[%s1 + $0x288] sm:$0xff]
  %v100 = vld [vmem:[%s1 + $0x290] sm:$0xff]
  %v101 = vld [vmem:[%s1 + $0x298] sm:$0xff]
  %v102 = vld [vmem:[%s1 + $0x2a0] sm:$0xff]
  %v103 = vld [vmem:[%s1 + $0x2a8] sm:$0xff]
  %v104 = vld [vmem:[%s1 + $0x2b0] sm:$0xff]
  %v105 = vld [vmem:[%s1 + $0x2b8] sm:$0xff]
  %v106 = vld [vmem:[%s1 + $0x2c0] sm:$0xff]
  %v107 = vld [vmem:[%s1 + $0x2c8] sm:$0xff]
  %v108 = vld [vmem:[%s1 + $0x2d0] sm:$0xff]
  %v109 = vld [vmem:[%s1 + $0x2d8] sm:$0xff]
  %v110 = vld [vmem:[%s1 + $0x2e0] sm:$0xff]
  %v111 = vld [vmem:[%s1 + $0x2e8] sm:$0xff]
  %v112 = vld [vmem:[%s1 + $0x2f0] sm:$0xff]
  %v113 = vld [vmem:[%s1 + $0x2f8] sm:$0xff]
  %v114 = vld [vmem:[%s1 + $0x300] sm:$0xff]
  %v115 = vld [vmem:[%s1 + $0x308] sm:$0xff]
  %v116 = vld [vmem:[%s1 + $0x310] sm:$0xff]
  %v117 = vld [vmem:[%s1 + $0x318] sm:$0xff]
  %v118 = vld [vmem:[%s1 + $0x320] sm:$0xff]
  %v119 = vld [vmem:[%s1 + $0x328] sm:$0xff]
  %v120 = vld [vmem:[%s1 + $0x330] sm:$0xff]
  %v121 = vld [vmem:[%s1 + $0x338] sm:$0xff]
  %v122 = vld [vmem:[%s1 + $0x340] sm:$0xff]
  %v123 = vld [vmem:[%s1 + $0x348] sm:$0xff]
  %v124 = vld [vmem:[%s1 + $0x350] sm:$0xff]
  %v125 = vld [vmem:[%s1 + $0x358] sm:$0xff]
  %v126 = vld [vmem:[%s1 + $0x360] sm:$0xff]
  %v127 = vld [vmem:[%s1 + $0x368] sm:$0xff]
  %v128 = vld [vmem:[%s1 + $0x370] sm:$0xff]
  %v129 = vld [vmem:[%s1 + $0x378] sm:$0xff]
  %v130 = vld [vmem:[%s1 + $0x380] sm:$0xff]
  %v131 = vld [vmem:[%s1 + $0x388] sm:$0xff]
  %v132 = vld [vmem:[%s1 + $0x390] sm:$0xff]
  %v133 = vld [vmem:[%s1 + $0x398] sm:$0xff]
  %v134 = vld [vmem:[%s1 + $0x3a0] sm:$0xff]
  %v135 = vld [vmem:[%s1 + $0x3a8] sm:$0xff]
  %v136 = vld [vmem:[%s1 + $0x3b0] sm:$0xff]
  %v137 = vld [vmem:[%s1 + $0x3b8] sm:$0xff]
  %v138 = vld [vmem:[%s1 + $0x3c0] sm:$0xff]
  %v139 = vld [vmem:[%s1 + $0x3c8] sm:$0xff]
  %v140 = vld [vmem:[%s1 + $0x3d0] sm:$0xff]
  %v141 = vld [vmem:[%s1 + $0x3d8] sm:$0xff]
  %v142 = vld [vmem:[%s1 + $0x3e0] sm:$0xff]
  %v143 = vld [vmem:[%s1 + $0x3e8] sm:$0xff]
  %v144 = vld [vmem:[%s1 + $0x3f0] sm:$0xff]
  %v145 = vld [vmem:[%s1 + $0x3f8] sm:$0xff]
  %v146 = vld [vmem:[#allocation2] sm:$0x1]
  %v148 = vlaneseq
  %v149 = vshrl.u32 %v148, 7
  %v150 = vsub.s32 0, %v149
  %v151 = vrot.slane %v146, %v150
  %v155 = vcombine.high %v16, %v16
  %v157 = vunpack.c.l.s4 1983009808
  %v158 = vunpack.c.0.s8 %v157
  %v159 = vlaneseq
  %v160 = vshrl.u32 %v159, 7
  %v161 = vsub.s32 %v158, %v160
  %v162 = vrot.slane %v16, %v161
  %v164 = vunpack.c.l.s4 1983009808
  %v165 = vunpack.c.0.s8 %v164
  %v166 = vlaneseq
  %v167 = vshrl.u32 %v166, 7
  %v168 = vsub.s32 %v165, %v167
  %v169 = vrot.slane %v155, %v168
  %v170 = vcombine.high %v162, %v162
  %v171 = vcombine.high %v169, %v169
  %v172 = vcombine.high %v17, %v17
  %v174 = vunpack.c.l.s4 1983009808
  %v175 = vunpack.c.0.s8 %v174
  %v176 = vlaneseq
  %v177 = vshrl.u32 %v176, 7
  %v178 = vsub.s32 %v175, %v177
  %v179 = vrot.slane %v17, %v178
  %v181 = vunpack.c.l.s4 1983009808
  %v182 = vunpack.c.0.s8 %v181
  %v183 = vlaneseq
  %v184 = vshrl.u32 %v183, 7
  %v185 = vsub.s32 %v182, %v184
  %v186 = vrot.slane %v172, %v185
  %v187 = vcombine.high %v179, %v179
  %v188 = vcombine.high %v186, %v186
  %197 = vmatprep.subr.mxu0 0.0
  %198 = vmatpush1.msra.mxu0 %v18
  %199 = vmatprep.subr.mxu0 0.0
  %200 = vmatpush1.msra.mxu0 %v19
  %201 = vmatprep.subr.mxu0 0.0
  %202 = vmatpush1.msra.mxu0 %v20
  %203 = vmatprep.subr.mxu0 0.0
  %204 = vmatpush1.msra.mxu0 %v21
  %205 = vmatprep.subr.mxu0 0.0
  %206 = vmatpush1.msra.mxu0 %v22
  %207 = vmatprep.subr.mxu0 0.0
  %208 = vmatpush1.msra.mxu0 %v23
  %209 = vmatprep.subr.mxu0 0.0
  %210 = vmatpush1.msra.mxu0 %v24
  %211 = vmatprep.subr.mxu0 0.0
  %212 = vmatpush1.msra.mxu0 %v25
  %213 = vmatprep.subr.mxu0 0.0
  %214 = vmatpush1.msra.mxu0 %v26
  %215 = vmatprep.subr.mxu0 0.0
  %216 = vmatpush1.msra.mxu0 %v27
  %217 = vmatprep.subr.mxu0 0.0
  %218 = vmatpush1.msra.mxu0 %v28
  %219 = vmatprep.subr.mxu0 0.0
  %220 = vmatpush1.msra.mxu0 %v29
  %221 = vmatprep.subr.mxu0 0.0
  %222 = vmatpush1.msra.mxu0 %v30
  %223 = vmatprep.subr.mxu0 0.0
  %224 = vmatpush1.msra.mxu0 %v31
  %225 = vmatprep.subr.mxu0 0.0
  %226 = vmatpush1.msra.mxu0 %v32
  %227 = vmatprep.subr.mxu0 0.0
  %228 = vmatpush1.msra.mxu0 %v33
  %229 = vmatprep.subr.mxu0 0.0
  %230 = vmatpush1.msra.mxu0 %v34
  %231 = vmatprep.subr.mxu0 0.0
  %232 = vmatpush1.msra.mxu0 %v35
  %233 = vmatprep.subr.mxu0 0.0
  %234 = vmatpush1.msra.mxu0 %v36
  %235 = vmatprep.subr.mxu0 0.0
  %236 = vmatpush1.msra.mxu0 %v37
  %237 = vmatprep.subr.mxu0 0.0
  %238 = vmatpush1.msra.mxu0 %v38
  %239 = vmatprep.subr.mxu0 0.0
  %240 = vmatpush1.msra.mxu0 %v39
  %241 = vmatprep.subr.mxu0 0.0
  %242 = vmatpush1.msra.mxu0 %v40
  %243 = vmatprep.subr.mxu0 0.0
  %244 = vmatpush1.msra.mxu0 %v41
  %245 = vmatprep.subr.mxu0 0.0
  %246 = vmatpush1.msra.mxu0 %v42
  %247 = vmatprep.subr.mxu0 0.0
  %248 = vmatpush1.msra.mxu0 %v43
  %249 = vmatprep.subr.mxu0 0.0
  %250 = vmatpush1.msra.mxu0 %v44
  %251 = vmatprep.subr.mxu0 0.0
  %252 = vmatpush1.msra.mxu0 %v45
  %253 = vmatprep.subr.mxu0 0.0
  %254 = vmatpush1.msra.mxu0 %v46
  %255 = vmatprep.subr.mxu0 0.0
  %256 = vmatpush1.msra.mxu0 %v47
  %257 = vmatprep.subr.mxu0 0.0
  %258 = vmatpush1.msra.mxu0 %v48
  %259 = vmatprep.subr.mxu0 0.0
  %260 = vmatpush1.msra.mxu0 %v49
  %261 = vmatprep.mubr.f32.mxu0 %v170
  %262 = vmatmul.mubr.f32.gmra.mrb[0].mxu0 %v162
  %v263 = vpop.f32.mrb[0].mxu0
  %v264 = vadd.f32 %v151, %v263
  %v265 = vpop.f32.mrb[0].mxu0
  %266 = vdwg.mxu0
  %267 = vmatprep.subr.mxu0 0.0
  %268 = vmatpush1.msra.mxu0 %v50
  %269 = vmatprep.subr.mxu0 0.0
  %270 = vmatpush1.msra.mxu0 %v51
  %271 = vmatprep.subr.mxu0 0.0
  %272 = vmatpush1.msra.mxu0 %v52
  %273 = vmatprep.subr.mxu0 0.0
  %274 = vmatpush1.msra.mxu0 %v53
  %275 = vmatprep.subr.mxu0 0.0
  %276 = vmatpush1.msra.mxu0 %v54
  %277 = vmatprep.subr.mxu0 0.0
  %278 = vmatpush1.msra.mxu0 %v55
  %279 = vmatprep.subr.mxu0 0.0
  %280 = vmatpush1.msra.mxu0 %v56
  %281 = vmatprep.subr.mxu0 0.0
  %282 = vmatpush1.msra.mxu0 %v57
  %283 = vmatprep.subr.mxu0 0.0
  %284 = vmatpush1.msra.mxu0 %v58
  %285 = vmatprep.subr.mxu0 0.0
  %286 = vmatpush1.msra.mxu0 %v59
  %287 = vmatprep.subr.mxu0 0.0
  %288 = vmatpush1.msra.mxu0 %v60
  %289 = vmatprep.subr.mxu0 0.0
  %290 = vmatpush1.msra.mxu0 %v61
  %291 = vmatprep.subr.mxu0 0.0
  %292 = vmatpush1.msra.mxu0 %v62
  %293 = vmatprep.subr.mxu0 0.0
  %294 = vmatpush1.msra.mxu0 %v63
  %295 = vmatprep.subr.mxu0 0.0
  %296 = vmatpush1.msra.mxu0 %v64
  %297 = vmatprep.subr.mxu0 0.0
  %298 = vmatpush1.msra.mxu0 %v65
  %299 = vmatprep.subr.mxu0 0.0
  %300 = vmatpush1.msra.mxu0 %v66
  %301 = vmatprep.subr.mxu0 0.0
  %302 = vmatpush1.msra.mxu0 %v67
  %303 = vmatprep.subr.mxu0 0.0
  %304 = vmatpush1.msra.mxu0 %v68
  %305 = vmatprep.subr.mxu0 0.0
  %306 = vmatpush1.msra.mxu0 %v69
  %307 = vmatprep.subr.mxu0 0.0
  %308 = vmatpush1.msra.mxu0 %v70
  %309 = vmatprep.subr.mxu0 0.0
  %310 = vmatpush1.msra.mxu0 %v71
  %311 = vmatprep.subr.mxu0 0.0
  %312 = vmatpush1.msra.mxu0 %v72
  %313 = vmatprep.subr.mxu0 0.0
  %314 = vmatpush1.msra.mxu0 %v73
  %315 = vmatprep.subr.mxu0 0.0
  %316 = vmatpush1.msra.mxu0 %v74
  %317 = vmatprep.subr.mxu0 0.0
  %318 = vmatpush1.msra.mxu0 %v75
  %319 = vmatprep.subr.mxu0 0.0
  %320 = vmatpush1.msra.mxu0 %v76
  %321 = vmatprep.subr.mxu0 0.0
  %322 = vmatpush1.msra.mxu0 %v77
  %323 = vmatprep.subr.mxu0 0.0
  %324 = vmatpush1.msra.mxu0 %v78
  %325 = vmatprep.subr.mxu0 0.0
  %326 = vmatpush1.msra.mxu0 %v79
  %327 = vmatprep.subr.mxu0 0.0
  %328 = vmatpush1.msra.mxu0 %v80
  %329 = vmatprep.subr.mxu0 0.0
  %330 = vmatpush1.msra.mxu0 %v81
  %331 = vmatprep.mubr.f32.mxu0 %v171
  %332 = vmatmul.mubr.f32.gmra.mrb[0].mxu0 %v169
  %v333 = vpop.f32.mrb[0].mxu0
  %v334 = vadd.f32 %v264, %v333
  %v335 = vpop.f32.mrb[0].mxu0
  %336 = vdwg.mxu0
  %337 = vmatprep.subr.mxu0 0.0
  %338 = vmatpush1.msra.mxu0 %v82
  %339 = vmatprep.subr.mxu0 0.0
  %340 = vmatpush1.msra.mxu0 %v83
  %341 = vmatprep.subr.mxu0 0.0
  %342 = vmatpush1.msra.mxu0 %v84
  %343 = vmatprep.subr.mxu0 0.0
  %344 = vmatpush1.msra.mxu0 %v85
  %345 = vmatprep.subr.mxu0 0.0
  %346 = vmatpush1.msra.mxu0 %v86
  %347 = vmatprep.subr.mxu0 0.0
  %348 = vmatpush1.msra.mxu0 %v87
  %349 = vmatprep.subr.mxu0 0.0
  %350 = vmatpush1.msra.mxu0 %v88
  %351 = vmatprep.subr.mxu0 0.0
  %352 = vmatpush1.msra.mxu0 %v89
  %353 = vmatprep.subr.mxu0 0.0
  %354 = vmatpush1.msra.mxu0 %v90
  %355 = vmatprep.subr.mxu0 0.0
  %356 = vmatpush1.msra.mxu0 %v91
  %357 = vmatprep.subr.mxu0 0.0
  %358 = vmatpush1.msra.mxu0 %v92
  %359 = vmatprep.subr.mxu0 0.0
  %360 = vmatpush1.msra.mxu0 %v93
  %361 = vmatprep.subr.mxu0 0.0
  %362 = vmatpush1.msra.mxu0 %v94
  %363 = vmatprep.subr.mxu0 0.0
  %364 = vmatpush1.msra.mxu0 %v95
  %365 = vmatprep.subr.mxu0 0.0
  %366 = vmatpush1.msra.mxu0 %v96
  %367 = vmatprep.subr.mxu0 0.0
  %368 = vmatpush1.msra.mxu0 %v97
  %369 = vmatprep.subr.mxu0 0.0
  %370 = vmatpush1.msra.mxu0 %v98
  %371 = vmatprep.subr.mxu0 0.0
  %372 = vmatpush1.msra.mxu0 %v99
  %373 = vmatprep.subr.mxu0 0.0
  %374 = vmatpush1.msra.mxu0 %v100
  %375 = vmatprep.subr.mxu0 0.0
  %376 = vmatpush1.msra.mxu0 %v101
  %377 = vmatprep.subr.mxu0 0.0
  %378 = vmatpush1.msra.mxu0 %v102
  %379 = vmatprep.subr.mxu0 0.0
  %380 = vmatpush1.msra.mxu0 %v103
  %381 = vmatprep.subr.mxu0 0.0
  %382 = vmatpush1.msra.mxu0 %v104
  %383 = vmatprep.subr.mxu0 0.0
  %384 = vmatpush1.msra.mxu0 %v105
  %385 = vmatprep.subr.mxu0 0.0
  %386 = vmatpush1.msra.mxu0 %v106
  %387 = vmatprep.subr.mxu0 0.0
  %388 = vmatpush1.msra.mxu0 %v107
  %389 = vmatprep.subr.mxu0 0.0
  %390 = vmatpush1.msra.mxu0 %v108
  %391 = vmatprep.subr.mxu0 0.0
  %392 = vmatpush1.msra.mxu0 %v109
  %393 = vmatprep.subr.mxu0 0.0
  %394 = vmatpush1.msra.mxu0 %v110
  %395 = vmatprep.subr.mxu0 0.0
  %396 = vmatpush1.msra.mxu0 %v111
  %397 = vmatprep.subr.mxu0 0.0
  %398 = vmatpush1.msra.mxu0 %v112
  %399 = vmatprep.subr.mxu0 0.0
  %400 = vmatpush1.msra.mxu0 %v113
  %401 = vmatprep.mubr.f32.mxu0 %v187
  %402 = vmatmul.mubr.f32.gmra.mrb[0].mxu0 %v179
  %v403 = vpop.f32.mrb[0].mxu0
  %v404 = vadd.f32 %v334, %v403
  %v405 = vpop.f32.mrb[0].mxu0
  %406 = vdwg.mxu0
  %407 = vmatprep.subr.mxu0 0.0
  %408 = vmatpush1.msra.mxu0 %v114
  %409 = vmatprep.subr.mxu0 0.0
  %410 = vmatpush1.msra.mxu0 %v115
  %411 = vmatprep.subr.mxu0 0.0
  %412 = vmatpush1.msra.mxu0 %v116
  %413 = vmatprep.subr.mxu0 0.0
  %414 = vmatpush1.msra.mxu0 %v117
  %415 = vmatprep.subr.mxu0 0.0
  %416 = vmatpush1.msra.mxu0 %v118
  %417 = vmatprep.subr.mxu0 0.0
  %418 = vmatpush1.msra.mxu0 %v119
  %419 = vmatprep.subr.mxu0 0.0
  %420 = vmatpush1.msra.mxu0 %v120
  %421 = vmatprep.subr.mxu0 0.0
  %422 = vmatpush1.msra.mxu0 %v121
  %423 = vmatprep.subr.mxu0 0.0
  %424 = vmatpush1.msra.mxu0 %v122
  %425 = vmatprep.subr.mxu0 0.0
  %426 = vmatpush1.msra.mxu0 %v123
  %427 = vmatprep.subr.mxu0 0.0
  %428 = vmatpush1.msra.mxu0 %v124
  %429 = vmatprep.subr.mxu0 0.0
  %430 = vmatpush1.msra.mxu0 %v125
  %431 = vmatprep.subr.mxu0 0.0
  %432 = vmatpush1.msra.mxu0 %v126
  %433 = vmatprep.subr.mxu0 0.0
  %434 = vmatpush1.msra.mxu0 %v127
  %435 = vmatprep.subr.mxu0 0.0
  %436 = vmatpush1.msra.mxu0 %v128
  %437 = vmatprep.subr.mxu0 0.0
  %438 = vmatpush1.msra.mxu0 %v129
  %439 = vmatprep.subr.mxu0 0.0
  %440 = vmatpush1.msra.mxu0 %v130
  %441 = vmatprep.subr.mxu0 0.0
  %442 = vmatpush1.msra.mxu0 %v131
  %443 = vmatprep.subr.mxu0 0.0
  %444 = vmatpush1.msra.mxu0 %v132
  %445 = vmatprep.subr.mxu0 0.0
  %446 = vmatpush1.msra.mxu0 %v133
  %447 = vmatprep.subr.mxu0 0.0
  %448 = vmatpush1.msra.mxu0 %v134
  %449 = vmatprep.subr.mxu0 0.0
  %450 = vmatpush1.msra.mxu0 %v135
  %451 = vmatprep.subr.mxu0 0.0
  %452 = vmatpush1.msra.mxu0 %v136
  %453 = vmatprep.subr.mxu0 0.0
  %454 = vmatpush1.msra.mxu0 %v137
  %455 = vmatprep.subr.mxu0 0.0
  %456 = vmatpush1.msra.mxu0 %v138
  %457 = vmatprep.subr.mxu0 0.0
  %458 = vmatpush1.msra.mxu0 %v139
  %459 = vmatprep.subr.mxu0 0.0
  %460 = vmatpush1.msra.mxu0 %v140
  %461 = vmatprep.subr.mxu0 0.0
  %462 = vmatpush1.msra.mxu0 %v141
  %463 = vmatprep.subr.mxu0 0.0
  %464 = vmatpush1.msra.mxu0 %v142
  %465 = vmatprep.subr.mxu0 0.0
  %466 = vmatpush1.msra.mxu0 %v143
  %467 = vmatprep.subr.mxu0 0.0
  %468 = vmatpush1.msra.mxu0 %v144
  %469 = vmatprep.subr.mxu0 0.0
  %470 = vmatpush1.msra.mxu0 %v145
  %471 = vmatprep.mubr.f32.mxu0 %v188
  %472 = vmatmul.mubr.f32.gmra.mrb[0].mxu0 %v186
  %v473 = vpop.f32.mrb[0].mxu0
  %v474 = vadd.f32 %v404, %v473
  %v475 = vpop.f32.mrb[0].mxu0
  %476 = vdwg.mxu0
  %v477 = vsub.f32 0.0, %v474
  %v478 = vmul.f32 %v477, 1.442695
  %v479 = vpow.pop %v478
  %v480 = vadd.f32 %v479, 1.0
  %v481 = vrcp.pop %v480
  %v482 = vmul.f32 1.0, %v481
  %vm483 = vcmask 1024
  %484 = vst.msk [vmem:[%s3] sm:$0x3] %vm483, %v482
  // Predicated region
  $region14: #{dcgan_discriminator_forward.9} parent=0 // pred_check
    _
  $region15: #{dcgan_discriminator_forward.9} parent=0 // pred_check_branch
    %486 = sbr.rel (0) target = $region17
  $region16: #{dcgan_discriminator_forward.9} parent=0 // pred_region
    _
  $region17: #{dcgan_discriminator_forward.9} parent=0 // pred_fallthru
    _
  // Predicated region
  $region18: #{dcgan_discriminator_forward.9} parent=0 // pred_check
    _
  $region19: #{dcgan_discriminator_forward.9} parent=0 // pred_check_branch
    %488 = sbr.rel (0) target = $region21
  $region20: #{dcgan_discriminator_forward.9} parent=0 // pred_region
    _
  $region21: #{dcgan_discriminator_forward.9} parent=0 // pred_fallthru
    _

</llo_original>
